<compile_context>
chip_gen: v7x
topology: tpu7x:2x2x1
jax: 0.10.0
libtpu: 0.0.40
codegen_flags: <defaults>
</compile_context>

<pallas_src>
import functools

import jax
import jax.numpy as jnp
from jax import lax
from jax.experimental import pallas as pl
from jax.experimental.pallas import tpu as pltpu


# ---------------------------------------------------------------------------
# Fused DQN kernel: conv1 -> relu -> conv2 -> relu -> flatten -> fc1 -> relu -> fc2
# ---------------------------------------------------------------------------
def _dqn_kernel(patches_ref, w1_ref, b1_ref, w2_ref, b2_ref,
                wf1_ref, bf1_ref, wf2_ref, bf2_ref,
                out_ref, flat_ref, *, batch):
    # ---- conv1 (+ReLU) for all 16 conv2 taps in ONE matmul ----------------
    # patches columns are ordered (tap, kh, kw) and w1 is block-diagonal, so
    # h1 column (tap*16 + c) is conv1 output channel c feeding that tap.
    h1 = jnp.dot(patches_ref[...], w1_ref[...],
                 preferred_element_type=jnp.float32)            # (36B, 256)
    h1 = jnp.maximum(h1 + b1_ref[...], 0.0)

    # ---- conv2 (+ReLU): one matmul against the tap-stacked weights --------
    h2 = jnp.dot(h1.astype(jnp.bfloat16), w2_ref[...],
                 preferred_element_type=jnp.float32)            # (36B, 32)
    h2 = jnp.maximum(h2 + b2_ref[...], 0.0)

    # ---- NCHW flatten: write the activation directly in (B, 36*32) layout --
    # Each conv2 output pixel s contributes a (B, 32) channel block at lane
    # offset s*32 (fc1 weight is pre-permuted to this (pixel, channel) order).
    # Pure lane-offset stores: no MXU pushes, no serial accumulation chain.
    for s in range(36):
        flat_ref[:, s * 32:(s + 1) * 32] = h2[s * batch:(s + 1) * batch, :]

    # ---- fc1 (+ReLU) as a single K=1152 matmul, then fc2 ------------------
    x1 = jnp.dot(flat_ref[...].astype(jnp.bfloat16), wf1_ref[...],
                 preferred_element_type=jnp.float32)            # (B, 256)
    x1 = jnp.maximum(x1 + bf1_ref[...], 0.0)
    # fc2 output padded to 128 lanes so the single HBM store is lane-dense.
    out_ref[...] = jnp.dot(x1.astype(jnp.bfloat16), wf2_ref[...],
                           preferred_element_type=jnp.float32) + bf2_ref[...]


def _dqn_pallas(patches, kp, *, batch):
    rows = 36 * batch

    def full(shape):
        nd = len(shape)
        return pl.BlockSpec(shape, lambda i, _nd=nd: (0,) * _nd)

    flops = 2 * (rows * 1024 * 256        # block-diagonal conv1 matmul
                 + rows * 256 * 32        # stacked conv2 matmul
                 + batch * 1152 * 256     # fc1
                 + batch * 256 * 128)     # fc2 (padded)
    bytes_accessed = int(
        patches.size * patches.dtype.itemsize
        + sum(int(v.size) * v.dtype.itemsize for v in kp.values())
        + batch * 128 * 4)

    grid_spec = pltpu.PrefetchScalarGridSpec(
        num_scalar_prefetch=0,
        grid=(1,),
        in_specs=[
            full((rows, 1024)),                    # composite conv patches (bf16)
            full((1024, 256)), full((1, 256)),     # block-diag conv1 W / tiled bias
            full((256, 32)), full((1, 32)),        # stacked conv2 W / bias
            full((1152, 256)), full((1, 256)),     # fc1 W (flatten-permuted) / bias
            full((256, 128)), full((1, 128)),      # fc2 W / bias (padded to 128)
        ],
        out_specs=full((batch, 128)),
        scratch_shapes=[pltpu.VMEM((batch, 1152), jnp.float32)],  # flatten buffer
    )
    return pl.pallas_call(
        functools.partial(_dqn_kernel, batch=batch),
        out_shape=jax.ShapeDtypeStruct((batch, 128), jnp.float32),
        grid_spec=grid_spec,
        compiler_params=pltpu.CompilerParams(
            dimension_semantics=("arbitrary",)),
        cost_estimate=pl.CostEstimate(flops=flops, transcendentals=0,
                                      bytes_accessed=bytes_accessed),
    )(patches, kp["w1"], kp["b1"], kp["w2"], kp["b2"],
      kp["wf1"], kp["bf1"], kp["wf2"], kp["bf2"])


# ---------------------------------------------------------------------------
# Forward wrapper: composite im2col (XLA glue, fuses to one small fusion)
# ---------------------------------------------------------------------------
def dqn_forward(kparams, experience, *, num_actions):
    B, C, H, W = experience.shape
    assert C == 1 and H == 60 and W == 60, experience.shape
    x = experience[:, 0]                                       # (B, 60, 60)

    # conv1 im2col: p1[b, Y, X, kh*8 + kw] = x[b, 4Y + kh, 4X + kw]
    # TODO(synk): the strided patch gather needs cross-lane shuffles in-kernel;
    # it stays as (fused) XLA glue in the wrapper instead.
    cols = [x[:, pi:pi + 53:4, pj:pj + 53:4]
            for pi in range(8) for pj in range(8)]
    p1 = jnp.stack(cols, axis=-1)                              # (B, 14, 14, 64)

    # Composite patches for the fused conv1+conv2 matmuls:
    # rows ordered (y, x, b) over the 6x6 conv2 output grid,
    # columns ordered (tap = i*4+j, kh, kw)  ->  (36*B, 1024), lane-dense.
    blocks = [jnp.transpose(p1[:, i:i + 11:2, j:j + 11:2, :], (1, 2, 0, 3))
              for i in range(4) for j in range(4)]             # 16 x (6, 6, B, 64)
    patches = jnp.stack(blocks, axis=3).reshape(36 * B, 16 * 64)
    patches = patches.astype(jnp.bfloat16)                     # bf16 MXU operand

    out = _dqn_pallas(patches, kparams, batch=B)               # (B, 128) f32
    return out[:, :num_actions]


# ---------------------------------------------------------------------------
# Parameters: synthetic PyTorch-layout params + one-time kernel re-layout
# ---------------------------------------------------------------------------
def init_params(key, num_actions):
    ks = jax.random.split(key, 8)
    # PyTorch conv weight layout: (out_c, in_c, kh, kw); fc weights as (in, out).
    return dict(
        conv1_w=jax.random.normal(ks[0], (16, 1, 8, 8), jnp.float32) * 0.05,
        conv1_b=jax.random.normal(ks[1], (16,), jnp.float32) * 0.05,
        conv2_w=jax.random.normal(ks[2], (32, 16, 4, 4), jnp.float32) * 0.05,
        conv2_b=jax.random.normal(ks[3], (32,), jnp.float32) * 0.05,
        fc1_w=jax.random.normal(ks[4], (1152, 256), jnp.float32) * 0.02,
        fc1_b=jax.random.normal(ks[5], (256,), jnp.float32) * 0.02,
        fc2_w=jax.random.normal(ks[6], (256, num_actions), jnp.float32) * 0.02,
        fc2_b=jax.random.normal(ks[7], (num_actions,), jnp.float32) * 0.02,
    )


def prepare_params(params, num_actions):
    """One-time re-layout of the PyTorch-layout weights into kernel formats."""
    assert num_actions <= 128
    f32, bf16 = jnp.float32, jnp.bfloat16

    # conv1 as a (kh*kw, out_ch) matrix, expanded to block-diagonal over the
    # 16 conv2 taps: column block p of the result = conv1 outputs for tap p.
    w1 = jnp.transpose(params["conv1_w"], (2, 3, 1, 0)).reshape(64, 16)
    w1_bd = jnp.einsum("pq,kc->pkqc", jnp.eye(16, dtype=f32), w1).reshape(1024, 256)
    b1 = jnp.tile(params["conv1_b"], 16).reshape(1, 256)       # bias per (tap, ch)

    # conv2 stacked over taps: row index = tap*16 + in_ch.
    w2 = jnp.transpose(params["conv2_w"], (2, 3, 1, 0)).reshape(256, 32)
    b2 = params["conv2_b"].reshape(1, 32)

    # fc1 weight permuted so the kernel's (pixel, channel) flatten order matches
    # PyTorch's NCHW x.view(B, -1) (channel, pixel) order.
    wf1 = params["fc1_w"].reshape(32, 36, 256).transpose(1, 0, 2).reshape(1152, 256)
    bf1 = params["fc1_b"].reshape(1, 256)

    # fc2 padded to 128 output lanes for a lane-dense final store.
    wf2 = jnp.zeros((256, 128), f32).at[:, :num_actions].set(params["fc2_w"])
    bf2 = jnp.zeros((1, 128), f32).at[:, :num_actions].set(params["fc2_b"][None, :])

    return dict(w1=w1_bd.astype(bf16), b1=b1.astype(f32),
                w2=w2.astype(bf16), b2=b2.astype(f32),
                wf1=wf1.astype(bf16), bf1=bf1.astype(f32),
                wf2=wf2.astype(bf16), bf2=bf2.astype(f32))


# ---------------------------------------------------------------------------
# Pure-JAX reference (mirrors the PyTorch module) for a numerical check
# ---------------------------------------------------------------------------
def dqn_reference(params, experience):
    dn = ("NCHW", "OIHW", "NCHW")
    hp = lax.Precision.HIGHEST
    y = lax.conv_general_dilated(experience, params["conv1_w"], (4, 4), "VALID",
                                 dimension_numbers=dn, precision=hp)
    y = jax.nn.relu(y + params["conv1_b"][None, :, None, None])
    y = lax.conv_general_dilated(y, params["conv2_w"], (2, 2), "VALID",
                                 dimension_numbers=dn, precision=hp)
    y = jax.nn.relu(y + params["conv2_b"][None, :, None, None])
    y = y.reshape(experience.shape[0], -1)                     # PyTorch x.view(B, -1)
    y = jax.nn.relu(jnp.dot(y, params["fc1_w"], precision=hp) + params["fc1_b"])
    return jnp.dot(y, params["fc2_w"], precision=hp) + params["fc2_b"]


if __name__ == "__main__":
    num_actions = 4
    batch = 2

    key = jax.random.PRNGKey(0)
    kp_key, kx_key = jax.random.split(key)
    params = init_params(kp_key, num_actions)
    kparams = prepare_params(params, num_actions)   # hoisted, one-time re-layout

    # Input shape forced to (B, 1, 60, 60) by fc1 in_features = 1152 = 32*6*6.
    experience = jax.random.normal(kx_key, (batch, 1, 60, 60), jnp.float32)

    fwd = jax.jit(functools.partial(dqn_forward, num_actions=num_actions))
    q = jax.block_until_ready(fwd(kparams, experience))
    assert q.shape == (batch, num_actions), q.shape
    assert q.dtype == jnp.float32

    # Numerical check against the f32/HIGHEST reference; tolerance covers the
    # kernel's bf16 operands + default MXU precision (expected error ~1e-3).
    q_ref = jax.block_until_ready(jax.jit(dqn_reference)(params, experience))
    assert jnp.allclose(q, q_ref, atol=1e-2, rtol=1e-2), (q, q_ref)

    print("KERNEL_OK")
</pallas_src>

<mosaic_0001>
module attributes {stable_mosaic.version = 11 : i64} {
  func.func @_dqn_kernel(%arg0: i32, %arg1: memref<72x1024xbf16, #tpu.memory_space<vmem>>, %arg2: memref<1024x256xbf16, #tpu.memory_space<vmem>>, %arg3: memref<1x256xf32, #tpu.memory_space<vmem>>, %arg4: memref<256x32xbf16, #tpu.memory_space<vmem>>, %arg5: memref<1x32xf32, #tpu.memory_space<vmem>>, %arg6: memref<1152x256xbf16, #tpu.memory_space<vmem>>, %arg7: memref<1x256xf32, #tpu.memory_space<vmem>>, %arg8: memref<256x128xbf16, #tpu.memory_space<vmem>>, %arg9: memref<1x128xf32, #tpu.memory_space<vmem>>, %arg10: memref<2x128xf32, #tpu.memory_space<vmem>>, %arg11: memref<2x1152xf32, #tpu.memory_space<vmem>>) attributes {dimension_semantics = [#tpu.dimension_semantics<arbitrary>], iteration_bounds = array<i64: 1>, scalar_prefetch = 0 : i64, scratch_operands = 1 : i64, tpu.core_type = #tpu.core_type<tc>, window_params = [{pipeline_mode = #tpu.pipeline_mode<synchronous>, transform_indices = @transform_0, window_bounds = array<i64: 72, 1024>}, {pipeline_mode = #tpu.pipeline_mode<synchronous>, transform_indices = @transform_1, window_bounds = array<i64: 1024, 256>}, {pipeline_mode = #tpu.pipeline_mode<synchronous>, transform_indices = @transform_2, window_bounds = array<i64: 1, 256>}, {pipeline_mode = #tpu.pipeline_mode<synchronous>, transform_indices = @transform_3, window_bounds = array<i64: 256, 32>}, {pipeline_mode = #tpu.pipeline_mode<synchronous>, transform_indices = @transform_4, window_bounds = array<i64: 1, 32>}, {pipeline_mode = #tpu.pipeline_mode<synchronous>, transform_indices = @transform_5, window_bounds = array<i64: 1152, 256>}, {pipeline_mode = #tpu.pipeline_mode<synchronous>, transform_indices = @transform_6, window_bounds = array<i64: 1, 256>}, {pipeline_mode = #tpu.pipeline_mode<synchronous>, transform_indices = @transform_7, window_bounds = array<i64: 256, 128>}, {pipeline_mode = #tpu.pipeline_mode<synchronous>, transform_indices = @transform_8, window_bounds = array<i64: 1, 128>}, {pipeline_mode = #tpu.pipeline_mode<synchronous>, transform_indices = @transform_9, window_bounds = array<i64: 2, 128>}]} {
    %c0 = arith.constant 0 : index
    %c0_0 = arith.constant 0 : index
    %0 = vector.load %arg1[%c0, %c0_0] : memref<72x1024xbf16, #tpu.memory_space<vmem>>, vector<72x1024xbf16>
    %c0_1 = arith.constant 0 : index
    %c0_2 = arith.constant 0 : index
    %1 = vector.load %arg2[%c0_1, %c0_2] : memref<1024x256xbf16, #tpu.memory_space<vmem>>, vector<1024x256xbf16>
    %cst = arith.constant dense<0.000000e+00> : vector<72x256xf32>
    %2 = tpu.matmul %0, %1, %cst {dimension_numbers = #tpu.dot_dimension_numbers<[1], [0], [0], [1], [0, 0, 1, 1], [], []>} : vector<72x1024xbf16>, vector<1024x256xbf16>, vector<72x256xf32> -> vector<72x256xf32>
    %c0_3 = arith.constant 0 : index
    %c0_4 = arith.constant 0 : index
    %3 = vector.load %arg3[%c0_3, %c0_4] : memref<1x256xf32, #tpu.memory_space<vmem>>, vector<1x256xf32>
    %4 = vector.broadcast %3 : vector<1x256xf32> to vector<72x256xf32>
    %5 = arith.addf %2, %4 : vector<72x256xf32>
    %cst_5 = arith.constant 0.000000e+00 : f32
    %6 = vector.broadcast %cst_5 : f32 to vector<72x256xf32>
    %7 = arith.maximumf %5, %6 : vector<72x256xf32>
    %8 = arith.truncf %7 : vector<72x256xf32> to vector<72x256xbf16>
    %c0_6 = arith.constant 0 : index
    %c0_7 = arith.constant 0 : index
    %9 = vector.load %arg4[%c0_6, %c0_7] : memref<256x32xbf16, #tpu.memory_space<vmem>>, vector<256x32xbf16>
    %cst_8 = arith.constant dense<0.000000e+00> : vector<72x32xf32>
    %10 = tpu.matmul %8, %9, %cst_8 {dimension_numbers = #tpu.dot_dimension_numbers<[1], [0], [0], [1], [0, 0, 1, 1], [], []>} : vector<72x256xbf16>, vector<256x32xbf16>, vector<72x32xf32> -> vector<72x32xf32>
    %c0_9 = arith.constant 0 : index
    %c0_10 = arith.constant 0 : index
    %11 = vector.load %arg5[%c0_9, %c0_10] : memref<1x32xf32, #tpu.memory_space<vmem>>, vector<1x32xf32>
    %12 = vector.broadcast %11 : vector<1x32xf32> to vector<72x32xf32>
    %13 = arith.addf %10, %12 : vector<72x32xf32>
    %cst_11 = arith.constant 0.000000e+00 : f32
    %14 = vector.broadcast %cst_11 : f32 to vector<72x32xf32>
    %15 = arith.maximumf %13, %14 : vector<72x32xf32>
    %16 = vector.extract_strided_slice %15 {offsets = [0, 0], sizes = [2, 32], strides = [1, 1]} : vector<72x32xf32> to vector<2x32xf32>
    %c0_12 = arith.constant 0 : index
    %c0_13 = arith.constant 0 : index
    %17 = vector.load %arg11[%c0_12, %c0_13] : memref<2x1152xf32, #tpu.memory_space<vmem>>, vector<2x32xf32>
    tpu.vector_store %arg11[%c0_12, %c0_13], %16 {strides = array<i32>} : memref<2x1152xf32, #tpu.memory_space<vmem>>, vector<2x32xf32>,
    %18 = vector.extract_strided_slice %15 {offsets = [2, 0], sizes = [2, 32], strides = [1, 1]} : vector<72x32xf32> to vector<2x32xf32>
    %c0_14 = arith.constant 0 : index
    %c32 = arith.constant 32 : index
    %19 = vector.load %arg11[%c0_14, %c32] : memref<2x1152xf32, #tpu.memory_space<vmem>>, vector<2x32xf32>
    tpu.vector_store %arg11[%c0_14, %c32], %18 {strides = array<i32>} : memref<2x1152xf32, #tpu.memory_space<vmem>>, vector<2x32xf32>,
    %20 = vector.extract_strided_slice %15 {offsets = [4, 0], sizes = [2, 32], strides = [1, 1]} : vector<72x32xf32> to vector<2x32xf32>
    %c0_15 = arith.constant 0 : index
    %c64 = arith.constant 64 : index
    %21 = vector.load %arg11[%c0_15, %c64] : memref<2x1152xf32, #tpu.memory_space<vmem>>, vector<2x32xf32>
    tpu.vector_store %arg11[%c0_15, %c64], %20 {strides = array<i32>} : memref<2x1152xf32, #tpu.memory_space<vmem>>, vector<2x32xf32>,
    %22 = vector.extract_strided_slice %15 {offsets = [6, 0], sizes = [2, 32], strides = [1, 1]} : vector<72x32xf32> to vector<2x32xf32>
    %c0_16 = arith.constant 0 : index
    %c96 = arith.constant 96 : index
    %23 = vector.load %arg11[%c0_16, %c96] : memref<2x1152xf32, #tpu.memory_space<vmem>>, vector<2x32xf32>
    tpu.vector_store %arg11[%c0_16, %c96], %22 {strides = array<i32>} : memref<2x1152xf32, #tpu.memory_space<vmem>>, vector<2x32xf32>,
    %24 = vector.extract_strided_slice %15 {offsets = [8, 0], sizes = [2, 32], strides = [1, 1]} : vector<72x32xf32> to vector<2x32xf32>
    %c0_17 = arith.constant 0 : index
    %c128 = arith.constant 128 : index
    %25 = vector.load %arg11[%c0_17, %c128] : memref<2x1152xf32, #tpu.memory_space<vmem>>, vector<2x32xf32>
    tpu.vector_store %arg11[%c0_17, %c128], %24 {strides = array<i32>} : memref<2x1152xf32, #tpu.memory_space<vmem>>, vector<2x32xf32>,
    %26 = vector.extract_strided_slice %15 {offsets = [10, 0], sizes = [2, 32], strides = [1, 1]} : vector<72x32xf32> to vector<2x32xf32>
    %c0_18 = arith.constant 0 : index
    %c160 = arith.constant 160 : index
    %27 = vector.load %arg11[%c0_18, %c160] : memref<2x1152xf32, #tpu.memory_space<vmem>>, vector<2x32xf32>
    tpu.vector_store %arg11[%c0_18, %c160], %26 {strides = array<i32>} : memref<2x1152xf32, #tpu.memory_space<vmem>>, vector<2x32xf32>,
    %28 = vector.extract_strided_slice %15 {offsets = [12, 0], sizes = [2, 32], strides = [1, 1]} : vector<72x32xf32> to vector<2x32xf32>
    %c0_19 = arith.constant 0 : index
    %c192 = arith.constant 192 : index
    %29 = vector.load %arg11[%c0_19, %c192] : memref<2x1152xf32, #tpu.memory_space<vmem>>, vector<2x32xf32>
    tpu.vector_store %arg11[%c0_19, %c192], %28 {strides = array<i32>} : memref<2x1152xf32, #tpu.memory_space<vmem>>, vector<2x32xf32>,
    %30 = vector.extract_strided_slice %15 {offsets = [14, 0], sizes = [2, 32], strides = [1, 1]} : vector<72x32xf32> to vector<2x32xf32>
    %c0_20 = arith.constant 0 : index
    %c224 = arith.constant 224 : index
    %31 = vector.load %arg11[%c0_20, %c224] : memref<2x1152xf32, #tpu.memory_space<vmem>>, vector<2x32xf32>
    tpu.vector_store %arg11[%c0_20, %c224], %30 {strides = array<i32>} : memref<2x1152xf32, #tpu.memory_space<vmem>>, vector<2x32xf32>,
    %32 = vector.extract_strided_slice %15 {offsets = [16, 0], sizes = [2, 32], strides = [1, 1]} : vector<72x32xf32> to vector<2x32xf32>
    %c0_21 = arith.constant 0 : index
    %c256 = arith.constant 256 : index
    %33 = vector.load %arg11[%c0_21, %c256] : memref<2x1152xf32, #tpu.memory_space<vmem>>, vector<2x32xf32>
    tpu.vector_store %arg11[%c0_21, %c256], %32 {strides = array<i32>} : memref<2x1152xf32, #tpu.memory_space<vmem>>, vector<2x32xf32>,
    %34 = vector.extract_strided_slice %15 {offsets = [18, 0], sizes = [2, 32], strides = [1, 1]} : vector<72x32xf32> to vector<2x32xf32>
    %c0_22 = arith.constant 0 : index
    %c288 = arith.constant 288 : index
    %35 = vector.load %arg11[%c0_22, %c288] : memref<2x1152xf32, #tpu.memory_space<vmem>>, vector<2x32xf32>
    tpu.vector_store %arg11[%c0_22, %c288], %34 {strides = array<i32>} : memref<2x1152xf32, #tpu.memory_space<vmem>>, vector<2x32xf32>,
    %36 = vector.extract_strided_slice %15 {offsets = [20, 0], sizes = [2, 32], strides = [1, 1]} : vector<72x32xf32> to vector<2x32xf32>
    %c0_23 = arith.constant 0 : index
    %c320 = arith.constant 320 : index
    %37 = vector.load %arg11[%c0_23, %c320] : memref<2x1152xf32, #tpu.memory_space<vmem>>, vector<2x32xf32>
    tpu.vector_store %arg11[%c0_23, %c320], %36 {strides = array<i32>} : memref<2x1152xf32, #tpu.memory_space<vmem>>, vector<2x32xf32>,
    %38 = vector.extract_strided_slice %15 {offsets = [22, 0], sizes = [2, 32], strides = [1, 1]} : vector<72x32xf32> to vector<2x32xf32>
    %c0_24 = arith.constant 0 : index
    %c352 = arith.constant 352 : index
    %39 = vector.load %arg11[%c0_24, %c352] : memref<2x1152xf32, #tpu.memory_space<vmem>>, vector<2x32xf32>
    tpu.vector_store %arg11[%c0_24, %c352], %38 {strides = array<i32>} : memref<2x1152xf32, #tpu.memory_space<vmem>>, vector<2x32xf32>,
    %40 = vector.extract_strided_slice %15 {offsets = [24, 0], sizes = [2, 32], strides = [1, 1]} : vector<72x32xf32> to vector<2x32xf32>
    %c0_25 = arith.constant 0 : index
    %c384 = arith.constant 384 : index
    %41 = vector.load %arg11[%c0_25, %c384] : memref<2x1152xf32, #tpu.memory_space<vmem>>, vector<2x32xf32>
    tpu.vector_store %arg11[%c0_25, %c384], %40 {strides = array<i32>} : memref<2x1152xf32, #tpu.memory_space<vmem>>, vector<2x32xf32>,
    %42 = vector.extract_strided_slice %15 {offsets = [26, 0], sizes = [2, 32], strides = [1, 1]} : vector<72x32xf32> to vector<2x32xf32>
    %c0_26 = arith.constant 0 : index
    %c416 = arith.constant 416 : index
    %43 = vector.load %arg11[%c0_26, %c416] : memref<2x1152xf32, #tpu.memory_space<vmem>>, vector<2x32xf32>
    tpu.vector_store %arg11[%c0_26, %c416], %42 {strides = array<i32>} : memref<2x1152xf32, #tpu.memory_space<vmem>>, vector<2x32xf32>,
    %44 = vector.extract_strided_slice %15 {offsets = [28, 0], sizes = [2, 32], strides = [1, 1]} : vector<72x32xf32> to vector<2x32xf32>
    %c0_27 = arith.constant 0 : index
    %c448 = arith.constant 448 : index
    %45 = vector.load %arg11[%c0_27, %c448] : memref<2x1152xf32, #tpu.memory_space<vmem>>, vector<2x32xf32>
    tpu.vector_store %arg11[%c0_27, %c448], %44 {strides = array<i32>} : memref<2x1152xf32, #tpu.memory_space<vmem>>, vector<2x32xf32>,
    %46 = vector.extract_strided_slice %15 {offsets = [30, 0], sizes = [2, 32], strides = [1, 1]} : vector<72x32xf32> to vector<2x32xf32>
    %c0_28 = arith.constant 0 : index
    %c480 = arith.constant 480 : index
    %47 = vector.load %arg11[%c0_28, %c480] : memref<2x1152xf32, #tpu.memory_space<vmem>>, vector<2x32xf32>
    tpu.vector_store %arg11[%c0_28, %c480], %46 {strides = array<i32>} : memref<2x1152xf32, #tpu.memory_space<vmem>>, vector<2x32xf32>,
    %48 = vector.extract_strided_slice %15 {offsets = [32, 0], sizes = [2, 32], strides = [1, 1]} : vector<72x32xf32> to vector<2x32xf32>
    %c0_29 = arith.constant 0 : index
    %c512 = arith.constant 512 : index
    %49 = vector.load %arg11[%c0_29, %c512] : memref<2x1152xf32, #tpu.memory_space<vmem>>, vector<2x32xf32>
    tpu.vector_store %arg11[%c0_29, %c512], %48 {strides = array<i32>} : memref<2x1152xf32, #tpu.memory_space<vmem>>, vector<2x32xf32>,
    %50 = vector.extract_strided_slice %15 {offsets = [34, 0], sizes = [2, 32], strides = [1, 1]} : vector<72x32xf32> to vector<2x32xf32>
    %c0_30 = arith.constant 0 : index
    %c544 = arith.constant 544 : index
    %51 = vector.load %arg11[%c0_30, %c544] : memref<2x1152xf32, #tpu.memory_space<vmem>>, vector<2x32xf32>
    tpu.vector_store %arg11[%c0_30, %c544], %50 {strides = array<i32>} : memref<2x1152xf32, #tpu.memory_space<vmem>>, vector<2x32xf32>,
    %52 = vector.extract_strided_slice %15 {offsets = [36, 0], sizes = [2, 32], strides = [1, 1]} : vector<72x32xf32> to vector<2x32xf32>
    %c0_31 = arith.constant 0 : index
    %c576 = arith.constant 576 : index
    %53 = vector.load %arg11[%c0_31, %c576] : memref<2x1152xf32, #tpu.memory_space<vmem>>, vector<2x32xf32>
    tpu.vector_store %arg11[%c0_31, %c576], %52 {strides = array<i32>} : memref<2x1152xf32, #tpu.memory_space<vmem>>, vector<2x32xf32>,
    %54 = vector.extract_strided_slice %15 {offsets = [38, 0], sizes = [2, 32], strides = [1, 1]} : vector<72x32xf32> to vector<2x32xf32>
    %c0_32 = arith.constant 0 : index
    %c608 = arith.constant 608 : index
    %55 = vector.load %arg11[%c0_32, %c608] : memref<2x1152xf32, #tpu.memory_space<vmem>>, vector<2x32xf32>
    tpu.vector_store %arg11[%c0_32, %c608], %54 {strides = array<i32>} : memref<2x1152xf32, #tpu.memory_space<vmem>>, vector<2x32xf32>,
    %56 = vector.extract_strided_slice %15 {offsets = [40, 0], sizes = [2, 32], strides = [1, 1]} : vector<72x32xf32> to vector<2x32xf32>
    %c0_33 = arith.constant 0 : index
    %c640 = arith.constant 640 : index
    %57 = vector.load %arg11[%c0_33, %c640] : memref<2x1152xf32, #tpu.memory_space<vmem>>, vector<2x32xf32>
    tpu.vector_store %arg11[%c0_33, %c640], %56 {strides = array<i32>} : memref<2x1152xf32, #tpu.memory_space<vmem>>, vector<2x32xf32>,
    %58 = vector.extract_strided_slice %15 {offsets = [42, 0], sizes = [2, 32], strides = [1, 1]} : vector<72x32xf32> to vector<2x32xf32>
    %c0_34 = arith.constant 0 : index
    %c672 = arith.constant 672 : index
    %59 = vector.load %arg11[%c0_34, %c672] : memref<2x1152xf32, #tpu.memory_space<vmem>>, vector<2x32xf32>
    tpu.vector_store %arg11[%c0_34, %c672], %58 {strides = array<i32>} : memref<2x1152xf32, #tpu.memory_space<vmem>>, vector<2x32xf32>,
    %60 = vector.extract_strided_slice %15 {offsets = [44, 0], sizes = [2, 32], strides = [1, 1]} : vector<72x32xf32> to vector<2x32xf32>
    %c0_35 = arith.constant 0 : index
    %c704 = arith.constant 704 : index
    %61 = vector.load %arg11[%c0_35, %c704] : memref<2x1152xf32, #tpu.memory_space<vmem>>, vector<2x32xf32>
    tpu.vector_store %arg11[%c0_35, %c704], %60 {strides = array<i32>} : memref<2x1152xf32, #tpu.memory_space<vmem>>, vector<2x32xf32>,
    %62 = vector.extract_strided_slice %15 {offsets = [46, 0], sizes = [2, 32], strides = [1, 1]} : vector<72x32xf32> to vector<2x32xf32>
    %c0_36 = arith.constant 0 : index
    %c736 = arith.constant 736 : index
    %63 = vector.load %arg11[%c0_36, %c736] : memref<2x1152xf32, #tpu.memory_space<vmem>>, vector<2x32xf32>
    tpu.vector_store %arg11[%c0_36, %c736], %62 {strides = array<i32>} : memref<2x1152xf32, #tpu.memory_space<vmem>>, vector<2x32xf32>,
    %64 = vector.extract_strided_slice %15 {offsets = [48, 0], sizes = [2, 32], strides = [1, 1]} : vector<72x32xf32> to vector<2x32xf32>
    %c0_37 = arith.constant 0 : index
    %c768 = arith.constant 768 : index
    %65 = vector.load %arg11[%c0_37, %c768] : memref<2x1152xf32, #tpu.memory_space<vmem>>, vector<2x32xf32>
    tpu.vector_store %arg11[%c0_37, %c768], %64 {strides = array<i32>} : memref<2x1152xf32, #tpu.memory_space<vmem>>, vector<2x32xf32>,
    %66 = vector.extract_strided_slice %15 {offsets = [50, 0], sizes = [2, 32], strides = [1, 1]} : vector<72x32xf32> to vector<2x32xf32>
    %c0_38 = arith.constant 0 : index
    %c800 = arith.constant 800 : index
    %67 = vector.load %arg11[%c0_38, %c800] : memref<2x1152xf32, #tpu.memory_space<vmem>>, vector<2x32xf32>
    tpu.vector_store %arg11[%c0_38, %c800], %66 {strides = array<i32>} : memref<2x1152xf32, #tpu.memory_space<vmem>>, vector<2x32xf32>,
    %68 = vector.extract_strided_slice %15 {offsets = [52, 0], sizes = [2, 32], strides = [1, 1]} : vector<72x32xf32> to vector<2x32xf32>
    %c0_39 = arith.constant 0 : index
    %c832 = arith.constant 832 : index
    %69 = vector.load %arg11[%c0_39, %c832] : memref<2x1152xf32, #tpu.memory_space<vmem>>, vector<2x32xf32>
    tpu.vector_store %arg11[%c0_39, %c832], %68 {strides = array<i32>} : memref<2x1152xf32, #tpu.memory_space<vmem>>, vector<2x32xf32>,
    %70 = vector.extract_strided_slice %15 {offsets = [54, 0], sizes = [2, 32], strides = [1, 1]} : vector<72x32xf32> to vector<2x32xf32>
    %c0_40 = arith.constant 0 : index
    %c864 = arith.constant 864 : index
    %71 = vector.load %arg11[%c0_40, %c864] : memref<2x1152xf32, #tpu.memory_space<vmem>>, vector<2x32xf32>
    tpu.vector_store %arg11[%c0_40, %c864], %70 {strides = array<i32>} : memref<2x1152xf32, #tpu.memory_space<vmem>>, vector<2x32xf32>,
    %72 = vector.extract_strided_slice %15 {offsets = [56, 0], sizes = [2, 32], strides = [1, 1]} : vector<72x32xf32> to vector<2x32xf32>
    %c0_41 = arith.constant 0 : index
    %c896 = arith.constant 896 : index
    %73 = vector.load %arg11[%c0_41, %c896] : memref<2x1152xf32, #tpu.memory_space<vmem>>, vector<2x32xf32>
    tpu.vector_store %arg11[%c0_41, %c896], %72 {strides = array<i32>} : memref<2x1152xf32, #tpu.memory_space<vmem>>, vector<2x32xf32>,
    %74 = vector.extract_strided_slice %15 {offsets = [58, 0], sizes = [2, 32], strides = [1, 1]} : vector<72x32xf32> to vector<2x32xf32>
    %c0_42 = arith.constant 0 : index
    %c928 = arith.constant 928 : index
    %75 = vector.load %arg11[%c0_42, %c928] : memref<2x1152xf32, #tpu.memory_space<vmem>>, vector<2x32xf32>
    tpu.vector_store %arg11[%c0_42, %c928], %74 {strides = array<i32>} : memref<2x1152xf32, #tpu.memory_space<vmem>>, vector<2x32xf32>,
    %76 = vector.extract_strided_slice %15 {offsets = [60, 0], sizes = [2, 32], strides = [1, 1]} : vector<72x32xf32> to vector<2x32xf32>
    %c0_43 = arith.constant 0 : index
    %c960 = arith.constant 960 : index
    %77 = vector.load %arg11[%c0_43, %c960] : memref<2x1152xf32, #tpu.memory_space<vmem>>, vector<2x32xf32>
    tpu.vector_store %arg11[%c0_43, %c960], %76 {strides = array<i32>} : memref<2x1152xf32, #tpu.memory_space<vmem>>, vector<2x32xf32>,
    %78 = vector.extract_strided_slice %15 {offsets = [62, 0], sizes = [2, 32], strides = [1, 1]} : vector<72x32xf32> to vector<2x32xf32>
    %c0_44 = arith.constant 0 : index
    %c992 = arith.constant 992 : index
    %79 = vector.load %arg11[%c0_44, %c992] : memref<2x1152xf32, #tpu.memory_space<vmem>>, vector<2x32xf32>
    tpu.vector_store %arg11[%c0_44, %c992], %78 {strides = array<i32>} : memref<2x1152xf32, #tpu.memory_space<vmem>>, vector<2x32xf32>,
    %80 = vector.extract_strided_slice %15 {offsets = [64, 0], sizes = [2, 32], strides = [1, 1]} : vector<72x32xf32> to vector<2x32xf32>
    %c0_45 = arith.constant 0 : index
    %c1024 = arith.constant 1024 : index
    %81 = vector.load %arg11[%c0_45, %c1024] : memref<2x1152xf32, #tpu.memory_space<vmem>>, vector<2x32xf32>
    tpu.vector_store %arg11[%c0_45, %c1024], %80 {strides = array<i32>} : memref<2x1152xf32, #tpu.memory_space<vmem>>, vector<2x32xf32>,
    %82 = vector.extract_strided_slice %15 {offsets = [66, 0], sizes = [2, 32], strides = [1, 1]} : vector<72x32xf32> to vector<2x32xf32>
    %c0_46 = arith.constant 0 : index
    %c1056 = arith.constant 1056 : index
    %83 = vector.load %arg11[%c0_46, %c1056] : memref<2x1152xf32, #tpu.memory_space<vmem>>, vector<2x32xf32>
    tpu.vector_store %arg11[%c0_46, %c1056], %82 {strides = array<i32>} : memref<2x1152xf32, #tpu.memory_space<vmem>>, vector<2x32xf32>,
    %84 = vector.extract_strided_slice %15 {offsets = [68, 0], sizes = [2, 32], strides = [1, 1]} : vector<72x32xf32> to vector<2x32xf32>
    %c0_47 = arith.constant 0 : index
    %c1088 = arith.constant 1088 : index
    %85 = vector.load %arg11[%c0_47, %c1088] : memref<2x1152xf32, #tpu.memory_space<vmem>>, vector<2x32xf32>
    tpu.vector_store %arg11[%c0_47, %c1088], %84 {strides = array<i32>} : memref<2x1152xf32, #tpu.memory_space<vmem>>, vector<2x32xf32>,
    %86 = vector.extract_strided_slice %15 {offsets = [70, 0], sizes = [2, 32], strides = [1, 1]} : vector<72x32xf32> to vector<2x32xf32>
    %c0_48 = arith.constant 0 : index
    %c1120 = arith.constant 1120 : index
    %87 = vector.load %arg11[%c0_48, %c1120] : memref<2x1152xf32, #tpu.memory_space<vmem>>, vector<2x32xf32>
    tpu.vector_store %arg11[%c0_48, %c1120], %86 {strides = array<i32>} : memref<2x1152xf32, #tpu.memory_space<vmem>>, vector<2x32xf32>,
    %c0_49 = arith.constant 0 : index
    %c0_50 = arith.constant 0 : index
    %88 = vector.load %arg11[%c0_49, %c0_50] : memref<2x1152xf32, #tpu.memory_space<vmem>>, vector<2x1152xf32>
    %89 = arith.truncf %88 : vector<2x1152xf32> to vector<2x1152xbf16>
    %c0_51 = arith.constant 0 : index
    %c0_52 = arith.constant 0 : index
    %90 = vector.load %arg6[%c0_51, %c0_52] : memref<1152x256xbf16, #tpu.memory_space<vmem>>, vector<1152x256xbf16>
    %cst_53 = arith.constant dense<0.000000e+00> : vector<2x256xf32>
    %91 = tpu.matmul %89, %90, %cst_53 {dimension_numbers = #tpu.dot_dimension_numbers<[1], [0], [0], [1], [0, 0, 1, 1], [], []>} : vector<2x1152xbf16>, vector<1152x256xbf16>, vector<2x256xf32> -> vector<2x256xf32>
    %c0_54 = arith.constant 0 : index
    %c0_55 = arith.constant 0 : index
    %92 = vector.load %arg7[%c0_54, %c0_55] : memref<1x256xf32, #tpu.memory_space<vmem>>, vector<1x256xf32>
    %93 = vector.broadcast %92 : vector<1x256xf32> to vector<2x256xf32>
    %94 = arith.addf %91, %93 : vector<2x256xf32>
    %cst_56 = arith.constant 0.000000e+00 : f32
    %95 = vector.broadcast %cst_56 : f32 to vector<2x256xf32>
    %96 = arith.maximumf %94, %95 : vector<2x256xf32>
    %97 = arith.truncf %96 : vector<2x256xf32> to vector<2x256xbf16>
    %c0_57 = arith.constant 0 : index
    %c0_58 = arith.constant 0 : index
    %98 = vector.load %arg8[%c0_57, %c0_58] : memref<256x128xbf16, #tpu.memory_space<vmem>>, vector<256x128xbf16>
    %cst_59 = arith.constant dense<0.000000e+00> : vector<2x128xf32>
    %99 = tpu.matmul %97, %98, %cst_59 {dimension_numbers = #tpu.dot_dimension_numbers<[1], [0], [0], [1], [0, 0, 1, 1], [], []>} : vector<2x256xbf16>, vector<256x128xbf16>, vector<2x128xf32> -> vector<2x128xf32>
    %c0_60 = arith.constant 0 : index
    %c0_61 = arith.constant 0 : index
    %100 = vector.load %arg9[%c0_60, %c0_61] : memref<1x128xf32, #tpu.memory_space<vmem>>, vector<1x128xf32>
    %101 = vector.broadcast %100 : vector<1x128xf32> to vector<2x128xf32>
    %102 = arith.addf %99, %101 : vector<2x128xf32>
    %c0_62 = arith.constant 0 : index
    %c0_63 = arith.constant 0 : index
    %103 = vector.load %arg10[%c0_62, %c0_63] : memref<2x128xf32, #tpu.memory_space<vmem>>, vector<2x128xf32>
    tpu.vector_store %arg10[%c0_62, %c0_63], %102 {strides = array<i32>} : memref<2x128xf32, #tpu.memory_space<vmem>>, vector<2x128xf32>,
    return
  }
  func.func @transform_0(%arg0: i32) -> (i32, i32) {
    %c0_i32 = arith.constant 0 : i32
    %c0_i32_0 = arith.constant 0 : i32
    %c0_i32_1 = arith.constant 0 : i32
    return %c0_i32, %c0_i32_0 : i32, i32
  }
  func.func @transform_1(%arg0: i32) -> (i32, i32) {
    %c0_i32 = arith.constant 0 : i32
    %c0_i32_0 = arith.constant 0 : i32
    %c0_i32_1 = arith.constant 0 : i32
    return %c0_i32, %c0_i32_0 : i32, i32
  }
  func.func @transform_2(%arg0: i32) -> (i32, i32) {
    %c0_i32 = arith.constant 0 : i32
    %c0_i32_0 = arith.constant 0 : i32
    %c0_i32_1 = arith.constant 0 : i32
    return %c0_i32, %c0_i32_0 : i32, i32
  }
  func.func @transform_3(%arg0: i32) -> (i32, i32) {
    %c0_i32 = arith.constant 0 : i32
    %c0_i32_0 = arith.constant 0 : i32
    %c0_i32_1 = arith.constant 0 : i32
    return %c0_i32, %c0_i32_0 : i32, i32
  }
  func.func @transform_4(%arg0: i32) -> (i32, i32) {
    %c0_i32 = arith.constant 0 : i32
    %c0_i32_0 = arith.constant 0 : i32
    %c0_i32_1 = arith.constant 0 : i32
    return %c0_i32, %c0_i32_0 : i32, i32
  }
  func.func @transform_5(%arg0: i32) -> (i32, i32) {
    %c0_i32 = arith.constant 0 : i32
    %c0_i32_0 = arith.constant 0 : i32
    %c0_i32_1 = arith.constant 0 : i32
    return %c0_i32, %c0_i32_0 : i32, i32
  }
  func.func @transform_6(%arg0: i32) -> (i32, i32) {
    %c0_i32 = arith.constant 0 : i32
    %c0_i32_0 = arith.constant 0 : i32
    %c0_i32_1 = arith.constant 0 : i32
    return %c0_i32, %c0_i32_0 : i32, i32
  }
  func.func @transform_7(%arg0: i32) -> (i32, i32) {
    %c0_i32 = arith.constant 0 : i32
    %c0_i32_0 = arith.constant 0 : i32
    %c0_i32_1 = arith.constant 0 : i32
    return %c0_i32, %c0_i32_0 : i32, i32
  }
  func.func @transform_8(%arg0: i32) -> (i32, i32) {
    %c0_i32 = arith.constant 0 : i32
    %c0_i32_0 = arith.constant 0 : i32
    %c0_i32_1 = arith.constant 0 : i32
    return %c0_i32, %c0_i32_0 : i32, i32
  }
  func.func @transform_9(%arg0: i32) -> (i32, i32) {
    %c0_i32 = arith.constant 0 : i32
    %c0_i32_0 = arith.constant 0 : i32
    %c0_i32_1 = arith.constant 0 : i32
    return %c0_i32, %c0_i32_0 : i32, i32
  }
}

</mosaic_0001>

<llo_original>
// kernel: dqn_forward.1
$region0: #{dqn_forward.1}
  #allocation0 [shape = 'u32[]', space=smem, size = 0x4, offset = 0x4, fixed_abs, tag = 'smem constant byte address 0x4 - core index']
  #allocation1 [shape = 'u32[144,128]{1,0:T(1,128)}', space=vmem, size = 0x12000, scoped, tag = 'internal scratch']
  #allocation2 [shape = 'f32[2,1152]{1,0:T(2,128)}', space=vmem, size = 0x2400, scoped, tag = 'scratch operand']
  %s0 = inlined_call_operand.vmem [shape: bf16[72,1024], index: 0, kind: input, shape index: {}]
  %s1 = inlined_call_operand.vmem [shape: bf16[1024,256], index: 1, kind: input, shape index: {}]
  %s2 = inlined_call_operand.vmem [shape: f32[1,256], index: 2, kind: input, shape index: {}]
  %s3 = inlined_call_operand.vmem [shape: bf16[256,32], index: 3, kind: input, shape index: {}]
  %s4 = inlined_call_operand.vmem [shape: f32[1,32], index: 4, kind: input, shape index: {}]
  %s5 = inlined_call_operand.vmem [shape: bf16[1152,256], index: 5, kind: input, shape index: {}]
  %s6 = inlined_call_operand.vmem [shape: f32[1,256], index: 6, kind: input, shape index: {}]
  %s7 = inlined_call_operand.vmem [shape: bf16[256,128], index: 7, kind: input, shape index: {}]
  %s8 = inlined_call_operand.vmem [shape: f32[1,128], index: 8, kind: input, shape index: {}]
  %s9 = inlined_call_operand.hbm [shape: f32[2,128], index: 9, kind: output, shape index: {}]
  %s10 = sld [smem:[#allocation0]]
  $region46: #{dqn_forward.1} parent=0
    _
  %s12 = ssub.s32 1, %s10
  %s13 = scalar_select 0, %s12, %s10
  $region1: #{dqn_forward.1} parent=0
    #allocation3 [shape = 'u8[1024]{0}', space=vmem, size = 0x400, scoped, tag = 'output window, operand 0, single buffered']
    #allocation4 [shape = 's32[1]{0}', space=sflag, size = 0x4, scoped, tag = 'scoped memory for dqn_forward.1']
    %14 = vsyncpa [#allocation4], 0
    // Predicated region
    $region2: #{dqn_forward.1} parent=1 // pred_check
      _
    $region3: #{dqn_forward.1} parent=1 // pred_check_branch
      %16 = sbr.rel (0) target = $region5
    $region4: #{dqn_forward.1} parent=1 // pred_region
      _
    $region5: #{dqn_forward.1} parent=1 // pred_fallthru
      _
    // Predicated region
    $region6: #{dqn_forward.1} parent=1 // pred_check
      _
    $region7: #{dqn_forward.1} parent=1 // pred_check_branch
      %18 = sbr.rel (0) target = $region9
    $region8: #{dqn_forward.1} parent=1 // pred_region
      _
    $region9: #{dqn_forward.1} parent=1 // pred_fallthru
      _
    // Predicated region
    $region10: #{dqn_forward.1} parent=1 // pred_check
      _
    $region11: #{dqn_forward.1} parent=1 // pred_check_branch
      %20 = sbr.rel (0) target = $region13
    $region12: #{dqn_forward.1} parent=1 // pred_region
      _
    $region13: #{dqn_forward.1} parent=1 // pred_fallthru
      _
    // Predicated region
    $region14: #{dqn_forward.1} parent=1 // pred_check
      _
    $region15: #{dqn_forward.1} parent=1 // pred_check_branch
      %22 = sbr.rel (0) target = $region17
    $region16: #{dqn_forward.1} parent=1 // pred_region
      _
    $region17: #{dqn_forward.1} parent=1 // pred_fallthru
      _
    // Predicated region
    $region18: #{dqn_forward.1} parent=1 // pred_check
      _
    $region19: #{dqn_forward.1} parent=1 // pred_check_branch
      %24 = sbr.rel (0) target = $region21
    $region20: #{dqn_forward.1} parent=1 // pred_region
      _
    $region21: #{dqn_forward.1} parent=1 // pred_fallthru
      _
    // Predicated region
    $region22: #{dqn_forward.1} parent=1 // pred_check
      _
    $region23: #{dqn_forward.1} parent=1 // pred_check_branch
      %26 = sbr.rel (0) target = $region25
    $region24: #{dqn_forward.1} parent=1 // pred_region
      _
    $region25: #{dqn_forward.1} parent=1 // pred_fallthru
      _
    // Predicated region
    $region26: #{dqn_forward.1} parent=1 // pred_check
      _
    $region27: #{dqn_forward.1} parent=1 // pred_check_branch
      %28 = sbr.rel (0) target = $region29
    $region28: #{dqn_forward.1} parent=1 // pred_region
      _
    $region29: #{dqn_forward.1} parent=1 // pred_fallthru
      _
    // Predicated region
    $region30: #{dqn_forward.1} parent=1 // pred_check
      _
    $region31: #{dqn_forward.1} parent=1 // pred_check_branch
      %30 = sbr.rel (0) target = $region33
    $region32: #{dqn_forward.1} parent=1 // pred_region
      _
    $region33: #{dqn_forward.1} parent=1 // pred_fallthru
      _
    // Predicated region
    $region34: #{dqn_forward.1} parent=1 // pred_check
      _
    $region35: #{dqn_forward.1} parent=1 // pred_check_branch
      %32 = sbr.rel (0) target = $region37
    $region36: #{dqn_forward.1} parent=1 // pred_region
      _
    $region37: #{dqn_forward.1} parent=1 // pred_fallthru
      _
    %v34 = vld [vmem:[%s0] sm:$0xff]
    %v35 = vld [vmem:[%s0 + $0x8] sm:$0xff]
    %v36 = vld [vmem:[%s0 + $0x10] sm:$0xff]
    %v37 = vld [vmem:[%s0 + $0x18] sm:$0xff]
    %v38 = vld [vmem:[%s0 + $0x20] sm:$0xff]
    %v39 = vld [vmem:[%s0 + $0x28] sm:$0xff]
    %v40 = vld [vmem:[%s0 + $0x30] sm:$0xff]
    %v41 = vld [vmem:[%s0 + $0x38] sm:$0xff]
    %v42 = vld [vmem:[%s0 + $0x40] sm:$0xff]
    %v43 = vld [vmem:[%s0 + $0x48] sm:$0xff]
    %v44 = vld [vmem:[%s0 + $0x50] sm:$0xff]
    %v45 = vld [vmem:[%s0 + $0x58] sm:$0xff]
    %v46 = vld [vmem:[%s0 + $0x60] sm:$0xff]
    %v47 = vld [vmem:[%s0 + $0x68] sm:$0xff]
    %v48 = vld [vmem:[%s0 + $0x70] sm:$0xff]
    %v49 = vld [vmem:[%s0 + $0x78] sm:$0xff]
    %v50 = vld [vmem:[%s0 + $0x80] sm:$0xff]
    %v51 = vld [vmem:[%s0 + $0x88] sm:$0xff]
    %v52 = vld [vmem:[%s0 + $0x90] sm:$0xff]
    %v53 = vld [vmem:[%s0 + $0x98] sm:$0xff]
    %v54 = vld [vmem:[%s0 + $0xa0] sm:$0xff]
    %v55 = vld [vmem:[%s0 + $0xa8] sm:$0xff]
    %v56 = vld [vmem:[%s0 + $0xb0] sm:$0xff]
    %v57 = vld [vmem:[%s0 + $0xb8] sm:$0xff]
    %v58 = vld [vmem:[%s0 + $0xc0] sm:$0xff]
    %v59 = vld [vmem:[%s0 + $0xc8] sm:$0xff]
    %v60 = vld [vmem:[%s0 + $0xd0] sm:$0xff]
    %v61 = vld [vmem:[%s0 + $0xd8] sm:$0xff]
    %v62 = vld [vmem:[%s0 + $0xe0] sm:$0xff]
    %v63 = vld [vmem:[%s0 + $0xe8] sm:$0xff]
    %v64 = vld [vmem:[%s0 + $0xf0] sm:$0xff]
    %v65 = vld [vmem:[%s0 + $0xf8] sm:$0xff]
    %v66 = vld [vmem:[%s0 + $0x100] sm:$0xff]
    %v67 = vld [vmem:[%s0 + $0x108] sm:$0xff]
    %v68 = vld [vmem:[%s0 + $0x110] sm:$0xff]
    %v69 = vld [vmem:[%s0 + $0x118] sm:$0xff]
    %v70 = vld [vmem:[%s1] sm:$0xff]
    %v71 = vld [vmem:[%s1 + $0x8] sm:$0xff]
    %v72 = vld [vmem:[%s1 + $0x10] sm:$0xff]
    %v73 = vld [vmem:[%s1 + $0x18] sm:$0xff]
    %v74 = vld [vmem:[%s1 + $0x20] sm:$0xff]
    %v75 = vld [vmem:[%s1 + $0x28] sm:$0xff]
    %v76 = vld [vmem:[%s1 + $0x30] sm:$0xff]
    %v77 = vld [vmem:[%s1 + $0x38] sm:$0xff]
    %v78 = vld [vmem:[%s1 + $0x40] sm:$0xff]
    %v79 = vld [vmem:[%s1 + $0x48] sm:$0xff]
    %v80 = vld [vmem:[%s1 + $0x50] sm:$0xff]
    %v81 = vld [vmem:[%s1 + $0x58] sm:$0xff]
    %v82 = vld [vmem:[%s1 + $0x60] sm:$0xff]
    %v83 = vld [vmem:[%s1 + $0x68] sm:$0xff]
    %v84 = vld [vmem:[%s1 + $0x70] sm:$0xff]
    %v85 = vld [vmem:[%s1 + $0x78] sm:$0xff]
    %v86 = vld [vmem:[%s1 + $0x80] sm:$0xff]
    %v87 = vld [vmem:[%s1 + $0x88] sm:$0xff]
    %v88 = vld [vmem:[%s1 + $0x90] sm:$0xff]
    %v89 = vld [vmem:[%s1 + $0x98] sm:$0xff]
    %v90 = vld [vmem:[%s1 + $0xa0] sm:$0xff]
    %v91 = vld [vmem:[%s1 + $0xa8] sm:$0xff]
    %v92 = vld [vmem:[%s1 + $0xb0] sm:$0xff]
    %v93 = vld [vmem:[%s1 + $0xb8] sm:$0xff]
    %v94 = vld [vmem:[%s1 + $0xc0] sm:$0xff]
    %v95 = vld [vmem:[%s1 + $0xc8] sm:$0xff]
    %v96 = vld [vmem:[%s1 + $0xd0] sm:$0xff]
    %v97 = vld [vmem:[%s1 + $0xd8] sm:$0xff]
    %v98 = vld [vmem:[%s1 + $0xe0] sm:$0xff]
    %v99 = vld [vmem:[%s1 + $0xe8] sm:$0xff]
    %v100 = vld [vmem:[%s1 + $0xf0] sm:$0xff]
    %v101 = vld [vmem:[%s1 + $0xf8] sm:$0xff]
    %v102 = vld [vmem:[%s1 + $0x100] sm:$0xff]
    %v103 = vld [vmem:[%s1 + $0x108] sm:$0xff]
    %v104 = vld [vmem:[%s1 + $0x110] sm:$0xff]
    %v105 = vld [vmem:[%s1 + $0x118] sm:$0xff]
    %v106 = vld [vmem:[%s1 + $0x120] sm:$0xff]
    %v107 = vld [vmem:[%s1 + $0x128] sm:$0xff]
    %v108 = vld [vmem:[%s1 + $0x130] sm:$0xff]
    %v109 = vld [vmem:[%s1 + $0x138] sm:$0xff]
    %v110 = vld [vmem:[%s1 + $0x140] sm:$0xff]
    %v111 = vld [vmem:[%s1 + $0x148] sm:$0xff]
    %v112 = vld [vmem:[%s1 + $0x150] sm:$0xff]
    %v113 = vld [vmem:[%s1 + $0x158] sm:$0xff]
    %v114 = vld [vmem:[%s1 + $0x160] sm:$0xff]
    %v115 = vld [vmem:[%s1 + $0x168] sm:$0xff]
    %v116 = vld [vmem:[%s1 + $0x170] sm:$0xff]
    %v117 = vld [vmem:[%s1 + $0x178] sm:$0xff]
    %v118 = vld [vmem:[%s1 + $0x180] sm:$0xff]
    %v119 = vld [vmem:[%s1 + $0x188] sm:$0xff]
    %v120 = vld [vmem:[%s1 + $0x190] sm:$0xff]
    %v121 = vld [vmem:[%s1 + $0x198] sm:$0xff]
    %v122 = vld [vmem:[%s1 + $0x1a0] sm:$0xff]
    %v123 = vld [vmem:[%s1 + $0x1a8] sm:$0xff]
    %v124 = vld [vmem:[%s1 + $0x1b0] sm:$0xff]
    %v125 = vld [vmem:[%s1 + $0x1b8] sm:$0xff]
    %v126 = vld [vmem:[%s1 + $0x1c0] sm:$0xff]
    %v127 = vld [vmem:[%s1 + $0x1c8] sm:$0xff]
    %v128 = vld [vmem:[%s1 + $0x1d0] sm:$0xff]
    %v129 = vld [vmem:[%s1 + $0x1d8] sm:$0xff]
    %v130 = vld [vmem:[%s1 + $0x1e0] sm:$0xff]
    %v131 = vld [vmem:[%s1 + $0x1e8] sm:$0xff]
    %v132 = vld [vmem:[%s1 + $0x1f0] sm:$0xff]
    %v133 = vld [vmem:[%s1 + $0x1f8] sm:$0xff]
    %v134 = vld [vmem:[%s1 + $0x200] sm:$0xff]
    %v135 = vld [vmem:[%s1 + $0x208] sm:$0xff]
    %v136 = vld [vmem:[%s1 + $0x210] sm:$0xff]
    %v137 = vld [vmem:[%s1 + $0x218] sm:$0xff]
    %v138 = vld [vmem:[%s1 + $0x220] sm:$0xff]
    %v139 = vld [vmem:[%s1 + $0x228] sm:$0xff]
    %v140 = vld [vmem:[%s1 + $0x230] sm:$0xff]
    %v141 = vld [vmem:[%s1 + $0x238] sm:$0xff]
    %v142 = vld [vmem:[%s1 + $0x240] sm:$0xff]
    %v143 = vld [vmem:[%s1 + $0x248] sm:$0xff]
    %v144 = vld [vmem:[%s1 + $0x250] sm:$0xff]
    %v145 = vld [vmem:[%s1 + $0x258] sm:$0xff]
    %v146 = vld [vmem:[%s1 + $0x260] sm:$0xff]
    %v147 = vld [vmem:[%s1 + $0x268] sm:$0xff]
    %v148 = vld [vmem:[%s1 + $0x270] sm:$0xff]
    %v149 = vld [vmem:[%s1 + $0x278] sm:$0xff]
    %v150 = vld [vmem:[%s1 + $0x280] sm:$0xff]
    %v151 = vld [vmem:[%s1 + $0x288] sm:$0xff]
    %v152 = vld [vmem:[%s1 + $0x290] sm:$0xff]
    %v153 = vld [vmem:[%s1 + $0x298] sm:$0xff]
    %v154 = vld [vmem:[%s1 + $0x2a0] sm:$0xff]
    %v155 = vld [vmem:[%s1 + $0x2a8] sm:$0xff]
    %v156 = vld [vmem:[%s1 + $0x2b0] sm:$0xff]
    %v157 = vld [vmem:[%s1 + $0x2b8] sm:$0xff]
    %v158 = vld [vmem:[%s1 + $0x2c0] sm:$0xff]
    %v159 = vld [vmem:[%s1 + $0x2c8] sm:$0xff]
    %v160 = vld [vmem:[%s1 + $0x2d0] sm:$0xff]
    %v161 = vld [vmem:[%s1 + $0x2d8] sm:$0xff]
    %v162 = vld [vmem:[%s1 + $0x2e0] sm:$0xff]
    %v163 = vld [vmem:[%s1 + $0x2e8] sm:$0xff]
    %v164 = vld [vmem:[%s1 + $0x2f0] sm:$0xff]
    %v165 = vld [vmem:[%s1 + $0x2f8] sm:$0xff]
    %v166 = vld [vmem:[%s1 + $0x300] sm:$0xff]
    %v167 = vld [vmem:[%s1 + $0x308] sm:$0xff]
    %v168 = vld [vmem:[%s1 + $0x310] sm:$0xff]
    %v169 = vld [vmem:[%s1 + $0x318] sm:$0xff]
    %v170 = vld [vmem:[%s1 + $0x320] sm:$0xff]
    %v171 = vld [vmem:[%s1 + $0x328] sm:$0xff]
    %v172 = vld [vmem:[%s1 + $0x330] sm:$0xff]
    %v173 = vld [vmem:[%s1 + $0x338] sm:$0xff]
    %v174 = vld [vmem:[%s1 + $0x340] sm:$0xff]
    %v175 = vld [vmem:[%s1 + $0x348] sm:$0xff]
    %v176 = vld [vmem:[%s1 + $0x350] sm:$0xff]
    %v177 = vld [vmem:[%s1 + $0x358] sm:$0xff]
    %v178 = vld [vmem:[%s1 + $0x360] sm:$0xff]
    %v179 = vld [vmem:[%s1 + $0x368] sm:$0xff]
    %v180 = vld [vmem:[%s1 + $0x370] sm:$0xff]
    %v181 = vld [vmem:[%s1 + $0x378] sm:$0xff]
    %v182 = vld [vmem:[%s1 + $0x380] sm:$0xff]
    %v183 = vld [vmem:[%s1 + $0x388] sm:$0xff]
    %v184 = vld [vmem:[%s1 + $0x390] sm:$0xff]
    %v185 = vld [vmem:[%s1 + $0x398] sm:$0xff]
    %v186 = vld [vmem:[%s1 + $0x3a0] sm:$0xff]
    %v187 = vld [vmem:[%s1 + $0x3a8] sm:$0xff]
    %v188 = vld [vmem:[%s1 + $0x3b0] sm:$0xff]
    %v189 = vld [vmem:[%s1 + $0x3b8] sm:$0xff]
    %v190 = vld [vmem:[%s1 + $0x3c0] sm:$0xff]
    %v191 = vld [vmem:[%s1 + $0x3c8] sm:$0xff]
    %v192 = vld [vmem:[%s1 + $0x3d0] sm:$0xff]
    %v193 = vld [vmem:[%s1 + $0x3d8] sm:$0xff]
    %v194 = vld [vmem:[%s1 + $0x3e0] sm:$0xff]
    %v195 = vld [vmem:[%s1 + $0x3e8] sm:$0xff]
    %v196 = vld [vmem:[%s1 + $0x3f0] sm:$0xff]
    %v197 = vld [vmem:[%s1 + $0x3f8] sm:$0xff]
    %v198 = vld [vmem:[%s2] sm:$0x3]
    %v200 = vlaneseq
    %v201 = vshrl.u32 %v200, 7
    %v202 = vsub.s32 0, %v201
    %v203 = vrot.slane %v198, %v202
    %v204 = vlaneseq
    %v205 = vshrl.u32 %v204, 7
    %v206 = vsub.s32 1, %v205
    %v207 = vrot.slane %v198, %v206
    %v246 = vunpack.c.l.b16 %v34
    %v247 = vunpack.c.h.b16 %v34
    %v248 = vunpack.c.l.b16 %v35
    %v249 = vunpack.c.h.b16 %v35
    %v250 = vunpack.c.l.b16 %v36
    %v251 = vunpack.c.h.b16 %v36
    %v252 = vunpack.c.l.b16 %v37
    %v253 = vunpack.c.h.b16 %v37
    %v254 = vunpack.c.l.b16 %v38
    %v255 = vunpack.c.h.b16 %v38
    %v256 = vunpack.c.l.b16 %v39
    %v257 = vunpack.c.h.b16 %v39
    %v258 = vunpack.c.l.b16 %v40
    %v259 = vunpack.c.h.b16 %v40
    %v260 = vunpack.c.l.b16 %v41
    %v261 = vunpack.c.h.b16 %v41
    %v262 = vunpack.c.l.b16 %v42
    %v263 = vunpack.c.h.b16 %v42
    %v264 = vunpack.c.l.b16 %v43
    %v265 = vunpack.c.h.b16 %v43
    %v266 = vunpack.c.l.b16 %v44
    %v267 = vunpack.c.h.b16 %v44
    %v268 = vunpack.c.l.b16 %v45
    %v269 = vunpack.c.h.b16 %v45
    %v270 = vunpack.c.l.b16 %v46
    %v271 = vunpack.c.h.b16 %v46
    %v272 = vunpack.c.l.b16 %v47
    %v273 = vunpack.c.h.b16 %v47
    %v274 = vunpack.c.l.b16 %v48
    %v275 = vunpack.c.h.b16 %v48
    %v276 = vunpack.c.l.b16 %v49
    %v277 = vunpack.c.h.b16 %v49
    %v278 = vunpack.c.l.b16 %v50
    %v279 = vunpack.c.h.b16 %v50
    %v280 = vunpack.c.l.b16 %v51
    %v281 = vunpack.c.h.b16 %v51
    %v282 = vunpack.c.l.b16 %v52
    %v283 = vunpack.c.h.b16 %v52
    %v284 = vunpack.c.l.b16 %v53
    %v285 = vunpack.c.h.b16 %v53
    %v286 = vunpack.c.l.b16 %v54
    %v287 = vunpack.c.h.b16 %v54
    %v288 = vunpack.c.l.b16 %v55
    %v289 = vunpack.c.h.b16 %v55
    %v290 = vunpack.c.l.b16 %v56
    %v291 = vunpack.c.h.b16 %v56
    %v292 = vunpack.c.l.b16 %v57
    %v293 = vunpack.c.h.b16 %v57
    %v294 = vunpack.c.l.b16 %v58
    %v295 = vunpack.c.h.b16 %v58
    %v296 = vunpack.c.l.b16 %v59
    %v297 = vunpack.c.h.b16 %v59
    %v298 = vunpack.c.l.b16 %v60
    %v299 = vunpack.c.h.b16 %v60
    %v300 = vunpack.c.l.b16 %v61
    %v301 = vunpack.c.h.b16 %v61
    %v302 = vunpack.c.l.b16 %v62
    %v303 = vunpack.c.h.b16 %v62
    %v304 = vunpack.c.l.b16 %v63
    %v305 = vunpack.c.h.b16 %v63
    %v306 = vunpack.c.l.b16 %v64
    %v307 = vunpack.c.h.b16 %v64
    %v308 = vunpack.c.l.b16 %v65
    %v309 = vunpack.c.h.b16 %v65
    %v310 = vunpack.c.l.b16 %v66
    %v311 = vunpack.c.h.b16 %v66
    %v312 = vunpack.c.l.b16 %v67
    %v313 = vunpack.c.h.b16 %v67
    %v314 = vunpack.c.l.b16 %v68
    %v315 = vunpack.c.h.b16 %v68
    %v316 = vunpack.c.l.b16 %v69
    %v317 = vunpack.c.h.b16 %v69
    %v318 = vpack.c.b16 %v254, %v246
    %v319 = vpack.c.b16 %v255, %v247
    %v320 = vpack.c.b16 %v256, %v248
    %v321 = vpack.c.b16 %v257, %v249
    %v322 = vpack.c.b16 %v258, %v250
    %v323 = vpack.c.b16 %v259, %v251
    %v324 = vpack.c.b16 %v260, %v252
    %v325 = vpack.c.b16 %v261, %v253
    %v326 = vpack.c.b16 %v270, %v262
    %v327 = vpack.c.b16 %v271, %v263
    %v328 = vpack.c.b16 %v272, %v264
    %v329 = vpack.c.b16 %v273, %v265
    %v330 = vpack.c.b16 %v274, %v266
    %v331 = vpack.c.b16 %v275, %v267
    %v332 = vpack.c.b16 %v276, %v268
    %v333 = vpack.c.b16 %v277, %v269
    %v334 = vpack.c.b16 %v286, %v278
    %v335 = vpack.c.b16 %v287, %v279
    %v336 = vpack.c.b16 %v288, %v280
    %v337 = vpack.c.b16 %v289, %v281
    %v338 = vpack.c.b16 %v290, %v282
    %v339 = vpack.c.b16 %v291, %v283
    %v340 = vpack.c.b16 %v292, %v284
    %v341 = vpack.c.b16 %v293, %v285
    %v342 = vpack.c.b16 %v302, %v294
    %v343 = vpack.c.b16 %v303, %v295
    %v344 = vpack.c.b16 %v304, %v296
    %v345 = vpack.c.b16 %v305, %v297
    %v346 = vpack.c.b16 %v306, %v298
    %v347 = vpack.c.b16 %v307, %v299
    %v348 = vpack.c.b16 %v308, %v300
    %v349 = vpack.c.b16 %v309, %v301
    %v350 = vpack.c.b16 %v310, %v310
    %v351 = vpack.c.b16 %v311, %v311
    %v352 = vpack.c.b16 %v312, %v312
    %v353 = vpack.c.b16 %v313, %v313
    %v354 = vpack.c.b16 %v314, %v314
    %v355 = vpack.c.b16 %v315, %v315
    %v356 = vpack.c.b16 %v316, %v316
    %v357 = vpack.c.b16 %v317, %v317
    %v526 = vunpack.c.l.b16 %v70
    %v527 = vunpack.c.h.b16 %v70
    %v528 = vunpack.c.l.b16 %v71
    %v529 = vunpack.c.h.b16 %v71
    %v530 = vunpack.c.l.b16 %v72
    %v531 = vunpack.c.h.b16 %v72
    %v532 = vunpack.c.l.b16 %v73
    %v533 = vunpack.c.h.b16 %v73
    %v534 = vunpack.c.l.b16 %v74
    %v535 = vunpack.c.h.b16 %v74
    %v536 = vunpack.c.l.b16 %v75
    %v537 = vunpack.c.h.b16 %v75
    %v538 = vunpack.c.l.b16 %v76
    %v539 = vunpack.c.h.b16 %v76
    %v540 = vunpack.c.l.b16 %v77
    %v541 = vunpack.c.h.b16 %v77
    %v542 = vunpack.c.l.b16 %v78
    %v543 = vunpack.c.h.b16 %v78
    %v544 = vunpack.c.l.b16 %v79
    %v545 = vunpack.c.h.b16 %v79
    %v546 = vunpack.c.l.b16 %v80
    %v547 = vunpack.c.h.b16 %v80
    %v548 = vunpack.c.l.b16 %v81
    %v549 = vunpack.c.h.b16 %v81
    %v550 = vunpack.c.l.b16 %v82
    %v551 = vunpack.c.h.b16 %v82
    %v552 = vunpack.c.l.b16 %v83
    %v553 = vunpack.c.h.b16 %v83
    %v554 = vunpack.c.l.b16 %v84
    %v555 = vunpack.c.h.b16 %v84
    %v556 = vunpack.c.l.b16 %v85
    %v557 = vunpack.c.h.b16 %v85
    %v558 = vunpack.c.l.b16 %v86
    %v559 = vunpack.c.h.b16 %v86
    %v560 = vunpack.c.l.b16 %v87
    %v561 = vunpack.c.h.b16 %v87
    %v562 = vunpack.c.l.b16 %v88
    %v563 = vunpack.c.h.b16 %v88
    %v564 = vunpack.c.l.b16 %v89
    %v565 = vunpack.c.h.b16 %v89
    %v566 = vunpack.c.l.b16 %v90
    %v567 = vunpack.c.h.b16 %v90
    %v568 = vunpack.c.l.b16 %v91
    %v569 = vunpack.c.h.b16 %v91
    %v570 = vunpack.c.l.b16 %v92
    %v571 = vunpack.c.h.b16 %v92
    %v572 = vunpack.c.l.b16 %v93
    %v573 = vunpack.c.h.b16 %v93
    %v574 = vunpack.c.l.b16 %v94
    %v575 = vunpack.c.h.b16 %v94
    %v576 = vunpack.c.l.b16 %v95
    %v577 = vunpack.c.h.b16 %v95
    %v578 = vunpack.c.l.b16 %v96
    %v579 = vunpack.c.h.b16 %v96
    %v580 = vunpack.c.l.b16 %v97
    %v581 = vunpack.c.h.b16 %v97
    %v582 = vunpack.c.l.b16 %v98
    %v583 = vunpack.c.h.b16 %v98
    %v584 = vunpack.c.l.b16 %v99
    %v585 = vunpack.c.h.b16 %v99
    %v586 = vunpack.c.l.b16 %v100
    %v587 = vunpack.c.h.b16 %v100
    %v588 = vunpack.c.l.b16 %v101
    %v589 = vunpack.c.h.b16 %v101
    %v590 = vunpack.c.l.b16 %v102
    %v591 = vunpack.c.h.b16 %v102
    %v592 = vunpack.c.l.b16 %v103
    %v593 = vunpack.c.h.b16 %v103
    %v594 = vunpack.c.l.b16 %v104
    %v595 = vunpack.c.h.b16 %v104
    %v596 = vunpack.c.l.b16 %v105
    %v597 = vunpack.c.h.b16 %v105
    %v598 = vunpack.c.l.b16 %v106
    %v599 = vunpack.c.h.b16 %v106
    %v600 = vunpack.c.l.b16 %v107
    %v601 = vunpack.c.h.b16 %v107
    %v602 = vunpack.c.l.b16 %v108
    %v603 = vunpack.c.h.b16 %v108
    %v604 = vunpack.c.l.b16 %v109
    %v605 = vunpack.c.h.b16 %v109
    %v606 = vunpack.c.l.b16 %v110
    %v607 = vunpack.c.h.b16 %v110
    %v608 = vunpack.c.l.b16 %v111
    %v609 = vunpack.c.h.b16 %v111
    %v610 = vunpack.c.l.b16 %v112
    %v611 = vunpack.c.h.b16 %v112
    %v612 = vunpack.c.l.b16 %v113
    %v613 = vunpack.c.h.b16 %v113
    %v614 = vunpack.c.l.b16 %v114
    %v615 = vunpack.c.h.b16 %v114
    %v616 = vunpack.c.l.b16 %v115
    %v617 = vunpack.c.h.b16 %v115
    %v618 = vunpack.c.l.b16 %v116
    %v619 = vunpack.c.h.b16 %v116
    %v620 = vunpack.c.l.b16 %v117
    %v621 = vunpack.c.h.b16 %v117
    %v622 = vunpack.c.l.b16 %v118
    %v623 = vunpack.c.h.b16 %v118
    %v624 = vunpack.c.l.b16 %v119
    %v625 = vunpack.c.h.b16 %v119
    %v626 = vunpack.c.l.b16 %v120
    %v627 = vunpack.c.h.b16 %v120
    %v628 = vunpack.c.l.b16 %v121
    %v629 = vunpack.c.h.b16 %v121
    %v630 = vunpack.c.l.b16 %v122
    %v631 = vunpack.c.h.b16 %v122
    %v632 = vunpack.c.l.b16 %v123
    %v633 = vunpack.c.h.b16 %v123
    %v634 = vunpack.c.l.b16 %v124
    %v635 = vunpack.c.h.b16 %v124
    %v636 = vunpack.c.l.b16 %v125
    %v637 = vunpack.c.h.b16 %v125
    %v638 = vunpack.c.l.b16 %v126
    %v639 = vunpack.c.h.b16 %v126
    %v640 = vunpack.c.l.b16 %v127
    %v641 = vunpack.c.h.b16 %v127
    %v642 = vunpack.c.l.b16 %v128
    %v643 = vunpack.c.h.b16 %v128
    %v644 = vunpack.c.l.b16 %v129
    %v645 = vunpack.c.h.b16 %v129
    %v646 = vunpack.c.l.b16 %v130
    %v647 = vunpack.c.h.b16 %v130
    %v648 = vunpack.c.l.b16 %v131
    %v649 = vunpack.c.h.b16 %v131
    %v650 = vunpack.c.l.b16 %v132
    %v651 = vunpack.c.h.b16 %v132
    %v652 = vunpack.c.l.b16 %v133
    %v653 = vunpack.c.h.b16 %v133
    %v654 = vunpack.c.l.b16 %v134
    %v655 = vunpack.c.h.b16 %v134
    %v656 = vunpack.c.l.b16 %v135
    %v657 = vunpack.c.h.b16 %v135
    %v658 = vunpack.c.l.b16 %v136
    %v659 = vunpack.c.h.b16 %v136
    %v660 = vunpack.c.l.b16 %v137
    %v661 = vunpack.c.h.b16 %v137
    %v662 = vunpack.c.l.b16 %v138
    %v663 = vunpack.c.h.b16 %v138
    %v664 = vunpack.c.l.b16 %v139
    %v665 = vunpack.c.h.b16 %v139
    %v666 = vunpack.c.l.b16 %v140
    %v667 = vunpack.c.h.b16 %v140
    %v668 = vunpack.c.l.b16 %v141
    %v669 = vunpack.c.h.b16 %v141
    %v670 = vunpack.c.l.b16 %v142
    %v671 = vunpack.c.h.b16 %v142
    %v672 = vunpack.c.l.b16 %v143
    %v673 = vunpack.c.h.b16 %v143
    %v674 = vunpack.c.l.b16 %v144
    %v675 = vunpack.c.h.b16 %v144
    %v676 = vunpack.c.l.b16 %v145
    %v677 = vunpack.c.h.b16 %v145
    %v678 = vunpack.c.l.b16 %v146
    %v679 = vunpack.c.h.b16 %v146
    %v680 = vunpack.c.l.b16 %v147
    %v681 = vunpack.c.h.b16 %v147
    %v682 = vunpack.c.l.b16 %v148
    %v683 = vunpack.c.h.b16 %v148
    %v684 = vunpack.c.l.b16 %v149
    %v685 = vunpack.c.h.b16 %v149
    %v686 = vunpack.c.l.b16 %v150
    %v687 = vunpack.c.h.b16 %v150
    %v688 = vunpack.c.l.b16 %v151
    %v689 = vunpack.c.h.b16 %v151
    %v690 = vunpack.c.l.b16 %v152
    %v691 = vunpack.c.h.b16 %v152
    %v692 = vunpack.c.l.b16 %v153
    %v693 = vunpack.c.h.b16 %v153
    %v694 = vunpack.c.l.b16 %v154
    %v695 = vunpack.c.h.b16 %v154
    %v696 = vunpack.c.l.b16 %v155
    %v697 = vunpack.c.h.b16 %v155
    %v698 = vunpack.c.l.b16 %v156
    %v699 = vunpack.c.h.b16 %v156
    %v700 = vunpack.c.l.b16 %v157
    %v701 = vunpack.c.h.b16 %v157
    %v702 = vunpack.c.l.b16 %v158
    %v703 = vunpack.c.h.b16 %v158
    %v704 = vunpack.c.l.b16 %v159
    %v705 = vunpack.c.h.b16 %v159
    %v706 = vunpack.c.l.b16 %v160
    %v707 = vunpack.c.h.b16 %v160
    %v708 = vunpack.c.l.b16 %v161
    %v709 = vunpack.c.h.b16 %v161
    %v710 = vunpack.c.l.b16 %v162
    %v711 = vunpack.c.h.b16 %v162
    %v712 = vunpack.c.l.b16 %v163
    %v713 = vunpack.c.h.b16 %v163
    %v714 = vunpack.c.l.b16 %v164
    %v715 = vunpack.c.h.b16 %v164
    %v716 = vunpack.c.l.b16 %v165
    %v717 = vunpack.c.h.b16 %v165
    %v718 = vunpack.c.l.b16 %v166
    %v719 = vunpack.c.h.b16 %v166
    %v720 = vunpack.c.l.b16 %v167
    %v721 = vunpack.c.h.b16 %v167
    %v722 = vunpack.c.l.b16 %v168
    %v723 = vunpack.c.h.b16 %v168
    %v724 = vunpack.c.l.b16 %v169
    %v725 = vunpack.c.h.b16 %v169
    %v726 = vunpack.c.l.b16 %v170
    %v727 = vunpack.c.h.b16 %v170
    %v728 = vunpack.c.l.b16 %v171
    %v729 = vunpack.c.h.b16 %v171
    %v730 = vunpack.c.l.b16 %v172
    %v731 = vunpack.c.h.b16 %v172
    %v732 = vunpack.c.l.b16 %v173
    %v733 = vunpack.c.h.b16 %v173
    %v734 = vunpack.c.l.b16 %v174
    %v735 = vunpack.c.h.b16 %v174
    %v736 = vunpack.c.l.b16 %v175
    %v737 = vunpack.c.h.b16 %v175
    %v738 = vunpack.c.l.b16 %v176
    %v739 = vunpack.c.h.b16 %v176
    %v740 = vunpack.c.l.b16 %v177
    %v741 = vunpack.c.h.b16 %v177
    %v742 = vunpack.c.l.b16 %v178
    %v743 = vunpack.c.h.b16 %v178
    %v744 = vunpack.c.l.b16 %v179
    %v745 = vunpack.c.h.b16 %v179
    %v746 = vunpack.c.l.b16 %v180
    %v747 = vunpack.c.h.b16 %v180
    %v748 = vunpack.c.l.b16 %v181
    %v749 = vunpack.c.h.b16 %v181
    %v750 = vunpack.c.l.b16 %v182
    %v751 = vunpack.c.h.b16 %v182
    %v752 = vunpack.c.l.b16 %v183
    %v753 = vunpack.c.h.b16 %v183
    %v754 = vunpack.c.l.b16 %v184
    %v755 = vunpack.c.h.b16 %v184
    %v756 = vunpack.c.l.b16 %v185
    %v757 = vunpack.c.h.b16 %v185
    %v758 = vunpack.c.l.b16 %v186
    %v759 = vunpack.c.h.b16 %v186
    %v760 = vunpack.c.l.b16 %v187
    %v761 = vunpack.c.h.b16 %v187
    %v762 = vunpack.c.l.b16 %v188
    %v763 = vunpack.c.h.b16 %v188
    %v764 = vunpack.c.l.b16 %v189
    %v765 = vunpack.c.h.b16 %v189
    %v766 = vunpack.c.l.b16 %v190
    %v767 = vunpack.c.h.b16 %v190
    %v768 = vunpack.c.l.b16 %v191
    %v769 = vunpack.c.h.b16 %v191
    %v770 = vunpack.c.l.b16 %v192
    %v771 = vunpack.c.h.b16 %v192
    %v772 = vunpack.c.l.b16 %v193
    %v773 = vunpack.c.h.b16 %v193
    %v774 = vunpack.c.l.b16 %v194
    %v775 = vunpack.c.h.b16 %v194
    %v776 = vunpack.c.l.b16 %v195
    %v777 = vunpack.c.h.b16 %v195
    %v778 = vunpack.c.l.b16 %v196
    %v779 = vunpack.c.h.b16 %v196
    %v780 = vunpack.c.l.b16 %v197
    %v781 = vunpack.c.h.b16 %v197
    %v782 = vpack.c.b16 %v528, %v526
    %v783 = vpack.c.b16 %v529, %v527
    %v784 = vpack.c.b16 %v532, %v530
    %v785 = vpack.c.b16 %v533, %v531
    %v786 = vpack.c.b16 %v536, %v534
    %v787 = vpack.c.b16 %v537, %v535
    %v788 = vpack.c.b16 %v540, %v538
    %v789 = vpack.c.b16 %v541, %v539
    %v790 = vpack.c.b16 %v544, %v542
    %v791 = vpack.c.b16 %v545, %v543
    %v792 = vpack.c.b16 %v548, %v546
    %v793 = vpack.c.b16 %v549, %v547
    %v794 = vpack.c.b16 %v552, %v550
    %v795 = vpack.c.b16 %v553, %v551
    %v796 = vpack.c.b16 %v556, %v554
    %v797 = vpack.c.b16 %v557, %v555
    %v798 = vpack.c.b16 %v560, %v558
    %v799 = vpack.c.b16 %v561, %v559
    %v800 = vpack.c.b16 %v564, %v562
    %v801 = vpack.c.b16 %v565, %v563
    %v802 = vpack.c.b16 %v568, %v566
    %v803 = vpack.c.b16 %v569, %v567
    %v804 = vpack.c.b16 %v572, %v570
    %v805 = vpack.c.b16 %v573, %v571
    %v806 = vpack.c.b16 %v576, %v574
    %v807 = vpack.c.b16 %v577, %v575
    %v808 = vpack.c.b16 %v580, %v578
    %v809 = vpack.c.b16 %v581, %v579
    %v810 = vpack.c.b16 %v584, %v582
    %v811 = vpack.c.b16 %v585, %v583
    %v812 = vpack.c.b16 %v588, %v586
    %v813 = vpack.c.b16 %v589, %v587
    %v814 = vpack.c.b16 %v592, %v590
    %v815 = vpack.c.b16 %v593, %v591
    %v816 = vpack.c.b16 %v596, %v594
    %v817 = vpack.c.b16 %v597, %v595
    %v818 = vpack.c.b16 %v600, %v598
    %v819 = vpack.c.b16 %v601, %v599
    %v820 = vpack.c.b16 %v604, %v602
    %v821 = vpack.c.b16 %v605, %v603
    %v822 = vpack.c.b16 %v608, %v606
    %v823 = vpack.c.b16 %v609, %v607
    %v824 = vpack.c.b16 %v612, %v610
    %v825 = vpack.c.b16 %v613, %v611
    %v826 = vpack.c.b16 %v616, %v614
    %v827 = vpack.c.b16 %v617, %v615
    %v828 = vpack.c.b16 %v620, %v618
    %v829 = vpack.c.b16 %v621, %v619
    %v830 = vpack.c.b16 %v624, %v622
    %v831 = vpack.c.b16 %v625, %v623
    %v832 = vpack.c.b16 %v628, %v626
    %v833 = vpack.c.b16 %v629, %v627
    %v834 = vpack.c.b16 %v632, %v630
    %v835 = vpack.c.b16 %v633, %v631
    %v836 = vpack.c.b16 %v636, %v634
    %v837 = vpack.c.b16 %v637, %v635
    %v838 = vpack.c.b16 %v640, %v638
    %v839 = vpack.c.b16 %v641, %v639
    %v840 = vpack.c.b16 %v644, %v642
    %v841 = vpack.c.b16 %v645, %v643
    %v842 = vpack.c.b16 %v648, %v646
    %v843 = vpack.c.b16 %v649, %v647
    %v844 = vpack.c.b16 %v652, %v650
    %v845 = vpack.c.b16 %v653, %v651
    %v846 = vpack.c.b16 %v656, %v654
    %v847 = vpack.c.b16 %v657, %v655
    %v848 = vpack.c.b16 %v660, %v658
    %v849 = vpack.c.b16 %v661, %v659
    %v850 = vpack.c.b16 %v664, %v662
    %v851 = vpack.c.b16 %v665, %v663
    %v852 = vpack.c.b16 %v668, %v666
    %v853 = vpack.c.b16 %v669, %v667
    %v854 = vpack.c.b16 %v672, %v670
    %v855 = vpack.c.b16 %v673, %v671
    %v856 = vpack.c.b16 %v676, %v674
    %v857 = vpack.c.b16 %v677, %v675
    %v858 = vpack.c.b16 %v680, %v678
    %v859 = vpack.c.b16 %v681, %v679
    %v860 = vpack.c.b16 %v684, %v682
    %v861 = vpack.c.b16 %v685, %v683
    %v862 = vpack.c.b16 %v688, %v686
    %v863 = vpack.c.b16 %v689, %v687
    %v864 = vpack.c.b16 %v692, %v690
    %v865 = vpack.c.b16 %v693, %v691
    %v866 = vpack.c.b16 %v696, %v694
    %v867 = vpack.c.b16 %v697, %v695
    %v868 = vpack.c.b16 %v700, %v698
    %v869 = vpack.c.b16 %v701, %v699
    %v870 = vpack.c.b16 %v704, %v702
    %v871 = vpack.c.b16 %v705, %v703
    %v872 = vpack.c.b16 %v708, %v706
    %v873 = vpack.c.b16 %v709, %v707
    %v874 = vpack.c.b16 %v712, %v710
    %v875 = vpack.c.b16 %v713, %v711
    %v876 = vpack.c.b16 %v716, %v714
    %v877 = vpack.c.b16 %v717, %v715
    %v878 = vpack.c.b16 %v720, %v718
    %v879 = vpack.c.b16 %v721, %v719
    %v880 = vpack.c.b16 %v724, %v722
    %v881 = vpack.c.b16 %v725, %v723
    %v882 = vpack.c.b16 %v728, %v726
    %v883 = vpack.c.b16 %v729, %v727
    %v884 = vpack.c.b16 %v732, %v730
    %v885 = vpack.c.b16 %v733, %v731
    %v886 = vpack.c.b16 %v736, %v734
    %v887 = vpack.c.b16 %v737, %v735
    %v888 = vpack.c.b16 %v740, %v738
    %v889 = vpack.c.b16 %v741, %v739
    %v890 = vpack.c.b16 %v744, %v742
    %v891 = vpack.c.b16 %v745, %v743
    %v892 = vpack.c.b16 %v748, %v746
    %v893 = vpack.c.b16 %v749, %v747
    %v894 = vpack.c.b16 %v752, %v750
    %v895 = vpack.c.b16 %v753, %v751
    %v896 = vpack.c.b16 %v756, %v754
    %v897 = vpack.c.b16 %v757, %v755
    %v898 = vpack.c.b16 %v760, %v758
    %v899 = vpack.c.b16 %v761, %v759
    %v900 = vpack.c.b16 %v764, %v762
    %v901 = vpack.c.b16 %v765, %v763
    %v902 = vpack.c.b16 %v768, %v766
    %v903 = vpack.c.b16 %v769, %v767
    %v904 = vpack.c.b16 %v772, %v770
    %v905 = vpack.c.b16 %v773, %v771
    %v906 = vpack.c.b16 %v776, %v774
    %v907 = vpack.c.b16 %v777, %v775
    %v908 = vpack.c.b16 %v780, %v778
    %v909 = vpack.c.b16 %v781, %v779
    %1038 = vmatprep.subr.bf16.mxu0 %v783
    %1039 = vmatpush1.bf16.msra.mxu0 %v782
    %1040 = vmatprep.subr.bf16.mxu0 %v785
    %1041 = vmatpush1.bf16.msra.mxu0 %v784
    %1042 = vmatprep.subr.bf16.mxu0 %v787
    %1043 = vmatpush1.bf16.msra.mxu0 %v786
    %1044 = vmatprep.subr.bf16.mxu0 %v789
    %1045 = vmatpush1.bf16.msra.mxu0 %v788
    %1046 = vmatprep.subr.bf16.mxu0 %v791
    %1047 = vmatpush1.bf16.msra.mxu0 %v790
    %1048 = vmatprep.subr.bf16.mxu0 %v793
    %1049 = vmatpush1.bf16.msra.mxu0 %v792
    %1050 = vmatprep.subr.bf16.mxu0 %v795
    %1051 = vmatpush1.bf16.msra.mxu0 %v794
    %1052 = vmatprep.subr.bf16.mxu0 %v797
    %1053 = vmatpush1.bf16.msra.mxu0 %v796
    %1054 = vmatprep.subr.bf16.mxu0 %v799
    %1055 = vmatpush1.bf16.msra.mxu0 %v798
    %1056 = vmatprep.subr.bf16.mxu0 %v801
    %1057 = vmatpush1.bf16.msra.mxu0 %v800
    %1058 = vmatprep.subr.bf16.mxu0 %v803
    %1059 = vmatpush1.bf16.msra.mxu0 %v802
    %1060 = vmatprep.subr.bf16.mxu0 %v805
    %1061 = vmatpush1.bf16.msra.mxu0 %v804
    %1062 = vmatprep.subr.bf16.mxu0 %v807
    %1063 = vmatpush1.bf16.msra.mxu0 %v806
    %1064 = vmatprep.subr.bf16.mxu0 %v809
    %1065 = vmatpush1.bf16.msra.mxu0 %v808
    %1066 = vmatprep.subr.bf16.mxu0 %v811
    %1067 = vmatpush1.bf16.msra.mxu0 %v810
    %1068 = vmatprep.subr.bf16.mxu0 %v813
    %1069 = vmatpush1.bf16.msra.mxu0 %v812
    %1070 = vmatprep.mubr.bf16.mxu0 %v319
    %1071 = vmatmul.mubr.bf16.gmra.mrb[0].mxu0 %v318
    %v1072 = vpop.f32.mrb[0].mxu0
    %v1073 = vadd.f32 %v203, %v1072
    %v1074 = vpop.f32.mrb[0].mxu0
    %v1075 = vadd.f32 %v207, %v1074
    %v1076 = vpop.f32.mrb[0].mxu0
    %v1077 = vadd.f32 %v203, %v1076
    %v1078 = vpop.f32.mrb[0].mxu0
    %v1079 = vadd.f32 %v207, %v1078
    %1080 = vmatprep.mubr.bf16.mxu0 %v327
    %1081 = vmatmul.mubr.bf16.gmra.mrb[0].mxu0 %v326
    %v1082 = vpop.f32.mrb[0].mxu0
    %v1083 = vadd.f32 %v203, %v1082
    %v1084 = vpop.f32.mrb[0].mxu0
    %v1085 = vadd.f32 %v207, %v1084
    %v1086 = vpop.f32.mrb[0].mxu0
    %v1087 = vadd.f32 %v203, %v1086
    %v1088 = vpop.f32.mrb[0].mxu0
    %v1089 = vadd.f32 %v207, %v1088
    %1090 = vmatprep.mubr.bf16.mxu0 %v335
    %1091 = vmatmul.mubr.bf16.gmra.mrb[0].mxu0 %v334
    %v1092 = vpop.f32.mrb[0].mxu0
    %v1093 = vadd.f32 %v203, %v1092
    %v1094 = vpop.f32.mrb[0].mxu0
    %v1095 = vadd.f32 %v207, %v1094
    %v1096 = vpop.f32.mrb[0].mxu0
    %v1097 = vadd.f32 %v203, %v1096
    %v1098 = vpop.f32.mrb[0].mxu0
    %v1099 = vadd.f32 %v207, %v1098
    %1100 = vmatprep.mubr.bf16.mxu0 %v343
    %1101 = vmatmul.mubr.bf16.gmra.mrb[0].mxu0 %v342
    %v1102 = vpop.f32.mrb[0].mxu0
    %v1103 = vadd.f32 %v203, %v1102
    %v1104 = vpop.f32.mrb[0].mxu0
    %v1105 = vadd.f32 %v207, %v1104
    %v1106 = vpop.f32.mrb[0].mxu0
    %v1107 = vadd.f32 %v203, %v1106
    %v1108 = vpop.f32.mrb[0].mxu0
    %v1109 = vadd.f32 %v207, %v1108
    %1110 = vmatprep.mubr.bf16.mxu0 %v351
    %1111 = vmatmul.mubr.bf16.gmra.mrb[0].mxu0 %v350
    %v1112 = vpop.f32.mrb[0].mxu0
    %v1113 = vadd.f32 %v203, %v1112
    %v1114 = vpop.f32.mrb[0].mxu0
    %v1115 = vadd.f32 %v207, %v1114
    %v1116 = vpop.f32.mrb[0].mxu0
    %v1117 = vpop.f32.mrb[0].mxu0
    %1118 = vdwg.mxu0
    %1119 = vmatprep.subr.bf16.mxu0 %v815
    %1120 = vmatpush1.bf16.msra.mxu0 %v814
    %1121 = vmatprep.subr.bf16.mxu0 %v817
    %1122 = vmatpush1.bf16.msra.mxu0 %v816
    %1123 = vmatprep.subr.bf16.mxu0 %v819
    %1124 = vmatpush1.bf16.msra.mxu0 %v818
    %1125 = vmatprep.subr.bf16.mxu0 %v821
    %1126 = vmatpush1.bf16.msra.mxu0 %v820
    %1127 = vmatprep.subr.bf16.mxu0 %v823
    %1128 = vmatpush1.bf16.msra.mxu0 %v822
    %1129 = vmatprep.subr.bf16.mxu0 %v825
    %1130 = vmatpush1.bf16.msra.mxu0 %v824
    %1131 = vmatprep.subr.bf16.mxu0 %v827
    %1132 = vmatpush1.bf16.msra.mxu0 %v826
    %1133 = vmatprep.subr.bf16.mxu0 %v829
    %1134 = vmatpush1.bf16.msra.mxu0 %v828
    %1135 = vmatprep.subr.bf16.mxu0 %v831
    %1136 = vmatpush1.bf16.msra.mxu0 %v830
    %1137 = vmatprep.subr.bf16.mxu0 %v833
    %1138 = vmatpush1.bf16.msra.mxu0 %v832
    %1139 = vmatprep.subr.bf16.mxu0 %v835
    %1140 = vmatpush1.bf16.msra.mxu0 %v834
    %1141 = vmatprep.subr.bf16.mxu0 %v837
    %1142 = vmatpush1.bf16.msra.mxu0 %v836
    %1143 = vmatprep.subr.bf16.mxu0 %v839
    %1144 = vmatpush1.bf16.msra.mxu0 %v838
    %1145 = vmatprep.subr.bf16.mxu0 %v841
    %1146 = vmatpush1.bf16.msra.mxu0 %v840
    %1147 = vmatprep.subr.bf16.mxu0 %v843
    %1148 = vmatpush1.bf16.msra.mxu0 %v842
    %1149 = vmatprep.subr.bf16.mxu0 %v845
    %1150 = vmatpush1.bf16.msra.mxu0 %v844
    %1151 = vmatprep.mubr.bf16.mxu0 %v321
    %1152 = vmatmul.mubr.bf16.gmra.mrb[0].mxu0 %v320
    %v1153 = vpop.f32.mrb[0].mxu0
    %v1154 = vadd.f32 %v1073, %v1153
    %v1155 = vpop.f32.mrb[0].mxu0
    %v1156 = vadd.f32 %v1075, %v1155
    %v1157 = vpop.f32.mrb[0].mxu0
    %v1158 = vadd.f32 %v1077, %v1157
    %v1159 = vpop.f32.mrb[0].mxu0
    %v1160 = vadd.f32 %v1079, %v1159
    %1161 = vmatprep.mubr.bf16.mxu0 %v329
    %1162 = vmatmul.mubr.bf16.gmra.mrb[0].mxu0 %v328
    %v1163 = vpop.f32.mrb[0].mxu0
    %v1164 = vadd.f32 %v1083, %v1163
    %v1165 = vpop.f32.mrb[0].mxu0
    %v1166 = vadd.f32 %v1085, %v1165
    %v1167 = vpop.f32.mrb[0].mxu0
    %v1168 = vadd.f32 %v1087, %v1167
    %v1169 = vpop.f32.mrb[0].mxu0
    %v1170 = vadd.f32 %v1089, %v1169
    %1171 = vmatprep.mubr.bf16.mxu0 %v337
    %1172 = vmatmul.mubr.bf16.gmra.mrb[0].mxu0 %v336
    %v1173 = vpop.f32.mrb[0].mxu0
    %v1174 = vadd.f32 %v1093, %v1173
    %v1175 = vpop.f32.mrb[0].mxu0
    %v1176 = vadd.f32 %v1095, %v1175
    %v1177 = vpop.f32.mrb[0].mxu0
    %v1178 = vadd.f32 %v1097, %v1177
    %v1179 = vpop.f32.mrb[0].mxu0
    %v1180 = vadd.f32 %v1099, %v1179
    %1181 = vmatprep.mubr.bf16.mxu0 %v345
    %1182 = vmatmul.mubr.bf16.gmra.mrb[0].mxu0 %v344
    %v1183 = vpop.f32.mrb[0].mxu0
    %v1184 = vadd.f32 %v1103, %v1183
    %v1185 = vpop.f32.mrb[0].mxu0
    %v1186 = vadd.f32 %v1105, %v1185
    %v1187 = vpop.f32.mrb[0].mxu0
    %v1188 = vadd.f32 %v1107, %v1187
    %v1189 = vpop.f32.mrb[0].mxu0
    %v1190 = vadd.f32 %v1109, %v1189
    %1191 = vmatprep.mubr.bf16.mxu0 %v353
    %1192 = vmatmul.mubr.bf16.gmra.mrb[0].mxu0 %v352
    %v1193 = vpop.f32.mrb[0].mxu0
    %v1194 = vadd.f32 %v1113, %v1193
    %v1195 = vpop.f32.mrb[0].mxu0
    %v1196 = vadd.f32 %v1115, %v1195
    %v1197 = vpop.f32.mrb[0].mxu0
    %v1198 = vpop.f32.mrb[0].mxu0
    %1199 = vdwg.mxu0
    %1200 = vmatprep.subr.bf16.mxu0 %v847
    %1201 = vmatpush1.bf16.msra.mxu0 %v846
    %1202 = vmatprep.subr.bf16.mxu0 %v849
    %1203 = vmatpush1.bf16.msra.mxu0 %v848
    %1204 = vmatprep.subr.bf16.mxu0 %v851
    %1205 = vmatpush1.bf16.msra.mxu0 %v850
    %1206 = vmatprep.subr.bf16.mxu0 %v853
    %1207 = vmatpush1.bf16.msra.mxu0 %v852
    %1208 = vmatprep.subr.bf16.mxu0 %v855
    %1209 = vmatpush1.bf16.msra.mxu0 %v854
    %1210 = vmatprep.subr.bf16.mxu0 %v857
    %1211 = vmatpush1.bf16.msra.mxu0 %v856
    %1212 = vmatprep.subr.bf16.mxu0 %v859
    %1213 = vmatpush1.bf16.msra.mxu0 %v858
    %1214 = vmatprep.subr.bf16.mxu0 %v861
    %1215 = vmatpush1.bf16.msra.mxu0 %v860
    %1216 = vmatprep.subr.bf16.mxu0 %v863
    %1217 = vmatpush1.bf16.msra.mxu0 %v862
    %1218 = vmatprep.subr.bf16.mxu0 %v865
    %1219 = vmatpush1.bf16.msra.mxu0 %v864
    %1220 = vmatprep.subr.bf16.mxu0 %v867
    %1221 = vmatpush1.bf16.msra.mxu0 %v866
    %1222 = vmatprep.subr.bf16.mxu0 %v869
    %1223 = vmatpush1.bf16.msra.mxu0 %v868
    %1224 = vmatprep.subr.bf16.mxu0 %v871
    %1225 = vmatpush1.bf16.msra.mxu0 %v870
    %1226 = vmatprep.subr.bf16.mxu0 %v873
    %1227 = vmatpush1.bf16.msra.mxu0 %v872
    %1228 = vmatprep.subr.bf16.mxu0 %v875
    %1229 = vmatpush1.bf16.msra.mxu0 %v874
    %1230 = vmatprep.subr.bf16.mxu0 %v877
    %1231 = vmatpush1.bf16.msra.mxu0 %v876
    %1232 = vmatprep.mubr.bf16.mxu0 %v323
    %1233 = vmatmul.mubr.bf16.gmra.mrb[0].mxu0 %v322
    %v1234 = vpop.f32.mrb[0].mxu0
    %v1235 = vadd.f32 %v1154, %v1234
    %v1236 = vpop.f32.mrb[0].mxu0
    %v1237 = vadd.f32 %v1156, %v1236
    %v1238 = vpop.f32.mrb[0].mxu0
    %v1239 = vadd.f32 %v1158, %v1238
    %v1240 = vpop.f32.mrb[0].mxu0
    %v1241 = vadd.f32 %v1160, %v1240
    %1242 = vmatprep.mubr.bf16.mxu0 %v331
    %1243 = vmatmul.mubr.bf16.gmra.mrb[0].mxu0 %v330
    %v1244 = vpop.f32.mrb[0].mxu0
    %v1245 = vadd.f32 %v1164, %v1244
    %v1246 = vpop.f32.mrb[0].mxu0
    %v1247 = vadd.f32 %v1166, %v1246
    %v1248 = vpop.f32.mrb[0].mxu0
    %v1249 = vadd.f32 %v1168, %v1248
    %v1250 = vpop.f32.mrb[0].mxu0
    %v1251 = vadd.f32 %v1170, %v1250
    %1252 = vmatprep.mubr.bf16.mxu0 %v339
    %1253 = vmatmul.mubr.bf16.gmra.mrb[0].mxu0 %v338
    %v1254 = vpop.f32.mrb[0].mxu0
    %v1255 = vadd.f32 %v1174, %v1254
    %v1256 = vpop.f32.mrb[0].mxu0
    %v1257 = vadd.f32 %v1176, %v1256
    %v1258 = vpop.f32.mrb[0].mxu0
    %v1259 = vadd.f32 %v1178, %v1258
    %v1260 = vpop.f32.mrb[0].mxu0
    %v1261 = vadd.f32 %v1180, %v1260
    %1262 = vmatprep.mubr.bf16.mxu0 %v347
    %1263 = vmatmul.mubr.bf16.gmra.mrb[0].mxu0 %v346
    %v1264 = vpop.f32.mrb[0].mxu0
    %v1265 = vadd.f32 %v1184, %v1264
    %v1266 = vpop.f32.mrb[0].mxu0
    %v1267 = vadd.f32 %v1186, %v1266
    %v1268 = vpop.f32.mrb[0].mxu0
    %v1269 = vadd.f32 %v1188, %v1268
    %v1270 = vpop.f32.mrb[0].mxu0
    %v1271 = vadd.f32 %v1190, %v1270
    %1272 = vmatprep.mubr.bf16.mxu0 %v355
    %1273 = vmatmul.mubr.bf16.gmra.mrb[0].mxu0 %v354
    %v1274 = vpop.f32.mrb[0].mxu0
    %v1275 = vadd.f32 %v1194, %v1274
    %v1276 = vpop.f32.mrb[0].mxu0
    %v1277 = vadd.f32 %v1196, %v1276
    %v1278 = vpop.f32.mrb[0].mxu0
    %v1279 = vpop.f32.mrb[0].mxu0
    %1280 = vdwg.mxu0
    %1281 = vmatprep.subr.bf16.mxu0 %v879
    %1282 = vmatpush1.bf16.msra.mxu0 %v878
    %1283 = vmatprep.subr.bf16.mxu0 %v881
    %1284 = vmatpush1.bf16.msra.mxu0 %v880
    %1285 = vmatprep.subr.bf16.mxu0 %v883
    %1286 = vmatpush1.bf16.msra.mxu0 %v882
    %1287 = vmatprep.subr.bf16.mxu0 %v885
    %1288 = vmatpush1.bf16.msra.mxu0 %v884
    %1289 = vmatprep.subr.bf16.mxu0 %v887
    %1290 = vmatpush1.bf16.msra.mxu0 %v886
    %1291 = vmatprep.subr.bf16.mxu0 %v889
    %1292 = vmatpush1.bf16.msra.mxu0 %v888
    %1293 = vmatprep.subr.bf16.mxu0 %v891
    %1294 = vmatpush1.bf16.msra.mxu0 %v890
    %1295 = vmatprep.subr.bf16.mxu0 %v893
    %1296 = vmatpush1.bf16.msra.mxu0 %v892
    %1297 = vmatprep.subr.bf16.mxu0 %v895
    %1298 = vmatpush1.bf16.msra.mxu0 %v894
    %1299 = vmatprep.subr.bf16.mxu0 %v897
    %1300 = vmatpush1.bf16.msra.mxu0 %v896
    %1301 = vmatprep.subr.bf16.mxu0 %v899
    %1302 = vmatpush1.bf16.msra.mxu0 %v898
    %1303 = vmatprep.subr.bf16.mxu0 %v901
    %1304 = vmatpush1.bf16.msra.mxu0 %v900
    %1305 = vmatprep.subr.bf16.mxu0 %v903
    %1306 = vmatpush1.bf16.msra.mxu0 %v902
    %1307 = vmatprep.subr.bf16.mxu0 %v905
    %1308 = vmatpush1.bf16.msra.mxu0 %v904
    %1309 = vmatprep.subr.bf16.mxu0 %v907
    %1310 = vmatpush1.bf16.msra.mxu0 %v906
    %1311 = vmatprep.subr.bf16.mxu0 %v909
    %1312 = vmatpush1.bf16.msra.mxu0 %v908
    %1313 = vmatprep.mubr.bf16.mxu0 %v325
    %1314 = vmatmul.mubr.bf16.gmra.mrb[0].mxu0 %v324
    %v1315 = vpop.f32.mrb[0].mxu0
    %v1316 = vadd.f32 %v1235, %v1315
    %v1317 = vpop.f32.mrb[0].mxu0
    %v1318 = vadd.f32 %v1237, %v1317
    %v1319 = vpop.f32.mrb[0].mxu0
    %v1320 = vadd.f32 %v1239, %v1319
    %v1321 = vpop.f32.mrb[0].mxu0
    %v1322 = vadd.f32 %v1241, %v1321
    %1323 = vmatprep.mubr.bf16.mxu0 %v333
    %1324 = vmatmul.mubr.bf16.gmra.mrb[0].mxu0 %v332
    %v1325 = vpop.f32.mrb[0].mxu0
    %v1326 = vadd.f32 %v1245, %v1325
    %v1327 = vpop.f32.mrb[0].mxu0
    %v1328 = vadd.f32 %v1247, %v1327
    %v1329 = vpop.f32.mrb[0].mxu0
    %v1330 = vadd.f32 %v1249, %v1329
    %v1331 = vpop.f32.mrb[0].mxu0
    %v1332 = vadd.f32 %v1251, %v1331
    %1333 = vmatprep.mubr.bf16.mxu0 %v341
    %1334 = vmatmul.mubr.bf16.gmra.mrb[0].mxu0 %v340
    %v1335 = vpop.f32.mrb[0].mxu0
    %v1336 = vadd.f32 %v1255, %v1335
    %v1337 = vpop.f32.mrb[0].mxu0
    %v1338 = vadd.f32 %v1257, %v1337
    %v1339 = vpop.f32.mrb[0].mxu0
    %v1340 = vadd.f32 %v1259, %v1339
    %v1341 = vpop.f32.mrb[0].mxu0
    %v1342 = vadd.f32 %v1261, %v1341
    %1343 = vmatprep.mubr.bf16.mxu0 %v349
    %1344 = vmatmul.mubr.bf16.gmra.mrb[0].mxu0 %v348
    %v1345 = vpop.f32.mrb[0].mxu0
    %v1346 = vadd.f32 %v1265, %v1345
    %v1347 = vpop.f32.mrb[0].mxu0
    %v1348 = vadd.f32 %v1267, %v1347
    %v1349 = vpop.f32.mrb[0].mxu0
    %v1350 = vadd.f32 %v1269, %v1349
    %v1351 = vpop.f32.mrb[0].mxu0
    %v1352 = vadd.f32 %v1271, %v1351
    %1353 = vmatprep.mubr.bf16.mxu0 %v357
    %1354 = vmatmul.mubr.bf16.gmra.mrb[0].mxu0 %v356
    %v1355 = vpop.f32.mrb[0].mxu0
    %v1356 = vadd.f32 %v1275, %v1355
    %v1357 = vpop.f32.mrb[0].mxu0
    %v1358 = vadd.f32 %v1277, %v1357
    %v1359 = vpop.f32.mrb[0].mxu0
    %v1360 = vpop.f32.mrb[0].mxu0
    %1361 = vdwg.mxu0
    %v1362 = vmax.f32 %v1316, 0.0
    %v1363 = vmax.f32 %v1318, 0.0
    %v1364 = vmax.f32 %v1320, 0.0
    %v1365 = vmax.f32 %v1322, 0.0
    %v1366 = vmax.f32 %v1326, 0.0
    %v1367 = vmax.f32 %v1328, 0.0
    %v1368 = vmax.f32 %v1330, 0.0
    %v1369 = vmax.f32 %v1332, 0.0
    %v1370 = vmax.f32 %v1336, 0.0
    %v1371 = vmax.f32 %v1338, 0.0
    %v1372 = vmax.f32 %v1340, 0.0
    %v1373 = vmax.f32 %v1342, 0.0
    %v1374 = vmax.f32 %v1346, 0.0
    %v1375 = vmax.f32 %v1348, 0.0
    %v1376 = vmax.f32 %v1350, 0.0
    %v1377 = vmax.f32 %v1352, 0.0
    %v1378 = vmax.f32 %v1356, 0.0
    %v1379 = vmax.f32 %v1358, 0.0
    %v1380 = vpack.c.bf16 %v1364, %v1362
    %v1381 = vpack.c.bf16 %v1365, %v1363
    %v1382 = vpack.c.bf16 %v1368, %v1366
    %v1383 = vpack.c.bf16 %v1369, %v1367
    %v1384 = vpack.c.bf16 %v1372, %v1370
    %v1385 = vpack.c.bf16 %v1373, %v1371
    %v1386 = vpack.c.bf16 %v1376, %v1374
    %v1387 = vpack.c.bf16 %v1377, %v1375
    %v1388 = vpack.c.bf16 %v1378, %v1378
    %v1389 = vpack.c.bf16 %v1379, %v1379
    %v1390 = vld [vmem:[%s3] sm:$0xf]
    %v1391 = vld [vmem:[%s3 + $0x4] sm:$0xf]
    %v1392 = vld [vmem:[%s3 + $0x8] sm:$0xf]
    %v1393 = vld [vmem:[%s3 + $0xc] sm:$0xf]
    %v1394 = vld [vmem:[%s3 + $0x10] sm:$0xf]
    %v1395 = vld [vmem:[%s3 + $0x14] sm:$0xf]
    %v1396 = vld [vmem:[%s3 + $0x18] sm:$0xf]
    %v1397 = vld [vmem:[%s3 + $0x1c] sm:$0xf]
    %v1398 = vld [vmem:[%s3 + $0x20] sm:$0xf]
    %v1399 = vld [vmem:[%s3 + $0x24] sm:$0xf]
    %v1400 = vld [vmem:[%s3 + $0x28] sm:$0xf]
    %v1401 = vld [vmem:[%s3 + $0x2c] sm:$0xf]
    %v1402 = vld [vmem:[%s3 + $0x30] sm:$0xf]
    %v1403 = vld [vmem:[%s3 + $0x34] sm:$0xf]
    %v1404 = vld [vmem:[%s3 + $0x38] sm:$0xf]
    %v1405 = vld [vmem:[%s3 + $0x3c] sm:$0xf]
    %v1406 = vld [vmem:[%s3 + $0x40] sm:$0xf]
    %v1407 = vld [vmem:[%s3 + $0x44] sm:$0xf]
    %v1408 = vld [vmem:[%s3 + $0x48] sm:$0xf]
    %v1409 = vld [vmem:[%s3 + $0x4c] sm:$0xf]
    %v1410 = vld [vmem:[%s3 + $0x50] sm:$0xf]
    %v1411 = vld [vmem:[%s3 + $0x54] sm:$0xf]
    %v1412 = vld [vmem:[%s3 + $0x58] sm:$0xf]
    %v1413 = vld [vmem:[%s3 + $0x5c] sm:$0xf]
    %v1414 = vld [vmem:[%s3 + $0x60] sm:$0xf]
    %v1415 = vld [vmem:[%s3 + $0x64] sm:$0xf]
    %v1416 = vld [vmem:[%s3 + $0x68] sm:$0xf]
    %v1417 = vld [vmem:[%s3 + $0x6c] sm:$0xf]
    %v1418 = vld [vmem:[%s3 + $0x70] sm:$0xf]
    %v1419 = vld [vmem:[%s3 + $0x74] sm:$0xf]
    %v1420 = vld [vmem:[%s3 + $0x78] sm:$0xf]
    %v1421 = vld [vmem:[%s3 + $0x7c] sm:$0xf]
    %v1422 = vld [vmem:[%s4] sm:$0x1]
    %v1424 = vlaneseq
    %v1425 = vshrl.u32 %v1424, 7
    %v1426 = vsub.s32 0, %v1425
    %v1427 = vrot.slane %v1422, %v1426
    %v1461 = vunpack.c.l.b16 %v1390
    %v1462 = vunpack.c.l.b16 %v1391
    %v1463 = vunpack.c.l.b16 %v1392
    %v1464 = vunpack.c.l.b16 %v1393
    %v1465 = vunpack.c.l.b16 %v1394
    %v1466 = vunpack.c.l.b16 %v1395
    %v1467 = vunpack.c.l.b16 %v1396
    %v1468 = vunpack.c.l.b16 %v1397
    %v1469 = vunpack.c.l.b16 %v1398
    %v1470 = vunpack.c.l.b16 %v1399
    %v1471 = vunpack.c.l.b16 %v1400
    %v1472 = vunpack.c.l.b16 %v1401
    %v1473 = vunpack.c.l.b16 %v1402
    %v1474 = vunpack.c.l.b16 %v1403
    %v1475 = vunpack.c.l.b16 %v1404
    %v1476 = vunpack.c.l.b16 %v1405
    %v1477 = vunpack.c.l.b16 %v1406
    %v1478 = vunpack.c.l.b16 %v1407
    %v1479 = vunpack.c.l.b16 %v1408
    %v1480 = vunpack.c.l.b16 %v1409
    %v1481 = vunpack.c.l.b16 %v1410
    %v1482 = vunpack.c.l.b16 %v1411
    %v1483 = vunpack.c.l.b16 %v1412
    %v1484 = vunpack.c.l.b16 %v1413
    %v1485 = vunpack.c.l.b16 %v1414
    %v1486 = vunpack.c.l.b16 %v1415
    %v1487 = vunpack.c.l.b16 %v1416
    %v1488 = vunpack.c.l.b16 %v1417
    %v1489 = vunpack.c.l.b16 %v1418
    %v1490 = vunpack.c.l.b16 %v1419
    %v1491 = vunpack.c.l.b16 %v1420
    %v1492 = vunpack.c.l.b16 %v1421
    %v1493 = vpack.c.b16 %v1462, %v1461
    %v1494 = vpack.c.b16 %v1464, %v1463
    %v1495 = vpack.c.b16 %v1466, %v1465
    %v1496 = vpack.c.b16 %v1468, %v1467
    %v1497 = vpack.c.b16 %v1470, %v1469
    %v1498 = vpack.c.b16 %v1472, %v1471
    %v1499 = vpack.c.b16 %v1474, %v1473
    %v1500 = vpack.c.b16 %v1476, %v1475
    %v1501 = vpack.c.b16 %v1478, %v1477
    %v1502 = vpack.c.b16 %v1480, %v1479
    %v1503 = vpack.c.b16 %v1482, %v1481
    %v1504 = vpack.c.b16 %v1484, %v1483
    %v1505 = vpack.c.b16 %v1486, %v1485
    %v1506 = vpack.c.b16 %v1488, %v1487
    %v1507 = vpack.c.b16 %v1490, %v1489
    %v1508 = vpack.c.b16 %v1492, %v1491
    %1525 = vmatprep.subr.bf16.mxu0 0
    %1526 = vmatpush1.bf16.msra.mxu0 %v1493
    %1527 = vmatprep.subr.bf16.mxu0 0
    %1528 = vmatpush1.bf16.msra.mxu0 %v1494
    %1529 = vmatprep.subr.bf16.mxu0 0
    %1530 = vmatpush1.bf16.msra.mxu0 %v1495
    %1531 = vmatprep.subr.bf16.mxu0 0
    %1532 = vmatpush1.bf16.msra.mxu0 %v1496
    %1533 = vmatprep.subr.bf16.mxu0 0
    %1534 = vmatpush1.bf16.msra.mxu0 %v1497
    %1535 = vmatprep.subr.bf16.mxu0 0
    %1536 = vmatpush1.bf16.msra.mxu0 %v1498
    %1537 = vmatprep.subr.bf16.mxu0 0
    %1538 = vmatpush1.bf16.msra.mxu0 %v1499
    %1539 = vmatprep.subr.bf16.mxu0 0
    %1540 = vmatpush1.bf16.msra.mxu0 %v1500
    %1541 = vmatprep.subr.bf16.mxu0 0
    %1542 = vmatpush1.bf16.msra.mxu0 %v1501
    %1543 = vmatprep.subr.bf16.mxu0 0
    %1544 = vmatpush1.bf16.msra.mxu0 %v1502
    %1545 = vmatprep.subr.bf16.mxu0 0
    %1546 = vmatpush1.bf16.msra.mxu0 %v1503
    %1547 = vmatprep.subr.bf16.mxu0 0
    %1548 = vmatpush1.bf16.msra.mxu0 %v1504
    %1549 = vmatprep.subr.bf16.mxu0 0
    %1550 = vmatpush1.bf16.msra.mxu0 %v1505
    %1551 = vmatprep.subr.bf16.mxu0 0
    %1552 = vmatpush1.bf16.msra.mxu0 %v1506
    %1553 = vmatprep.subr.bf16.mxu0 0
    %1554 = vmatpush1.bf16.msra.mxu0 %v1507
    %1555 = vmatprep.subr.bf16.mxu0 0
    %1556 = vmatpush1.bf16.msra.mxu0 %v1508
    %1557 = vmatprep.mubr.bf16.mxu0 %v1381
    %1558 = vmatmul.mubr.bf16.gmra.mrb[0].mxu0 %v1380
    %v1559 = vpop.f32.mrb[0].mxu0
    %v1560 = vadd.f32 %v1427, %v1559
    %v1561 = vpop.f32.mrb[0].mxu0
    %v1562 = vpop.f32.mrb[0].mxu0
    %v1563 = vadd.f32 %v1427, %v1562
    %v1564 = vpop.f32.mrb[0].mxu0
    %1565 = vmatprep.mubr.bf16.mxu0 %v1383
    %1566 = vmatmul.mubr.bf16.gmra.mrb[0].mxu0 %v1382
    %v1567 = vpop.f32.mrb[0].mxu0
    %v1568 = vadd.f32 %v1427, %v1567
    %v1569 = vpop.f32.mrb[0].mxu0
    %v1570 = vpop.f32.mrb[0].mxu0
    %v1571 = vadd.f32 %v1427, %v1570
    %v1572 = vpop.f32.mrb[0].mxu0
    %1573 = vmatprep.mubr.bf16.mxu0 %v1385
    %1574 = vmatmul.mubr.bf16.gmra.mrb[0].mxu0 %v1384
    %v1575 = vpop.f32.mrb[0].mxu0
    %v1576 = vadd.f32 %v1427, %v1575
    %v1577 = vpop.f32.mrb[0].mxu0
    %v1578 = vpop.f32.mrb[0].mxu0
    %v1579 = vadd.f32 %v1427, %v1578
    %v1580 = vpop.f32.mrb[0].mxu0
    %1581 = vmatprep.mubr.bf16.mxu0 %v1387
    %1582 = vmatmul.mubr.bf16.gmra.mrb[0].mxu0 %v1386
    %v1583 = vpop.f32.mrb[0].mxu0
    %v1584 = vadd.f32 %v1427, %v1583
    %v1585 = vpop.f32.mrb[0].mxu0
    %v1586 = vpop.f32.mrb[0].mxu0
    %v1587 = vadd.f32 %v1427, %v1586
    %v1588 = vpop.f32.mrb[0].mxu0
    %1589 = vmatprep.mubr.bf16.mxu0 %v1389
    %1590 = vmatmul.mubr.bf16.gmra.mrb[0].mxu0 %v1388
    %v1591 = vpop.f32.mrb[0].mxu0
    %v1592 = vadd.f32 %v1427, %v1591
    %v1593 = vpop.f32.mrb[0].mxu0
    %v1594 = vpop.f32.mrb[0].mxu0
    %v1595 = vpop.f32.mrb[0].mxu0
    %1596 = vdwg.mxu0
    %v1597 = vmax.f32 %v1560, 0.0
    %v1598 = vmax.f32 %v1563, 0.0
    %v1599 = vmax.f32 %v1568, 0.0
    %v1600 = vmax.f32 %v1571, 0.0
    %v1601 = vmax.f32 %v1576, 0.0
    %v1602 = vmax.f32 %v1579, 0.0
    %v1603 = vmax.f32 %v1584, 0.0
    %v1604 = vmax.f32 %v1587, 0.0
    %v1605 = vmax.f32 %v1592, 0.0
    %vm1606 = vcmask 254976
    %1607 = vst.msk [vmem:[#allocation2] sm:$0x3] %vm1606, %v1597
    %v1610 = vunpack.c.l.s4 1983009808
    %v1611 = vunpack.c.0.s8 %v1610
    %v1612 = vlaneseq
    %v1613 = vshrl.u32 %v1612, 7
    %v1614 = vsub.s32 %v1611, %v1613
    %v1615 = vrot.slane %v1597, %v1614
    %v1616 = vcombine.high %v1615, %v1615
    %1617 = vrot.lane.b32.xlu0 %v1616, 32
    %v1618 = vpop.permute.xlu0 %1617
    %vm1620 = vcmask 517376
    %1621 = vst.msk [vmem:[#allocation2] sm:$0x3] %vm1620, %v1618
    %v1622 = vcombine.high %v1597, %v1597
    %v1624 = vunpack.c.l.s4 1983009808
    %v1625 = vunpack.c.0.s8 %v1624
    %v1626 = vlaneseq
    %v1627 = vshrl.u32 %v1626, 7
    %v1628 = vsub.s32 %v1625, %v1627
    %v1629 = vrot.slane %v1622, %v1628
    %1630 = vrot.lane.b32.xlu0 %v1629, 64
    %v1631 = vpop.permute.xlu0 %1630
    %vm1633 = vcmask 779776
    %1634 = vst.msk [vmem:[#allocation2] sm:$0x3] %vm1633, %v1631
    %v1635 = vcombine.high %v1629, %v1629
    %1636 = vrot.lane.b32.xlu0 %v1635, 96
    %v1637 = vpop.permute.xlu0 %1636
    %vm1639 = vcmask 1042176
    %1640 = vst.msk [vmem:[#allocation2] sm:$0x3] %vm1639, %v1637
    %1641 = vst.msk [vmem:[#allocation2 + $0x2] sm:$0x3] %vm1606, %v1598
    %v1644 = vunpack.c.l.s4 1983009808
    %v1645 = vunpack.c.0.s8 %v1644
    %v1646 = vlaneseq
    %v1647 = vshrl.u32 %v1646, 7
    %v1648 = vsub.s32 %v1645, %v1647
    %v1649 = vrot.slane %v1598, %v1648
    %v1650 = vcombine.high %v1649, %v1649
    %1651 = vrot.lane.b32.xlu0 %v1650, 32
    %v1652 = vpop.permute.xlu0 %1651
    %1654 = vst.msk [vmem:[#allocation2 + $0x2] sm:$0x3] %vm1620, %v1652
    %v1655 = vcombine.high %v1598, %v1598
    %v1657 = vunpack.c.l.s4 1983009808
    %v1658 = vunpack.c.0.s8 %v1657
    %v1659 = vlaneseq
    %v1660 = vshrl.u32 %v1659, 7
    %v1661 = vsub.s32 %v1658, %v1660
    %v1662 = vrot.slane %v1655, %v1661
    %1663 = vrot.lane.b32.xlu0 %v1662, 64
    %v1664 = vpop.permute.xlu0 %1663
    %1666 = vst.msk [vmem:[#allocation2 + $0x2] sm:$0x3] %vm1633, %v1664
    %v1667 = vcombine.high %v1662, %v1662
    %1668 = vrot.lane.b32.xlu0 %v1667, 96
    %v1669 = vpop.permute.xlu0 %1668
    %1671 = vst.msk [vmem:[#allocation2 + $0x2] sm:$0x3] %vm1639, %v1669
    %1672 = vst.msk [vmem:[#allocation2 + $0x4] sm:$0x3] %vm1606, %v1599
    %v1675 = vunpack.c.l.s4 1983009808
    %v1676 = vunpack.c.0.s8 %v1675
    %v1677 = vlaneseq
    %v1678 = vshrl.u32 %v1677, 7
    %v1679 = vsub.s32 %v1676, %v1678
    %v1680 = vrot.slane %v1599, %v1679
    %v1681 = vcombine.high %v1680, %v1680
    %1682 = vrot.lane.b32.xlu0 %v1681, 32
    %v1683 = vpop.permute.xlu0 %1682
    %1685 = vst.msk [vmem:[#allocation2 + $0x4] sm:$0x3] %vm1620, %v1683
    %v1686 = vcombine.high %v1599, %v1599
    %v1688 = vunpack.c.l.s4 1983009808
    %v1689 = vunpack.c.0.s8 %v1688
    %v1690 = vlaneseq
    %v1691 = vshrl.u32 %v1690, 7
    %v1692 = vsub.s32 %v1689, %v1691
    %v1693 = vrot.slane %v1686, %v1692
    %1694 = vrot.lane.b32.xlu0 %v1693, 64
    %v1695 = vpop.permute.xlu0 %1694
    %1697 = vst.msk [vmem:[#allocation2 + $0x4] sm:$0x3] %vm1633, %v1695
    %v1698 = vcombine.high %v1693, %v1693
    %1699 = vrot.lane.b32.xlu0 %v1698, 96
    %v1700 = vpop.permute.xlu0 %1699
    %1702 = vst.msk [vmem:[#allocation2 + $0x4] sm:$0x3] %vm1639, %v1700
    %1703 = vst.msk [vmem:[#allocation2 + $0x6] sm:$0x3] %vm1606, %v1600
    %v1706 = vunpack.c.l.s4 1983009808
    %v1707 = vunpack.c.0.s8 %v1706
    %v1708 = vlaneseq
    %v1709 = vshrl.u32 %v1708, 7
    %v1710 = vsub.s32 %v1707, %v1709
    %v1711 = vrot.slane %v1600, %v1710
    %v1712 = vcombine.high %v1711, %v1711
    %1713 = vrot.lane.b32.xlu0 %v1712, 32
    %v1714 = vpop.permute.xlu0 %1713
    %1716 = vst.msk [vmem:[#allocation2 + $0x6] sm:$0x3] %vm1620, %v1714
    %v1717 = vcombine.high %v1600, %v1600
    %v1719 = vunpack.c.l.s4 1983009808
    %v1720 = vunpack.c.0.s8 %v1719
    %v1721 = vlaneseq
    %v1722 = vshrl.u32 %v1721, 7
    %v1723 = vsub.s32 %v1720, %v1722
    %v1724 = vrot.slane %v1717, %v1723
    %1725 = vrot.lane.b32.xlu0 %v1724, 64
    %v1726 = vpop.permute.xlu0 %1725
    %1728 = vst.msk [vmem:[#allocation2 + $0x6] sm:$0x3] %vm1633, %v1726
    %v1729 = vcombine.high %v1724, %v1724
    %1730 = vrot.lane.b32.xlu0 %v1729, 96
    %v1731 = vpop.permute.xlu0 %1730
    %1733 = vst.msk [vmem:[#allocation2 + $0x6] sm:$0x3] %vm1639, %v1731
    %1734 = vst.msk [vmem:[#allocation2 + $0x8] sm:$0x3] %vm1606, %v1601
    %v1737 = vunpack.c.l.s4 1983009808
    %v1738 = vunpack.c.0.s8 %v1737
    %v1739 = vlaneseq
    %v1740 = vshrl.u32 %v1739, 7
    %v1741 = vsub.s32 %v1738, %v1740
    %v1742 = vrot.slane %v1601, %v1741
    %v1743 = vcombine.high %v1742, %v1742
    %1744 = vrot.lane.b32.xlu0 %v1743, 32
    %v1745 = vpop.permute.xlu0 %1744
    %1747 = vst.msk [vmem:[#allocation2 + $0x8] sm:$0x3] %vm1620, %v1745
    %v1748 = vcombine.high %v1601, %v1601
    %v1750 = vunpack.c.l.s4 1983009808
    %v1751 = vunpack.c.0.s8 %v1750
    %v1752 = vlaneseq
    %v1753 = vshrl.u32 %v1752, 7
    %v1754 = vsub.s32 %v1751, %v1753
    %v1755 = vrot.slane %v1748, %v1754
    %1756 = vrot.lane.b32.xlu0 %v1755, 64
    %v1757 = vpop.permute.xlu0 %1756
    %1759 = vst.msk [vmem:[#allocation2 + $0x8] sm:$0x3] %vm1633, %v1757
    %v1760 = vcombine.high %v1755, %v1755
    %1761 = vrot.lane.b32.xlu0 %v1760, 96
    %v1762 = vpop.permute.xlu0 %1761
    %1764 = vst.msk [vmem:[#allocation2 + $0x8] sm:$0x3] %vm1639, %v1762
    %1765 = vst.msk [vmem:[#allocation2 + $0xa] sm:$0x3] %vm1606, %v1602
    %v1768 = vunpack.c.l.s4 1983009808
    %v1769 = vunpack.c.0.s8 %v1768
    %v1770 = vlaneseq
    %v1771 = vshrl.u32 %v1770, 7
    %v1772 = vsub.s32 %v1769, %v1771
    %v1773 = vrot.slane %v1602, %v1772
    %v1774 = vcombine.high %v1773, %v1773
    %1775 = vrot.lane.b32.xlu0 %v1774, 32
    %v1776 = vpop.permute.xlu0 %1775
    %1778 = vst.msk [vmem:[#allocation2 + $0xa] sm:$0x3] %vm1620, %v1776
    %v1779 = vcombine.high %v1602, %v1602
    %v1781 = vunpack.c.l.s4 1983009808
    %v1782 = vunpack.c.0.s8 %v1781
    %v1783 = vlaneseq
    %v1784 = vshrl.u32 %v1783, 7
    %v1785 = vsub.s32 %v1782, %v1784
    %v1786 = vrot.slane %v1779, %v1785
    %1787 = vrot.lane.b32.xlu0 %v1786, 64
    %v1788 = vpop.permute.xlu0 %1787
    %1790 = vst.msk [vmem:[#allocation2 + $0xa] sm:$0x3] %vm1633, %v1788
    %v1791 = vcombine.high %v1786, %v1786
    %1792 = vrot.lane.b32.xlu0 %v1791, 96
    %v1793 = vpop.permute.xlu0 %1792
    %1795 = vst.msk [vmem:[#allocation2 + $0xa] sm:$0x3] %vm1639, %v1793
    %1796 = vst.msk [vmem:[#allocation2 + $0xc] sm:$0x3] %vm1606, %v1603
    %v1799 = vunpack.c.l.s4 1983009808
    %v1800 = vunpack.c.0.s8 %v1799
    %v1801 = vlaneseq
    %v1802 = vshrl.u32 %v1801, 7
    %v1803 = vsub.s32 %v1800, %v1802
    %v1804 = vrot.slane %v1603, %v1803
    %v1805 = vcombine.high %v1804, %v1804
    %1806 = vrot.lane.b32.xlu0 %v1805, 32
    %v1807 = vpop.permute.xlu0 %1806
    %1809 = vst.msk [vmem:[#allocation2 + $0xc] sm:$0x3] %vm1620, %v1807
    %v1810 = vcombine.high %v1603, %v1603
    %v1812 = vunpack.c.l.s4 1983009808
    %v1813 = vunpack.c.0.s8 %v1812
    %v1814 = vlaneseq
    %v1815 = vshrl.u32 %v1814, 7
    %v1816 = vsub.s32 %v1813, %v1815
    %v1817 = vrot.slane %v1810, %v1816
    %1818 = vrot.lane.b32.xlu0 %v1817, 64
    %v1819 = vpop.permute.xlu0 %1818
    %1821 = vst.msk [vmem:[#allocation2 + $0xc] sm:$0x3] %vm1633, %v1819
    %v1822 = vcombine.high %v1817, %v1817
    %1823 = vrot.lane.b32.xlu0 %v1822, 96
    %v1824 = vpop.permute.xlu0 %1823
    %1826 = vst.msk [vmem:[#allocation2 + $0xc] sm:$0x3] %vm1639, %v1824
    %1827 = vst.msk [vmem:[#allocation2 + $0xe] sm:$0x3] %vm1606, %v1604
    %v1830 = vunpack.c.l.s4 1983009808
    %v1831 = vunpack.c.0.s8 %v1830
    %v1832 = vlaneseq
    %v1833 = vshrl.u32 %v1832, 7
    %v1834 = vsub.s32 %v1831, %v1833
    %v1835 = vrot.slane %v1604, %v1834
    %v1836 = vcombine.high %v1835, %v1835
    %1837 = vrot.lane.b32.xlu0 %v1836, 32
    %v1838 = vpop.permute.xlu0 %1837
    %1840 = vst.msk [vmem:[#allocation2 + $0xe] sm:$0x3] %vm1620, %v1838
    %v1841 = vcombine.high %v1604, %v1604
    %v1843 = vunpack.c.l.s4 1983009808
    %v1844 = vunpack.c.0.s8 %v1843
    %v1845 = vlaneseq
    %v1846 = vshrl.u32 %v1845, 7
    %v1847 = vsub.s32 %v1844, %v1846
    %v1848 = vrot.slane %v1841, %v1847
    %1849 = vrot.lane.b32.xlu0 %v1848, 64
    %v1850 = vpop.permute.xlu0 %1849
    %1852 = vst.msk [vmem:[#allocation2 + $0xe] sm:$0x3] %vm1633, %v1850
    %v1853 = vcombine.high %v1848, %v1848
    %1854 = vrot.lane.b32.xlu0 %v1853, 96
    %v1855 = vpop.permute.xlu0 %1854
    %1857 = vst.msk [vmem:[#allocation2 + $0xe] sm:$0x3] %vm1639, %v1855
    %1858 = vst.msk [vmem:[#allocation2 + $0x10] sm:$0x3] %vm1606, %v1605
    %v1861 = vunpack.c.l.s4 1983009808
    %v1862 = vunpack.c.0.s8 %v1861
    %v1863 = vlaneseq
    %v1864 = vshrl.u32 %v1863, 7
    %v1865 = vsub.s32 %v1862, %v1864
    %v1866 = vrot.slane %v1605, %v1865
    %v1867 = vcombine.high %v1866, %v1866
    %1868 = vrot.lane.b32.xlu0 %v1867, 32
    %v1869 = vpop.permute.xlu0 %1868
    %1871 = vst.msk [vmem:[#allocation2 + $0x10] sm:$0x3] %vm1620, %v1869
    %v1872 = vcombine.high %v1605, %v1605
    %v1874 = vunpack.c.l.s4 1983009808
    %v1875 = vunpack.c.0.s8 %v1874
    %v1876 = vlaneseq
    %v1877 = vshrl.u32 %v1876, 7
    %v1878 = vsub.s32 %v1875, %v1877
    %v1879 = vrot.slane %v1872, %v1878
    %1880 = vrot.lane.b32.xlu0 %v1879, 64
    %v1881 = vpop.permute.xlu0 %1880
    %1883 = vst.msk [vmem:[#allocation2 + $0x10] sm:$0x3] %vm1633, %v1881
    %v1884 = vcombine.high %v1879, %v1879
    %1885 = vrot.lane.b32.xlu0 %v1884, 96
    %v1886 = vpop.permute.xlu0 %1885
    %1888 = vst.msk [vmem:[#allocation2 + $0x10] sm:$0x3] %vm1639, %v1886
    %v1889 = vld [vmem:[#allocation2] sm:$0xff]
    %v1890 = vld [vmem:[#allocation2 + $0x8] sm:$0xff]
    %v1891 = vld [vmem:[#allocation2 + $0x10] sm:$0x3]
    %v1895 = vcombine.high %v1889, %v1889
    %v1897 = vunpack.c.l.s4 1983009808
    %v1898 = vunpack.c.0.s8 %v1897
    %v1899 = vlaneseq
    %v1900 = vshrl.u32 %v1899, 7
    %v1901 = vsub.s32 %v1898, %v1900
    %v1902 = vrot.slane %v1889, %v1901
    %v1904 = vunpack.c.l.s4 1983009808
    %v1905 = vunpack.c.0.s8 %v1904
    %v1906 = vlaneseq
    %v1907 = vshrl.u32 %v1906, 7
    %v1908 = vsub.s32 %v1905, %v1907
    %v1909 = vrot.slane %v1895, %v1908
    %v1910 = vcombine.high %v1902, %v1902
    %v1911 = vcombine.high %v1909, %v1909
    %v1912 = vcombine.high %v1890, %v1890
    %v1914 = vunpack.c.l.s4 1983009808
    %v1915 = vunpack.c.0.s8 %v1914
    %v1916 = vlaneseq
    %v1917 = vshrl.u32 %v1916, 7
    %v1918 = vsub.s32 %v1915, %v1917
    %v1919 = vrot.slane %v1890, %v1918
    %v1921 = vunpack.c.l.s4 1983009808
    %v1922 = vunpack.c.0.s8 %v1921
    %v1923 = vlaneseq
    %v1924 = vshrl.u32 %v1923, 7
    %v1925 = vsub.s32 %v1922, %v1924
    %v1926 = vrot.slane %v1912, %v1925
    %v1927 = vcombine.high %v1919, %v1919
    %v1928 = vcombine.high %v1926, %v1926
    %v1930 = vunpack.c.l.s4 1983009808
    %v1931 = vunpack.c.0.s8 %v1930
    %v1932 = vlaneseq
    %v1933 = vshrl.u32 %v1932, 7
    %v1934 = vsub.s32 %v1931, %v1933
    %v1935 = vrot.slane %v1891, %v1934
    %v1945 = vpack.c.bf16 %v1902, %v1902
    %v1946 = vpack.c.bf16 %v1910, %v1910
    %v1947 = vpack.c.bf16 %v1909, %v1909
    %v1948 = vpack.c.bf16 %v1911, %v1911
    %v1949 = vpack.c.bf16 %v1919, %v1919
    %v1950 = vpack.c.bf16 %v1927, %v1927
    %v1951 = vpack.c.bf16 %v1926, %v1926
    %v1952 = vpack.c.bf16 %v1928, %v1928
    %v1953 = vpack.c.bf16 %v1935, %v1935
    %v1954 = vld [vmem:[%s5] sm:$0xff]
    %v1955 = vld [vmem:[%s5 + $0x8] sm:$0xff]
    %v1956 = vld [vmem:[%s5 + $0x10] sm:$0xff]
    %v1957 = vld [vmem:[%s5 + $0x18] sm:$0xff]
    %v1958 = vld [vmem:[%s5 + $0x20] sm:$0xff]
    %v1959 = vld [vmem:[%s5 + $0x28] sm:$0xff]
    %v1960 = vld [vmem:[%s5 + $0x30] sm:$0xff]
    %v1961 = vld [vmem:[%s5 + $0x38] sm:$0xff]
    %v1962 = vld [vmem:[%s5 + $0x40] sm:$0xff]
    %v1963 = vld [vmem:[%s5 + $0x48] sm:$0xff]
    %v1964 = vld [vmem:[%s5 + $0x50] sm:$0xff]
    %v1965 = vld [vmem:[%s5 + $0x58] sm:$0xff]
    %v1966 = vld [vmem:[%s5 + $0x60] sm:$0xff]
    %v1967 = vld [vmem:[%s5 + $0x68] sm:$0xff]
    %v1968 = vld [vmem:[%s5 + $0x70] sm:$0xff]
    %v1969 = vld [vmem:[%s5 + $0x78] sm:$0xff]
    %v1970 = vld [vmem:[%s5 + $0x80] sm:$0xff]
    %v1971 = vld [vmem:[%s5 + $0x88] sm:$0xff]
    %v1972 = vld [vmem:[%s5 + $0x90] sm:$0xff]
    %v1973 = vld [vmem:[%s5 + $0x98] sm:$0xff]
    %v1974 = vld [vmem:[%s5 + $0xa0] sm:$0xff]
    %v1975 = vld [vmem:[%s5 + $0xa8] sm:$0xff]
    %v1976 = vld [vmem:[%s5 + $0xb0] sm:$0xff]
    %v1977 = vld [vmem:[%s5 + $0xb8] sm:$0xff]
    %v1978 = vld [vmem:[%s5 + $0xc0] sm:$0xff]
    %v1979 = vld [vmem:[%s5 + $0xc8] sm:$0xff]
    %v1980 = vld [vmem:[%s5 + $0xd0] sm:$0xff]
    %v1981 = vld [vmem:[%s5 + $0xd8] sm:$0xff]
    %v1982 = vld [vmem:[%s5 + $0xe0] sm:$0xff]
    %v1983 = vld [vmem:[%s5 + $0xe8] sm:$0xff]
    %v1984 = vld [vmem:[%s5 + $0xf0] sm:$0xff]
    %v1985 = vld [vmem:[%s5 + $0xf8] sm:$0xff]
    %v1986 = vld [vmem:[%s5 + $0x100] sm:$0xff]
    %v1987 = vld [vmem:[%s5 + $0x108] sm:$0xff]
    %v1988 = vld [vmem:[%s5 + $0x110] sm:$0xff]
    %v1989 = vld [vmem:[%s5 + $0x118] sm:$0xff]
    %v1990 = vld [vmem:[%s5 + $0x120] sm:$0xff]
    %v1991 = vld [vmem:[%s5 + $0x128] sm:$0xff]
    %v1992 = vld [vmem:[%s5 + $0x130] sm:$0xff]
    %v1993 = vld [vmem:[%s5 + $0x138] sm:$0xff]
    %v1994 = vld [vmem:[%s5 + $0x140] sm:$0xff]
    %v1995 = vld [vmem:[%s5 + $0x148] sm:$0xff]
    %v1996 = vld [vmem:[%s5 + $0x150] sm:$0xff]
    %v1997 = vld [vmem:[%s5 + $0x158] sm:$0xff]
    %v1998 = vld [vmem:[%s5 + $0x160] sm:$0xff]
    %v1999 = vld [vmem:[%s5 + $0x168] sm:$0xff]
    %v2000 = vld [vmem:[%s5 + $0x170] sm:$0xff]
    %v2001 = vld [vmem:[%s5 + $0x178] sm:$0xff]
    %v2002 = vld [vmem:[%s5 + $0x180] sm:$0xff]
    %v2003 = vld [vmem:[%s5 + $0x188] sm:$0xff]
    %v2004 = vld [vmem:[%s5 + $0x190] sm:$0xff]
    %v2005 = vld [vmem:[%s5 + $0x198] sm:$0xff]
    %v2006 = vld [vmem:[%s5 + $0x1a0] sm:$0xff]
    %v2007 = vld [vmem:[%s5 + $0x1a8] sm:$0xff]
    %v2008 = vld [vmem:[%s5 + $0x1b0] sm:$0xff]
    %v2009 = vld [vmem:[%s5 + $0x1b8] sm:$0xff]
    %v2010 = vld [vmem:[%s5 + $0x1c0] sm:$0xff]
    %v2011 = vld [vmem:[%s5 + $0x1c8] sm:$0xff]
    %v2012 = vld [vmem:[%s5 + $0x1d0] sm:$0xff]
    %v2013 = vld [vmem:[%s5 + $0x1d8] sm:$0xff]
    %v2014 = vld [vmem:[%s5 + $0x1e0] sm:$0xff]
    %v2015 = vld [vmem:[%s5 + $0x1e8] sm:$0xff]
    %v2016 = vld [vmem:[%s5 + $0x1f0] sm:$0xff]
    %v2017 = vld [vmem:[%s5 + $0x1f8] sm:$0xff]
    %v2018 = vld [vmem:[%s5 + $0x200] sm:$0xff]
    %v2019 = vld [vmem:[%s5 + $0x208] sm:$0xff]
    %v2020 = vld [vmem:[%s5 + $0x210] sm:$0xff]
    %v2021 = vld [vmem:[%s5 + $0x218] sm:$0xff]
    %v2022 = vld [vmem:[%s5 + $0x220] sm:$0xff]
    %v2023 = vld [vmem:[%s5 + $0x228] sm:$0xff]
    %v2024 = vld [vmem:[%s5 + $0x230] sm:$0xff]
    %v2025 = vld [vmem:[%s5 + $0x238] sm:$0xff]
    %v2026 = vld [vmem:[%s5 + $0x240] sm:$0xff]
    %v2027 = vld [vmem:[%s5 + $0x248] sm:$0xff]
    %v2028 = vld [vmem:[%s5 + $0x250] sm:$0xff]
    %v2029 = vld [vmem:[%s5 + $0x258] sm:$0xff]
    %v2030 = vld [vmem:[%s5 + $0x260] sm:$0xff]
    %v2031 = vld [vmem:[%s5 + $0x268] sm:$0xff]
    %v2032 = vld [vmem:[%s5 + $0x270] sm:$0xff]
    %v2033 = vld [vmem:[%s5 + $0x278] sm:$0xff]
    %v2034 = vld [vmem:[%s5 + $0x280] sm:$0xff]
    %v2035 = vld [vmem:[%s5 + $0x288] sm:$0xff]
    %v2036 = vld [vmem:[%s5 + $0x290] sm:$0xff]
    %v2037 = vld [vmem:[%s5 + $0x298] sm:$0xff]
    %v2038 = vld [vmem:[%s5 + $0x2a0] sm:$0xff]
    %v2039 = vld [vmem:[%s5 + $0x2a8] sm:$0xff]
    %v2040 = vld [vmem:[%s5 + $0x2b0] sm:$0xff]
    %v2041 = vld [vmem:[%s5 + $0x2b8] sm:$0xff]
    %v2042 = vld [vmem:[%s5 + $0x2c0] sm:$0xff]
    %v2043 = vld [vmem:[%s5 + $0x2c8] sm:$0xff]
    %v2044 = vld [vmem:[%s5 + $0x2d0] sm:$0xff]
    %v2045 = vld [vmem:[%s5 + $0x2d8] sm:$0xff]
    %v2046 = vld [vmem:[%s5 + $0x2e0] sm:$0xff]
    %v2047 = vld [vmem:[%s5 + $0x2e8] sm:$0xff]
    %v2048 = vld [vmem:[%s5 + $0x2f0] sm:$0xff]
    %v2049 = vld [vmem:[%s5 + $0x2f8] sm:$0xff]
    %v2050 = vld [vmem:[%s5 + $0x300] sm:$0xff]
    %v2051 = vld [vmem:[%s5 + $0x308] sm:$0xff]
    %v2052 = vld [vmem:[%s5 + $0x310] sm:$0xff]
    %v2053 = vld [vmem:[%s5 + $0x318] sm:$0xff]
    %v2054 = vld [vmem:[%s5 + $0x320] sm:$0xff]
    %v2055 = vld [vmem:[%s5 + $0x328] sm:$0xff]
    %v2056 = vld [vmem:[%s5 + $0x330] sm:$0xff]
    %v2057 = vld [vmem:[%s5 + $0x338] sm:$0xff]
    %v2058 = vld [vmem:[%s5 + $0x340] sm:$0xff]
    %v2059 = vld [vmem:[%s5 + $0x348] sm:$0xff]
    %v2060 = vld [vmem:[%s5 + $0x350] sm:$0xff]
    %v2061 = vld [vmem:[%s5 + $0x358] sm:$0xff]
    %v2062 = vld [vmem:[%s5 + $0x360] sm:$0xff]
    %v2063 = vld [vmem:[%s5 + $0x368] sm:$0xff]
    %v2064 = vld [vmem:[%s5 + $0x370] sm:$0xff]
    %v2065 = vld [vmem:[%s5 + $0x378] sm:$0xff]
    %v2066 = vld [vmem:[%s5 + $0x380] sm:$0xff]
    %v2067 = vld [vmem:[%s5 + $0x388] sm:$0xff]
    %v2068 = vld [vmem:[%s5 + $0x390] sm:$0xff]
    %v2069 = vld [vmem:[%s5 + $0x398] sm:$0xff]
    %v2070 = vld [vmem:[%s5 + $0x3a0] sm:$0xff]
    %v2071 = vld [vmem:[%s5 + $0x3a8] sm:$0xff]
    %v2072 = vld [vmem:[%s5 + $0x3b0] sm:$0xff]
    %v2073 = vld [vmem:[%s5 + $0x3b8] sm:$0xff]
    %v2074 = vld [vmem:[%s5 + $0x3c0] sm:$0xff]
    %v2075 = vld [vmem:[%s5 + $0x3c8] sm:$0xff]
    %v2076 = vld [vmem:[%s5 + $0x3d0] sm:$0xff]
    %v2077 = vld [vmem:[%s5 + $0x3d8] sm:$0xff]
    %v2078 = vld [vmem:[%s5 + $0x3e0] sm:$0xff]
    %v2079 = vld [vmem:[%s5 + $0x3e8] sm:$0xff]
    %v2080 = vld [vmem:[%s5 + $0x3f0] sm:$0xff]
    %v2081 = vld [vmem:[%s5 + $0x3f8] sm:$0xff]
    %v2082 = vld [vmem:[%s5 + $0x400] sm:$0xff]
    %v2083 = vld [vmem:[%s5 + $0x408] sm:$0xff]
    %v2084 = vld [vmem:[%s5 + $0x410] sm:$0xff]
    %v2085 = vld [vmem:[%s5 + $0x418] sm:$0xff]
    %v2086 = vld [vmem:[%s5 + $0x420] sm:$0xff]
    %v2087 = vld [vmem:[%s5 + $0x428] sm:$0xff]
    %v2088 = vld [vmem:[%s5 + $0x430] sm:$0xff]
    %v2089 = vld [vmem:[%s5 + $0x438] sm:$0xff]
    %v2090 = vld [vmem:[%s5 + $0x440] sm:$0xff]
    %v2091 = vld [vmem:[%s5 + $0x448] sm:$0xff]
    %v2092 = vld [vmem:[%s5 + $0x450] sm:$0xff]
    %v2093 = vld [vmem:[%s5 + $0x458] sm:$0xff]
    %v2094 = vld [vmem:[%s5 + $0x460] sm:$0xff]
    %v2095 = vld [vmem:[%s5 + $0x468] sm:$0xff]
    %v2096 = vld [vmem:[%s5 + $0x470] sm:$0xff]
    %v2097 = vld [vmem:[%s5 + $0x478] sm:$0xff]
    %v2098 = vld [vmem:[%s6] sm:$0x3]
    %v2100 = vlaneseq
    %v2101 = vshrl.u32 %v2100, 7
    %v2102 = vsub.s32 0, %v2101
    %v2103 = vrot.slane %v2098, %v2102
    %v2104 = vlaneseq
    %v2105 = vshrl.u32 %v2104, 7
    %v2106 = vsub.s32 1, %v2105
    %v2107 = vrot.slane %v2098, %v2106
    %v2254 = vunpack.c.l.b16 %v1954
    %v2255 = vunpack.c.h.b16 %v1954
    %v2256 = vunpack.c.l.b16 %v1955
    %v2257 = vunpack.c.h.b16 %v1955
    %v2258 = vunpack.c.l.b16 %v1956
    %v2259 = vunpack.c.h.b16 %v1956
    %v2260 = vunpack.c.l.b16 %v1957
    %v2261 = vunpack.c.h.b16 %v1957
    %v2262 = vunpack.c.l.b16 %v1958
    %v2263 = vunpack.c.h.b16 %v1958
    %v2264 = vunpack.c.l.b16 %v1959
    %v2265 = vunpack.c.h.b16 %v1959
    %v2266 = vunpack.c.l.b16 %v1960
    %v2267 = vunpack.c.h.b16 %v1960
    %v2268 = vunpack.c.l.b16 %v1961
    %v2269 = vunpack.c.h.b16 %v1961
    %v2270 = vunpack.c.l.b16 %v1962
    %v2271 = vunpack.c.h.b16 %v1962
    %v2272 = vunpack.c.l.b16 %v1963
    %v2273 = vunpack.c.h.b16 %v1963
    %v2274 = vunpack.c.l.b16 %v1964
    %v2275 = vunpack.c.h.b16 %v1964
    %v2276 = vunpack.c.l.b16 %v1965
    %v2277 = vunpack.c.h.b16 %v1965
    %v2278 = vunpack.c.l.b16 %v1966
    %v2279 = vunpack.c.h.b16 %v1966
    %v2280 = vunpack.c.l.b16 %v1967
    %v2281 = vunpack.c.h.b16 %v1967
    %v2282 = vunpack.c.l.b16 %v1968
    %v2283 = vunpack.c.h.b16 %v1968
    %v2284 = vunpack.c.l.b16 %v1969
    %v2285 = vunpack.c.h.b16 %v1969
    %v2286 = vunpack.c.l.b16 %v1970
    %v2287 = vunpack.c.h.b16 %v1970
    %v2288 = vunpack.c.l.b16 %v1971
    %v2289 = vunpack.c.h.b16 %v1971
    %v2290 = vunpack.c.l.b16 %v1972
    %v2291 = vunpack.c.h.b16 %v1972
    %v2292 = vunpack.c.l.b16 %v1973
    %v2293 = vunpack.c.h.b16 %v1973
    %v2294 = vunpack.c.l.b16 %v1974
    %v2295 = vunpack.c.h.b16 %v1974
    %v2296 = vunpack.c.l.b16 %v1975
    %v2297 = vunpack.c.h.b16 %v1975
    %v2298 = vunpack.c.l.b16 %v1976
    %v2299 = vunpack.c.h.b16 %v1976
    %v2300 = vunpack.c.l.b16 %v1977
    %v2301 = vunpack.c.h.b16 %v1977
    %v2302 = vunpack.c.l.b16 %v1978
    %v2303 = vunpack.c.h.b16 %v1978
    %v2304 = vunpack.c.l.b16 %v1979
    %v2305 = vunpack.c.h.b16 %v1979
    %v2306 = vunpack.c.l.b16 %v1980
    %v2307 = vunpack.c.h.b16 %v1980
    %v2308 = vunpack.c.l.b16 %v1981
    %v2309 = vunpack.c.h.b16 %v1981
    %v2310 = vunpack.c.l.b16 %v1982
    %v2311 = vunpack.c.h.b16 %v1982
    %v2312 = vunpack.c.l.b16 %v1983
    %v2313 = vunpack.c.h.b16 %v1983
    %v2314 = vunpack.c.l.b16 %v1984
    %v2315 = vunpack.c.h.b16 %v1984
    %v2316 = vunpack.c.l.b16 %v1985
    %v2317 = vunpack.c.h.b16 %v1985
    %v2318 = vunpack.c.l.b16 %v1986
    %v2319 = vunpack.c.h.b16 %v1986
    %v2320 = vunpack.c.l.b16 %v1987
    %v2321 = vunpack.c.h.b16 %v1987
    %v2322 = vunpack.c.l.b16 %v1988
    %v2323 = vunpack.c.h.b16 %v1988
    %v2324 = vunpack.c.l.b16 %v1989
    %v2325 = vunpack.c.h.b16 %v1989
    %v2326 = vunpack.c.l.b16 %v1990
    %v2327 = vunpack.c.h.b16 %v1990
    %v2328 = vunpack.c.l.b16 %v1991
    %v2329 = vunpack.c.h.b16 %v1991
    %v2330 = vunpack.c.l.b16 %v1992
    %v2331 = vunpack.c.h.b16 %v1992
    %v2332 = vunpack.c.l.b16 %v1993
    %v2333 = vunpack.c.h.b16 %v1993
    %v2334 = vunpack.c.l.b16 %v1994
    %v2335 = vunpack.c.h.b16 %v1994
    %v2336 = vunpack.c.l.b16 %v1995
    %v2337 = vunpack.c.h.b16 %v1995
    %v2338 = vunpack.c.l.b16 %v1996
    %v2339 = vunpack.c.h.b16 %v1996
    %v2340 = vunpack.c.l.b16 %v1997
    %v2341 = vunpack.c.h.b16 %v1997
    %v2342 = vunpack.c.l.b16 %v1998
    %v2343 = vunpack.c.h.b16 %v1998
    %v2344 = vunpack.c.l.b16 %v1999
    %v2345 = vunpack.c.h.b16 %v1999
    %v2346 = vunpack.c.l.b16 %v2000
    %v2347 = vunpack.c.h.b16 %v2000
    %v2348 = vunpack.c.l.b16 %v2001
    %v2349 = vunpack.c.h.b16 %v2001
    %v2350 = vunpack.c.l.b16 %v2002
    %v2351 = vunpack.c.h.b16 %v2002
    %v2352 = vunpack.c.l.b16 %v2003
    %v2353 = vunpack.c.h.b16 %v2003
    %v2354 = vunpack.c.l.b16 %v2004
    %v2355 = vunpack.c.h.b16 %v2004
    %v2356 = vunpack.c.l.b16 %v2005
    %v2357 = vunpack.c.h.b16 %v2005
    %v2358 = vunpack.c.l.b16 %v2006
    %v2359 = vunpack.c.h.b16 %v2006
    %v2360 = vunpack.c.l.b16 %v2007
    %v2361 = vunpack.c.h.b16 %v2007
    %v2362 = vunpack.c.l.b16 %v2008
    %v2363 = vunpack.c.h.b16 %v2008
    %v2364 = vunpack.c.l.b16 %v2009
    %v2365 = vunpack.c.h.b16 %v2009
    %v2366 = vunpack.c.l.b16 %v2010
    %v2367 = vunpack.c.h.b16 %v2010
    %v2368 = vunpack.c.l.b16 %v2011
    %v2369 = vunpack.c.h.b16 %v2011
    %v2370 = vunpack.c.l.b16 %v2012
    %v2371 = vunpack.c.h.b16 %v2012
    %v2372 = vunpack.c.l.b16 %v2013
    %v2373 = vunpack.c.h.b16 %v2013
    %v2374 = vunpack.c.l.b16 %v2014
    %v2375 = vunpack.c.h.b16 %v2014
    %v2376 = vunpack.c.l.b16 %v2015
    %v2377 = vunpack.c.h.b16 %v2015
    %v2378 = vunpack.c.l.b16 %v2016
    %v2379 = vunpack.c.h.b16 %v2016
    %v2380 = vunpack.c.l.b16 %v2017
    %v2381 = vunpack.c.h.b16 %v2017
    %v2382 = vunpack.c.l.b16 %v2018
    %v2383 = vunpack.c.h.b16 %v2018
    %v2384 = vunpack.c.l.b16 %v2019
    %v2385 = vunpack.c.h.b16 %v2019
    %v2386 = vunpack.c.l.b16 %v2020
    %v2387 = vunpack.c.h.b16 %v2020
    %v2388 = vunpack.c.l.b16 %v2021
    %v2389 = vunpack.c.h.b16 %v2021
    %v2390 = vunpack.c.l.b16 %v2022
    %v2391 = vunpack.c.h.b16 %v2022
    %v2392 = vunpack.c.l.b16 %v2023
    %v2393 = vunpack.c.h.b16 %v2023
    %v2394 = vunpack.c.l.b16 %v2024
    %v2395 = vunpack.c.h.b16 %v2024
    %v2396 = vunpack.c.l.b16 %v2025
    %v2397 = vunpack.c.h.b16 %v2025
    %v2398 = vunpack.c.l.b16 %v2026
    %v2399 = vunpack.c.h.b16 %v2026
    %v2400 = vunpack.c.l.b16 %v2027
    %v2401 = vunpack.c.h.b16 %v2027
    %v2402 = vunpack.c.l.b16 %v2028
    %v2403 = vunpack.c.h.b16 %v2028
    %v2404 = vunpack.c.l.b16 %v2029
    %v2405 = vunpack.c.h.b16 %v2029
    %v2406 = vunpack.c.l.b16 %v2030
    %v2407 = vunpack.c.h.b16 %v2030
    %v2408 = vunpack.c.l.b16 %v2031
    %v2409 = vunpack.c.h.b16 %v2031
    %v2410 = vunpack.c.l.b16 %v2032
    %v2411 = vunpack.c.h.b16 %v2032
    %v2412 = vunpack.c.l.b16 %v2033
    %v2413 = vunpack.c.h.b16 %v2033
    %v2414 = vunpack.c.l.b16 %v2034
    %v2415 = vunpack.c.h.b16 %v2034
    %v2416 = vunpack.c.l.b16 %v2035
    %v2417 = vunpack.c.h.b16 %v2035
    %v2418 = vunpack.c.l.b16 %v2036
    %v2419 = vunpack.c.h.b16 %v2036
    %v2420 = vunpack.c.l.b16 %v2037
    %v2421 = vunpack.c.h.b16 %v2037
    %v2422 = vunpack.c.l.b16 %v2038
    %v2423 = vunpack.c.h.b16 %v2038
    %v2424 = vunpack.c.l.b16 %v2039
    %v2425 = vunpack.c.h.b16 %v2039
    %v2426 = vunpack.c.l.b16 %v2040
    %v2427 = vunpack.c.h.b16 %v2040
    %v2428 = vunpack.c.l.b16 %v2041
    %v2429 = vunpack.c.h.b16 %v2041
    %v2430 = vunpack.c.l.b16 %v2042
    %v2431 = vunpack.c.h.b16 %v2042
    %v2432 = vunpack.c.l.b16 %v2043
    %v2433 = vunpack.c.h.b16 %v2043
    %v2434 = vunpack.c.l.b16 %v2044
    %v2435 = vunpack.c.h.b16 %v2044
    %v2436 = vunpack.c.l.b16 %v2045
    %v2437 = vunpack.c.h.b16 %v2045
    %v2438 = vunpack.c.l.b16 %v2046
    %v2439 = vunpack.c.h.b16 %v2046
    %v2440 = vunpack.c.l.b16 %v2047
    %v2441 = vunpack.c.h.b16 %v2047
    %v2442 = vunpack.c.l.b16 %v2048
    %v2443 = vunpack.c.h.b16 %v2048
    %v2444 = vunpack.c.l.b16 %v2049
    %v2445 = vunpack.c.h.b16 %v2049
    %v2446 = vunpack.c.l.b16 %v2050
    %v2447 = vunpack.c.h.b16 %v2050
    %v2448 = vunpack.c.l.b16 %v2051
    %v2449 = vunpack.c.h.b16 %v2051
    %v2450 = vunpack.c.l.b16 %v2052
    %v2451 = vunpack.c.h.b16 %v2052
    %v2452 = vunpack.c.l.b16 %v2053
    %v2453 = vunpack.c.h.b16 %v2053
    %v2454 = vunpack.c.l.b16 %v2054
    %v2455 = vunpack.c.h.b16 %v2054
    %v2456 = vunpack.c.l.b16 %v2055
    %v2457 = vunpack.c.h.b16 %v2055
    %v2458 = vunpack.c.l.b16 %v2056
    %v2459 = vunpack.c.h.b16 %v2056
    %v2460 = vunpack.c.l.b16 %v2057
    %v2461 = vunpack.c.h.b16 %v2057
    %v2462 = vunpack.c.l.b16 %v2058
    %v2463 = vunpack.c.h.b16 %v2058
    %v2464 = vunpack.c.l.b16 %v2059
    %v2465 = vunpack.c.h.b16 %v2059
    %v2466 = vunpack.c.l.b16 %v2060
    %v2467 = vunpack.c.h.b16 %v2060
    %v2468 = vunpack.c.l.b16 %v2061
    %v2469 = vunpack.c.h.b16 %v2061
    %v2470 = vunpack.c.l.b16 %v2062
    %v2471 = vunpack.c.h.b16 %v2062
    %v2472 = vunpack.c.l.b16 %v2063
    %v2473 = vunpack.c.h.b16 %v2063
    %v2474 = vunpack.c.l.b16 %v2064
    %v2475 = vunpack.c.h.b16 %v2064
    %v2476 = vunpack.c.l.b16 %v2065
    %v2477 = vunpack.c.h.b16 %v2065
    %v2478 = vunpack.c.l.b16 %v2066
    %v2479 = vunpack.c.h.b16 %v2066
    %v2480 = vunpack.c.l.b16 %v2067
    %v2481 = vunpack.c.h.b16 %v2067
    %v2482 = vunpack.c.l.b16 %v2068
    %v2483 = vunpack.c.h.b16 %v2068
    %v2484 = vunpack.c.l.b16 %v2069
    %v2485 = vunpack.c.h.b16 %v2069
    %v2486 = vunpack.c.l.b16 %v2070
    %v2487 = vunpack.c.h.b16 %v2070
    %v2488 = vunpack.c.l.b16 %v2071
    %v2489 = vunpack.c.h.b16 %v2071
    %v2490 = vunpack.c.l.b16 %v2072
    %v2491 = vunpack.c.h.b16 %v2072
    %v2492 = vunpack.c.l.b16 %v2073
    %v2493 = vunpack.c.h.b16 %v2073
    %v2494 = vunpack.c.l.b16 %v2074
    %v2495 = vunpack.c.h.b16 %v2074
    %v2496 = vunpack.c.l.b16 %v2075
    %v2497 = vunpack.c.h.b16 %v2075
    %v2498 = vunpack.c.l.b16 %v2076
    %v2499 = vunpack.c.h.b16 %v2076
    %v2500 = vunpack.c.l.b16 %v2077
    %v2501 = vunpack.c.h.b16 %v2077
    %v2502 = vunpack.c.l.b16 %v2078
    %v2503 = vunpack.c.h.b16 %v2078
    %v2504 = vunpack.c.l.b16 %v2079
    %v2505 = vunpack.c.h.b16 %v2079
    %v2506 = vunpack.c.l.b16 %v2080
    %v2507 = vunpack.c.h.b16 %v2080
    %v2508 = vunpack.c.l.b16 %v2081
    %v2509 = vunpack.c.h.b16 %v2081
    %v2510 = vunpack.c.l.b16 %v2082
    %v2511 = vunpack.c.h.b16 %v2082
    %v2512 = vunpack.c.l.b16 %v2083
    %v2513 = vunpack.c.h.b16 %v2083
    %v2514 = vunpack.c.l.b16 %v2084
    %v2515 = vunpack.c.h.b16 %v2084
    %v2516 = vunpack.c.l.b16 %v2085
    %v2517 = vunpack.c.h.b16 %v2085
    %v2518 = vunpack.c.l.b16 %v2086
    %v2519 = vunpack.c.h.b16 %v2086
    %v2520 = vunpack.c.l.b16 %v2087
    %v2521 = vunpack.c.h.b16 %v2087
    %v2522 = vunpack.c.l.b16 %v2088
    %v2523 = vunpack.c.h.b16 %v2088
    %v2524 = vunpack.c.l.b16 %v2089
    %v2525 = vunpack.c.h.b16 %v2089
    %v2526 = vunpack.c.l.b16 %v2090
    %v2527 = vunpack.c.h.b16 %v2090
    %v2528 = vunpack.c.l.b16 %v2091
    %v2529 = vunpack.c.h.b16 %v2091
    %v2530 = vunpack.c.l.b16 %v2092
    %v2531 = vunpack.c.h.b16 %v2092
    %v2532 = vunpack.c.l.b16 %v2093
    %v2533 = vunpack.c.h.b16 %v2093
    %v2534 = vunpack.c.l.b16 %v2094
    %v2535 = vunpack.c.h.b16 %v2094
    %v2536 = vunpack.c.l.b16 %v2095
    %v2537 = vunpack.c.h.b16 %v2095
    %v2538 = vunpack.c.l.b16 %v2096
    %v2539 = vunpack.c.h.b16 %v2096
    %v2540 = vunpack.c.l.b16 %v2097
    %v2541 = vunpack.c.h.b16 %v2097
    %v2542 = vpack.c.b16 %v2256, %v2254
    %v2543 = vpack.c.b16 %v2257, %v2255
    %v2544 = vpack.c.b16 %v2260, %v2258
    %v2545 = vpack.c.b16 %v2261, %v2259
    %v2546 = vpack.c.b16 %v2264, %v2262
    %v2547 = vpack.c.b16 %v2265, %v2263
    %v2548 = vpack.c.b16 %v2268, %v2266
    %v2549 = vpack.c.b16 %v2269, %v2267
    %v2550 = vpack.c.b16 %v2272, %v2270
    %v2551 = vpack.c.b16 %v2273, %v2271
    %v2552 = vpack.c.b16 %v2276, %v2274
    %v2553 = vpack.c.b16 %v2277, %v2275
    %v2554 = vpack.c.b16 %v2280, %v2278
    %v2555 = vpack.c.b16 %v2281, %v2279
    %v2556 = vpack.c.b16 %v2284, %v2282
    %v2557 = vpack.c.b16 %v2285, %v2283
    %v2558 = vpack.c.b16 %v2288, %v2286
    %v2559 = vpack.c.b16 %v2289, %v2287
    %v2560 = vpack.c.b16 %v2292, %v2290
    %v2561 = vpack.c.b16 %v2293, %v2291
    %v2562 = vpack.c.b16 %v2296, %v2294
    %v2563 = vpack.c.b16 %v2297, %v2295
    %v2564 = vpack.c.b16 %v2300, %v2298
    %v2565 = vpack.c.b16 %v2301, %v2299
    %v2566 = vpack.c.b16 %v2304, %v2302
    %v2567 = vpack.c.b16 %v2305, %v2303
    %v2568 = vpack.c.b16 %v2308, %v2306
    %v2569 = vpack.c.b16 %v2309, %v2307
    %v2570 = vpack.c.b16 %v2312, %v2310
    %v2571 = vpack.c.b16 %v2313, %v2311
    %v2572 = vpack.c.b16 %v2316, %v2314
    %v2573 = vpack.c.b16 %v2317, %v2315
    %v2574 = vpack.c.b16 %v2320, %v2318
    %v2575 = vpack.c.b16 %v2321, %v2319
    %v2576 = vpack.c.b16 %v2324, %v2322
    %v2577 = vpack.c.b16 %v2325, %v2323
    %v2578 = vpack.c.b16 %v2328, %v2326
    %v2579 = vpack.c.b16 %v2329, %v2327
    %v2580 = vpack.c.b16 %v2332, %v2330
    %v2581 = vpack.c.b16 %v2333, %v2331
    %v2582 = vpack.c.b16 %v2336, %v2334
    %v2583 = vpack.c.b16 %v2337, %v2335
    %v2584 = vpack.c.b16 %v2340, %v2338
    %v2585 = vpack.c.b16 %v2341, %v2339
    %v2586 = vpack.c.b16 %v2344, %v2342
    %v2587 = vpack.c.b16 %v2345, %v2343
    %v2588 = vpack.c.b16 %v2348, %v2346
    %v2589 = vpack.c.b16 %v2349, %v2347
    %v2590 = vpack.c.b16 %v2352, %v2350
    %v2591 = vpack.c.b16 %v2353, %v2351
    %v2592 = vpack.c.b16 %v2356, %v2354
    %v2593 = vpack.c.b16 %v2357, %v2355
    %v2594 = vpack.c.b16 %v2360, %v2358
    %v2595 = vpack.c.b16 %v2361, %v2359
    %v2596 = vpack.c.b16 %v2364, %v2362
    %v2597 = vpack.c.b16 %v2365, %v2363
    %v2598 = vpack.c.b16 %v2368, %v2366
    %v2599 = vpack.c.b16 %v2369, %v2367
    %v2600 = vpack.c.b16 %v2372, %v2370
    %v2601 = vpack.c.b16 %v2373, %v2371
    %v2602 = vpack.c.b16 %v2376, %v2374
    %v2603 = vpack.c.b16 %v2377, %v2375
    %v2604 = vpack.c.b16 %v2380, %v2378
    %v2605 = vpack.c.b16 %v2381, %v2379
    %v2606 = vpack.c.b16 %v2384, %v2382
    %v2607 = vpack.c.b16 %v2385, %v2383
    %v2608 = vpack.c.b16 %v2388, %v2386
    %v2609 = vpack.c.b16 %v2389, %v2387
    %v2610 = vpack.c.b16 %v2392, %v2390
    %v2611 = vpack.c.b16 %v2393, %v2391
    %v2612 = vpack.c.b16 %v2396, %v2394
    %v2613 = vpack.c.b16 %v2397, %v2395
    %v2614 = vpack.c.b16 %v2400, %v2398
    %v2615 = vpack.c.b16 %v2401, %v2399
    %v2616 = vpack.c.b16 %v2404, %v2402
    %v2617 = vpack.c.b16 %v2405, %v2403
    %v2618 = vpack.c.b16 %v2408, %v2406
    %v2619 = vpack.c.b16 %v2409, %v2407
    %v2620 = vpack.c.b16 %v2412, %v2410
    %v2621 = vpack.c.b16 %v2413, %v2411
    %v2622 = vpack.c.b16 %v2416, %v2414
    %v2623 = vpack.c.b16 %v2417, %v2415
    %v2624 = vpack.c.b16 %v2420, %v2418
    %v2625 = vpack.c.b16 %v2421, %v2419
    %v2626 = vpack.c.b16 %v2424, %v2422
    %v2627 = vpack.c.b16 %v2425, %v2423
    %v2628 = vpack.c.b16 %v2428, %v2426
    %v2629 = vpack.c.b16 %v2429, %v2427
    %v2630 = vpack.c.b16 %v2432, %v2430
    %v2631 = vpack.c.b16 %v2433, %v2431
    %v2632 = vpack.c.b16 %v2436, %v2434
    %v2633 = vpack.c.b16 %v2437, %v2435
    %v2634 = vpack.c.b16 %v2440, %v2438
    %v2635 = vpack.c.b16 %v2441, %v2439
    %v2636 = vpack.c.b16 %v2444, %v2442
    %v2637 = vpack.c.b16 %v2445, %v2443
    %v2638 = vpack.c.b16 %v2448, %v2446
    %v2639 = vpack.c.b16 %v2449, %v2447
    %v2640 = vpack.c.b16 %v2452, %v2450
    %v2641 = vpack.c.b16 %v2453, %v2451
    %v2642 = vpack.c.b16 %v2456, %v2454
    %v2643 = vpack.c.b16 %v2457, %v2455
    %v2644 = vpack.c.b16 %v2460, %v2458
    %v2645 = vpack.c.b16 %v2461, %v2459
    %v2646 = vpack.c.b16 %v2464, %v2462
    %v2647 = vpack.c.b16 %v2465, %v2463
    %v2648 = vpack.c.b16 %v2468, %v2466
    %v2649 = vpack.c.b16 %v2469, %v2467
    %v2650 = vpack.c.b16 %v2472, %v2470
    %v2651 = vpack.c.b16 %v2473, %v2471
    %v2652 = vpack.c.b16 %v2476, %v2474
    %v2653 = vpack.c.b16 %v2477, %v2475
    %v2654 = vpack.c.b16 %v2480, %v2478
    %v2655 = vpack.c.b16 %v2481, %v2479
    %v2656 = vpack.c.b16 %v2484, %v2482
    %v2657 = vpack.c.b16 %v2485, %v2483
    %v2658 = vpack.c.b16 %v2488, %v2486
    %v2659 = vpack.c.b16 %v2489, %v2487
    %v2660 = vpack.c.b16 %v2492, %v2490
    %v2661 = vpack.c.b16 %v2493, %v2491
    %v2662 = vpack.c.b16 %v2496, %v2494
    %v2663 = vpack.c.b16 %v2497, %v2495
    %v2664 = vpack.c.b16 %v2500, %v2498
    %v2665 = vpack.c.b16 %v2501, %v2499
    %v2666 = vpack.c.b16 %v2504, %v2502
    %v2667 = vpack.c.b16 %v2505, %v2503
    %v2668 = vpack.c.b16 %v2508, %v2506
    %v2669 = vpack.c.b16 %v2509, %v2507
    %v2670 = vpack.c.b16 %v2512, %v2510
    %v2671 = vpack.c.b16 %v2513, %v2511
    %v2672 = vpack.c.b16 %v2516, %v2514
    %v2673 = vpack.c.b16 %v2517, %v2515
    %v2674 = vpack.c.b16 %v2520, %v2518
    %v2675 = vpack.c.b16 %v2521, %v2519
    %v2676 = vpack.c.b16 %v2524, %v2522
    %v2677 = vpack.c.b16 %v2525, %v2523
    %v2678 = vpack.c.b16 %v2528, %v2526
    %v2679 = vpack.c.b16 %v2529, %v2527
    %v2680 = vpack.c.b16 %v2532, %v2530
    %v2681 = vpack.c.b16 %v2533, %v2531
    %v2682 = vpack.c.b16 %v2536, %v2534
    %v2683 = vpack.c.b16 %v2537, %v2535
    %v2684 = vpack.c.b16 %v2540, %v2538
    %v2685 = vpack.c.b16 %v2541, %v2539
    %2830 = vmatprep.subr.bf16.mxu0 %v2543
    %2831 = vmatpush1.bf16.msra.mxu0 %v2542
    %2832 = vmatprep.subr.bf16.mxu0 %v2545
    %2833 = vmatpush1.bf16.msra.mxu0 %v2544
    %2834 = vmatprep.subr.bf16.mxu0 %v2547
    %2835 = vmatpush1.bf16.msra.mxu0 %v2546
    %2836 = vmatprep.subr.bf16.mxu0 %v2549
    %2837 = vmatpush1.bf16.msra.mxu0 %v2548
    %2838 = vmatprep.subr.bf16.mxu0 %v2551
    %2839 = vmatpush1.bf16.msra.mxu0 %v2550
    %2840 = vmatprep.subr.bf16.mxu0 %v2553
    %2841 = vmatpush1.bf16.msra.mxu0 %v2552
    %2842 = vmatprep.subr.bf16.mxu0 %v2555
    %2843 = vmatpush1.bf16.msra.mxu0 %v2554
    %2844 = vmatprep.subr.bf16.mxu0 %v2557
    %2845 = vmatpush1.bf16.msra.mxu0 %v2556
    %2846 = vmatprep.subr.bf16.mxu0 %v2559
    %2847 = vmatpush1.bf16.msra.mxu0 %v2558
    %2848 = vmatprep.subr.bf16.mxu0 %v2561
    %2849 = vmatpush1.bf16.msra.mxu0 %v2560
    %2850 = vmatprep.subr.bf16.mxu0 %v2563
    %2851 = vmatpush1.bf16.msra.mxu0 %v2562
    %2852 = vmatprep.subr.bf16.mxu0 %v2565
    %2853 = vmatpush1.bf16.msra.mxu0 %v2564
    %2854 = vmatprep.subr.bf16.mxu0 %v2567
    %2855 = vmatpush1.bf16.msra.mxu0 %v2566
    %2856 = vmatprep.subr.bf16.mxu0 %v2569
    %2857 = vmatpush1.bf16.msra.mxu0 %v2568
    %2858 = vmatprep.subr.bf16.mxu0 %v2571
    %2859 = vmatpush1.bf16.msra.mxu0 %v2570
    %2860 = vmatprep.subr.bf16.mxu0 %v2573
    %2861 = vmatpush1.bf16.msra.mxu0 %v2572
    %2862 = vmatprep.mubr.bf16.mxu0 %v1946
    %2863 = vmatmul.mubr.bf16.gmra.mrb[0].mxu0 %v1945
    %v2864 = vpop.f32.mrb[0].mxu0
    %v2865 = vadd.f32 %v2103, %v2864
    %v2866 = vpop.f32.mrb[0].mxu0
    %v2867 = vadd.f32 %v2107, %v2866
    %v2868 = vpop.f32.mrb[0].mxu0
    %v2869 = vpop.f32.mrb[0].mxu0
    %2870 = vdwg.mxu0
    %2871 = vmatprep.subr.bf16.mxu0 %v2575
    %2872 = vmatpush1.bf16.msra.mxu0 %v2574
    %2873 = vmatprep.subr.bf16.mxu0 %v2577
    %2874 = vmatpush1.bf16.msra.mxu0 %v2576
    %2875 = vmatprep.subr.bf16.mxu0 %v2579
    %2876 = vmatpush1.bf16.msra.mxu0 %v2578
    %2877 = vmatprep.subr.bf16.mxu0 %v2581
    %2878 = vmatpush1.bf16.msra.mxu0 %v2580
    %2879 = vmatprep.subr.bf16.mxu0 %v2583
    %2880 = vmatpush1.bf16.msra.mxu0 %v2582
    %2881 = vmatprep.subr.bf16.mxu0 %v2585
    %2882 = vmatpush1.bf16.msra.mxu0 %v2584
    %2883 = vmatprep.subr.bf16.mxu0 %v2587
    %2884 = vmatpush1.bf16.msra.mxu0 %v2586
    %2885 = vmatprep.subr.bf16.mxu0 %v2589
    %2886 = vmatpush1.bf16.msra.mxu0 %v2588
    %2887 = vmatprep.subr.bf16.mxu0 %v2591
    %2888 = vmatpush1.bf16.msra.mxu0 %v2590
    %2889 = vmatprep.subr.bf16.mxu0 %v2593
    %2890 = vmatpush1.bf16.msra.mxu0 %v2592
    %2891 = vmatprep.subr.bf16.mxu0 %v2595
    %2892 = vmatpush1.bf16.msra.mxu0 %v2594
    %2893 = vmatprep.subr.bf16.mxu0 %v2597
    %2894 = vmatpush1.bf16.msra.mxu0 %v2596
    %2895 = vmatprep.subr.bf16.mxu0 %v2599
    %2896 = vmatpush1.bf16.msra.mxu0 %v2598
    %2897 = vmatprep.subr.bf16.mxu0 %v2601
    %2898 = vmatpush1.bf16.msra.mxu0 %v2600
    %2899 = vmatprep.subr.bf16.mxu0 %v2603
    %2900 = vmatpush1.bf16.msra.mxu0 %v2602
    %2901 = vmatprep.subr.bf16.mxu0 %v2605
    %2902 = vmatpush1.bf16.msra.mxu0 %v2604
    %2903 = vmatprep.mubr.bf16.mxu0 %v1948
    %2904 = vmatmul.mubr.bf16.gmra.mrb[0].mxu0 %v1947
    %v2905 = vpop.f32.mrb[0].mxu0
    %v2906 = vadd.f32 %v2865, %v2905
    %v2907 = vpop.f32.mrb[0].mxu0
    %v2908 = vadd.f32 %v2867, %v2907
    %v2909 = vpop.f32.mrb[0].mxu0
    %v2910 = vpop.f32.mrb[0].mxu0
    %2911 = vdwg.mxu0
    %2912 = vmatprep.subr.bf16.mxu0 %v2607
    %2913 = vmatpush1.bf16.msra.mxu0 %v2606
    %2914 = vmatprep.subr.bf16.mxu0 %v2609
    %2915 = vmatpush1.bf16.msra.mxu0 %v2608
    %2916 = vmatprep.subr.bf16.mxu0 %v2611
    %2917 = vmatpush1.bf16.msra.mxu0 %v2610
    %2918 = vmatprep.subr.bf16.mxu0 %v2613
    %2919 = vmatpush1.bf16.msra.mxu0 %v2612
    %2920 = vmatprep.subr.bf16.mxu0 %v2615
    %2921 = vmatpush1.bf16.msra.mxu0 %v2614
    %2922 = vmatprep.subr.bf16.mxu0 %v2617
    %2923 = vmatpush1.bf16.msra.mxu0 %v2616
    %2924 = vmatprep.subr.bf16.mxu0 %v2619
    %2925 = vmatpush1.bf16.msra.mxu0 %v2618
    %2926 = vmatprep.subr.bf16.mxu0 %v2621
    %2927 = vmatpush1.bf16.msra.mxu0 %v2620
    %2928 = vmatprep.subr.bf16.mxu0 %v2623
    %2929 = vmatpush1.bf16.msra.mxu0 %v2622
    %2930 = vmatprep.subr.bf16.mxu0 %v2625
    %2931 = vmatpush1.bf16.msra.mxu0 %v2624
    %2932 = vmatprep.subr.bf16.mxu0 %v2627
    %2933 = vmatpush1.bf16.msra.mxu0 %v2626
    %2934 = vmatprep.subr.bf16.mxu0 %v2629
    %2935 = vmatpush1.bf16.msra.mxu0 %v2628
    %2936 = vmatprep.subr.bf16.mxu0 %v2631
    %2937 = vmatpush1.bf16.msra.mxu0 %v2630
    %2938 = vmatprep.subr.bf16.mxu0 %v2633
    %2939 = vmatpush1.bf16.msra.mxu0 %v2632
    %2940 = vmatprep.subr.bf16.mxu0 %v2635
    %2941 = vmatpush1.bf16.msra.mxu0 %v2634
    %2942 = vmatprep.subr.bf16.mxu0 %v2637
    %2943 = vmatpush1.bf16.msra.mxu0 %v2636
    %2944 = vmatprep.mubr.bf16.mxu0 %v1950
    %2945 = vmatmul.mubr.bf16.gmra.mrb[0].mxu0 %v1949
    %v2946 = vpop.f32.mrb[0].mxu0
    %v2947 = vadd.f32 %v2906, %v2946
    %v2948 = vpop.f32.mrb[0].mxu0
    %v2949 = vadd.f32 %v2908, %v2948
    %v2950 = vpop.f32.mrb[0].mxu0
    %v2951 = vpop.f32.mrb[0].mxu0
    %2952 = vdwg.mxu0
    %2953 = vmatprep.subr.bf16.mxu0 %v2639
    %2954 = vmatpush1.bf16.msra.mxu0 %v2638
    %2955 = vmatprep.subr.bf16.mxu0 %v2641
    %2956 = vmatpush1.bf16.msra.mxu0 %v2640
    %2957 = vmatprep.subr.bf16.mxu0 %v2643
    %2958 = vmatpush1.bf16.msra.mxu0 %v2642
    %2959 = vmatprep.subr.bf16.mxu0 %v2645
    %2960 = vmatpush1.bf16.msra.mxu0 %v2644
    %2961 = vmatprep.subr.bf16.mxu0 %v2647
    %2962 = vmatpush1.bf16.msra.mxu0 %v2646
    %2963 = vmatprep.subr.bf16.mxu0 %v2649
    %2964 = vmatpush1.bf16.msra.mxu0 %v2648
    %2965 = vmatprep.subr.bf16.mxu0 %v2651
    %2966 = vmatpush1.bf16.msra.mxu0 %v2650
    %2967 = vmatprep.subr.bf16.mxu0 %v2653
    %2968 = vmatpush1.bf16.msra.mxu0 %v2652
    %2969 = vmatprep.subr.bf16.mxu0 %v2655
    %2970 = vmatpush1.bf16.msra.mxu0 %v2654
    %2971 = vmatprep.subr.bf16.mxu0 %v2657
    %2972 = vmatpush1.bf16.msra.mxu0 %v2656
    %2973 = vmatprep.subr.bf16.mxu0 %v2659
    %2974 = vmatpush1.bf16.msra.mxu0 %v2658
    %2975 = vmatprep.subr.bf16.mxu0 %v2661
    %2976 = vmatpush1.bf16.msra.mxu0 %v2660
    %2977 = vmatprep.subr.bf16.mxu0 %v2663
    %2978 = vmatpush1.bf16.msra.mxu0 %v2662
    %2979 = vmatprep.subr.bf16.mxu0 %v2665
    %2980 = vmatpush1.bf16.msra.mxu0 %v2664
    %2981 = vmatprep.subr.bf16.mxu0 %v2667
    %2982 = vmatpush1.bf16.msra.mxu0 %v2666
    %2983 = vmatprep.subr.bf16.mxu0 %v2669
    %2984 = vmatpush1.bf16.msra.mxu0 %v2668
    %2985 = vmatprep.mubr.bf16.mxu0 %v1952
    %2986 = vmatmul.mubr.bf16.gmra.mrb[0].mxu0 %v1951
    %v2987 = vpop.f32.mrb[0].mxu0
    %v2988 = vadd.f32 %v2947, %v2987
    %v2989 = vpop.f32.mrb[0].mxu0
    %v2990 = vadd.f32 %v2949, %v2989
    %v2991 = vpop.f32.mrb[0].mxu0
    %v2992 = vpop.f32.mrb[0].mxu0
    %2993 = vdwg.mxu0
    %2994 = vmatprep.subr.bf16.mxu0 %v2671
    %2995 = vmatpush1.bf16.msra.mxu0 %v2670
    %2996 = vmatprep.subr.bf16.mxu0 %v2673
    %2997 = vmatpush1.bf16.msra.mxu0 %v2672
    %2998 = vmatprep.subr.bf16.mxu0 %v2675
    %2999 = vmatpush1.bf16.msra.mxu0 %v2674
    %3000 = vmatprep.subr.bf16.mxu0 %v2677
    %3001 = vmatpush1.bf16.msra.mxu0 %v2676
    %3002 = vmatprep.subr.bf16.mxu0 %v2679
    %3003 = vmatpush1.bf16.msra.mxu0 %v2678
    %3004 = vmatprep.subr.bf16.mxu0 %v2681
    %3005 = vmatpush1.bf16.msra.mxu0 %v2680
    %3006 = vmatprep.subr.bf16.mxu0 %v2683
    %3007 = vmatpush1.bf16.msra.mxu0 %v2682
    %3008 = vmatprep.subr.bf16.mxu0 %v2685
    %3009 = vmatpush1.bf16.msra.mxu0 %v2684
    %3010 = vmatprep.subr.bf16.mxu0 0
    %3011 = vmatpush1.bf16.msra.mxu0 0
    %3012 = vmatprep.subr.bf16.mxu0 0
    %3013 = vmatpush1.bf16.msra.mxu0 0
    %3014 = vmatprep.subr.bf16.mxu0 0
    %3015 = vmatpush1.bf16.msra.mxu0 0
    %3016 = vmatprep.subr.bf16.mxu0 0
    %3017 = vmatpush1.bf16.msra.mxu0 0
    %3018 = vmatprep.subr.bf16.mxu0 0
    %3019 = vmatpush1.bf16.msra.mxu0 0
    %3020 = vmatprep.subr.bf16.mxu0 0
    %3021 = vmatpush1.bf16.msra.mxu0 0
    %3022 = vmatprep.subr.bf16.mxu0 0
    %3023 = vmatpush1.bf16.msra.mxu0 0
    %3024 = vmatprep.subr.bf16.mxu0 0
    %3025 = vmatpush1.bf16.msra.mxu0 0
    %3026 = vmatprep.mubr.bf16.mxu0 0
    %3027 = vmatmul.mubr.bf16.gmra.mrb[0].mxu0 %v1953
    %v3028 = vpop.f32.mrb[0].mxu0
    %v3029 = vadd.f32 %v2988, %v3028
    %v3030 = vpop.f32.mrb[0].mxu0
    %v3031 = vadd.f32 %v2990, %v3030
    %v3032 = vpop.f32.mrb[0].mxu0
    %v3033 = vpop.f32.mrb[0].mxu0
    %3034 = vdwg.mxu0
    %v3035 = vmax.f32 %v3029, 0.0
    %v3036 = vmax.f32 %v3031, 0.0
    %v3037 = vpack.c.bf16 %v3035, %v3035
    %v3038 = vpack.c.bf16 %v3036, %v3036
    %v3039 = vld [vmem:[%s7] sm:$0xf]
    %v3040 = vld [vmem:[%s7 + $0x4] sm:$0xf]
    %v3041 = vld [vmem:[%s7 + $0x8] sm:$0xf]
    %v3042 = vld [vmem:[%s7 + $0xc] sm:$0xf]
    %v3043 = vld [vmem:[%s7 + $0x10] sm:$0xf]
    %v3044 = vld [vmem:[%s7 + $0x14] sm:$0xf]
    %v3045 = vld [vmem:[%s7 + $0x18] sm:$0xf]
    %v3046 = vld [vmem:[%s7 + $0x1c] sm:$0xf]
    %v3047 = vld [vmem:[%s7 + $0x20] sm:$0xf]
    %v3048 = vld [vmem:[%s7 + $0x24] sm:$0xf]
    %v3049 = vld [vmem:[%s7 + $0x28] sm:$0xf]
    %v3050 = vld [vmem:[%s7 + $0x2c] sm:$0xf]
    %v3051 = vld [vmem:[%s7 + $0x30] sm:$0xf]
    %v3052 = vld [vmem:[%s7 + $0x34] sm:$0xf]
    %v3053 = vld [vmem:[%s7 + $0x38] sm:$0xf]
    %v3054 = vld [vmem:[%s7 + $0x3c] sm:$0xf]
    %v3055 = vld [vmem:[%s7 + $0x40] sm:$0xf]
    %v3056 = vld [vmem:[%s7 + $0x44] sm:$0xf]
    %v3057 = vld [vmem:[%s7 + $0x48] sm:$0xf]
    %v3058 = vld [vmem:[%s7 + $0x4c] sm:$0xf]
    %v3059 = vld [vmem:[%s7 + $0x50] sm:$0xf]
    %v3060 = vld [vmem:[%s7 + $0x54] sm:$0xf]
    %v3061 = vld [vmem:[%s7 + $0x58] sm:$0xf]
    %v3062 = vld [vmem:[%s7 + $0x5c] sm:$0xf]
    %v3063 = vld [vmem:[%s7 + $0x60] sm:$0xf]
    %v3064 = vld [vmem:[%s7 + $0x64] sm:$0xf]
    %v3065 = vld [vmem:[%s7 + $0x68] sm:$0xf]
    %v3066 = vld [vmem:[%s7 + $0x6c] sm:$0xf]
    %v3067 = vld [vmem:[%s7 + $0x70] sm:$0xf]
    %v3068 = vld [vmem:[%s7 + $0x74] sm:$0xf]
    %v3069 = vld [vmem:[%s7 + $0x78] sm:$0xf]
    %v3070 = vld [vmem:[%s7 + $0x7c] sm:$0xf]
    %v3071 = vld [vmem:[%s8] sm:$0x1]
    %v3073 = vlaneseq
    %v3074 = vshrl.u32 %v3073, 7
    %v3075 = vsub.s32 0, %v3074
    %v3076 = vrot.slane %v3071, %v3075
    %v3110 = vunpack.c.l.b16 %v3039
    %v3111 = vunpack.c.l.b16 %v3040
    %v3112 = vunpack.c.l.b16 %v3041
    %v3113 = vunpack.c.l.b16 %v3042
    %v3114 = vunpack.c.l.b16 %v3043
    %v3115 = vunpack.c.l.b16 %v3044
    %v3116 = vunpack.c.l.b16 %v3045
    %v3117 = vunpack.c.l.b16 %v3046
    %v3118 = vunpack.c.l.b16 %v3047
    %v3119 = vunpack.c.l.b16 %v3048
    %v3120 = vunpack.c.l.b16 %v3049
    %v3121 = vunpack.c.l.b16 %v3050
    %v3122 = vunpack.c.l.b16 %v3051
    %v3123 = vunpack.c.l.b16 %v3052
    %v3124 = vunpack.c.l.b16 %v3053
    %v3125 = vunpack.c.l.b16 %v3054
    %v3126 = vunpack.c.l.b16 %v3055
    %v3127 = vunpack.c.l.b16 %v3056
    %v3128 = vunpack.c.l.b16 %v3057
    %v3129 = vunpack.c.l.b16 %v3058
    %v3130 = vunpack.c.l.b16 %v3059
    %v3131 = vunpack.c.l.b16 %v3060
    %v3132 = vunpack.c.l.b16 %v3061
    %v3133 = vunpack.c.l.b16 %v3062
    %v3134 = vunpack.c.l.b16 %v3063
    %v3135 = vunpack.c.l.b16 %v3064
    %v3136 = vunpack.c.l.b16 %v3065
    %v3137 = vunpack.c.l.b16 %v3066
    %v3138 = vunpack.c.l.b16 %v3067
    %v3139 = vunpack.c.l.b16 %v3068
    %v3140 = vunpack.c.l.b16 %v3069
    %v3141 = vunpack.c.l.b16 %v3070
    %v3142 = vpack.c.b16 %v3111, %v3110
    %v3143 = vpack.c.b16 %v3113, %v3112
    %v3144 = vpack.c.b16 %v3115, %v3114
    %v3145 = vpack.c.b16 %v3117, %v3116
    %v3146 = vpack.c.b16 %v3119, %v3118
    %v3147 = vpack.c.b16 %v3121, %v3120
    %v3148 = vpack.c.b16 %v3123, %v3122
    %v3149 = vpack.c.b16 %v3125, %v3124
    %v3150 = vpack.c.b16 %v3127, %v3126
    %v3151 = vpack.c.b16 %v3129, %v3128
    %v3152 = vpack.c.b16 %v3131, %v3130
    %v3153 = vpack.c.b16 %v3133, %v3132
    %v3154 = vpack.c.b16 %v3135, %v3134
    %v3155 = vpack.c.b16 %v3137, %v3136
    %v3156 = vpack.c.b16 %v3139, %v3138
    %v3157 = vpack.c.b16 %v3141, %v3140
    %3174 = vmatprep.subr.bf16.mxu0 0
    %3175 = vmatpush1.bf16.msra.mxu0 %v3142
    %3176 = vmatprep.subr.bf16.mxu0 0
    %3177 = vmatpush1.bf16.msra.mxu0 %v3143
    %3178 = vmatprep.subr.bf16.mxu0 0
    %3179 = vmatpush1.bf16.msra.mxu0 %v3144
    %3180 = vmatprep.subr.bf16.mxu0 0
    %3181 = vmatpush1.bf16.msra.mxu0 %v3145
    %3182 = vmatprep.subr.bf16.mxu0 0
    %3183 = vmatpush1.bf16.msra.mxu0 %v3146
    %3184 = vmatprep.subr.bf16.mxu0 0
    %3185 = vmatpush1.bf16.msra.mxu0 %v3147
    %3186 = vmatprep.subr.bf16.mxu0 0
    %3187 = vmatpush1.bf16.msra.mxu0 %v3148
    %3188 = vmatprep.subr.bf16.mxu0 0
    %3189 = vmatpush1.bf16.msra.mxu0 %v3149
    %3190 = vmatprep.subr.bf16.mxu0 0
    %3191 = vmatpush1.bf16.msra.mxu0 %v3150
    %3192 = vmatprep.subr.bf16.mxu0 0
    %3193 = vmatpush1.bf16.msra.mxu0 %v3151
    %3194 = vmatprep.subr.bf16.mxu0 0
    %3195 = vmatpush1.bf16.msra.mxu0 %v3152
    %3196 = vmatprep.subr.bf16.mxu0 0
    %3197 = vmatpush1.bf16.msra.mxu0 %v3153
    %3198 = vmatprep.subr.bf16.mxu0 0
    %3199 = vmatpush1.bf16.msra.mxu0 %v3154
    %3200 = vmatprep.subr.bf16.mxu0 0
    %3201 = vmatpush1.bf16.msra.mxu0 %v3155
    %3202 = vmatprep.subr.bf16.mxu0 0
    %3203 = vmatpush1.bf16.msra.mxu0 %v3156
    %3204 = vmatprep.subr.bf16.mxu0 0
    %3205 = vmatpush1.bf16.msra.mxu0 %v3157
    %3206 = vmatprep.mubr.bf16.mxu0 %v3038
    %3207 = vmatmul.mubr.bf16.gmra.mrb[0].mxu0 %v3037
    %v3208 = vpop.f32.mrb[0].mxu0
    %v3209 = vadd.f32 %v3076, %v3208
    %v3210 = vpop.f32.mrb[0].mxu0
    %v3211 = vpop.f32.mrb[0].mxu0
    %v3212 = vpop.f32.mrb[0].mxu0
    %3213 = vdwg.mxu0
    %3214 = vst [vmem:[#allocation3] sm:$0x3] %v3209
    // Predicated region
    $region38: #{dqn_forward.1} parent=1 // pred_check
      _
    $region39: #{dqn_forward.1} parent=1 // pred_check_branch
      %3216 = sbr.rel (0) target = $region41
    $region40: #{dqn_forward.1} parent=1 // pred_region
      %s3218 = ssub.s32 32, 32
      %3219 = vsyncadd [#allocation4], %s3218
      %s3221 = sshll.u32 [#allocation3], 4
      %s3222 = int_to_ptr.vmem [resolvable:$true] %s3221
      %3224 = dma.vmem_to_hbm [thread:$0]  %s3222, 32, %s9, [#allocation4]
    $region41: #{dqn_forward.1} parent=1 // pred_fallthru
      _
    // Predicated region
    $region42: #{dqn_forward.1} parent=1 // pred_check
      _
    $region43: #{dqn_forward.1} parent=1 // pred_check_branch
      %3226 = sbr.rel (0) target = $region45
    $region44: #{dqn_forward.1} parent=1 // pred_region
      %3227 = dma.done [#allocation4], 32
    $region45: #{dqn_forward.1} parent=1 // pred_fallthru
      _
    %3228 = vsyncpa [#allocation4], 1

</llo_original>
